<compile_context>
chip_gen: v7x
topology: tpu7x:2x2x1
jax: 0.10.0
libtpu: 0.0.40
codegen_flags: <defaults>
</compile_context>

<pallas_src>
import jax
import jax.numpy as jnp
from jax.experimental import pallas as pl
from jax.experimental.pallas import tpu as pltpu


def _megnet_node_kernel(src_ref, bidx_ref, invc_ref, x_ref, eattr_ref, uproj_ref,
                        w0x_ref, w0v_ref, b0_ref, w1_ref, b1_ref, w2_ref, b2_ref,
                        out_ref):
    tn = x_ref.shape[0]
    E = src_ref.shape[1]
    B = uproj_ref.shape[0]
    row0 = pl.program_id(0) * tn

    # ---- scatter_mean(edge_attr, edge_index[0]) via on-the-fly one-hot matmul ----
    # One-hot values (0/1) are exact in bf16; accumulation is f32 on the MXU.
    rows = jax.lax.broadcasted_iota(jnp.int32, (tn, E), 0) + row0          # [tn, E]
    eoh = (rows == src_ref[...]).astype(eattr_ref.dtype)                   # [tn, E] bf16
    ve = jnp.dot(eoh, eattr_ref[...], preferred_element_type=jnp.float32)  # [tn, D] f32
    ve = ve * invc_ref[...]                                                # mean (f32 inv counts)

    # ---- u[batch] @ W0u with the DxD projection folded into u_proj (wrapper) ----
    boh = (bidx_ref[...] ==
           jax.lax.broadcasted_iota(jnp.int32, (tn, B), 1)).astype(uproj_ref.dtype)  # [tn, B]
    u_term = jnp.dot(boh, uproj_ref[...], preferred_element_type=jnp.float32)        # [tn, D]

    # ---- layer 0: cat([x, v_e, u[batch]]) @ W0.T + b0, as split matmuls; relu ----
    h = (jnp.dot(x_ref[...], w0x_ref[...], preferred_element_type=jnp.float32)
         + jnp.dot(ve.astype(w0v_ref.dtype), w0v_ref[...],
                   preferred_element_type=jnp.float32)
         + u_term + b0_ref[...])
    h = jnp.maximum(h, 0.0)          # relu; dropout is identity in eval mode

    # ---- layer 1 ----
    h = jnp.dot(h.astype(w1_ref.dtype), w1_ref[...],
                preferred_element_type=jnp.float32) + b1_ref[...]
    h = jnp.maximum(h, 0.0)

    # ---- layer 2 ----
    h = jnp.dot(h.astype(w2_ref.dtype), w2_ref[...],
                preferred_element_type=jnp.float32) + b2_ref[...]
    h = jnp.maximum(h, 0.0)

    out_ref[...] = h.astype(out_ref.dtype)


def megnet_node_model(x, edge_index, edge_attr, u, batch, params, *, tile_n=128):
    """x:[N,D] f32, edge_index:[2,E] int, edge_attr:[E,D] f32, u:[B,D] f32, batch:[N] int."""
    N, D = x.shape
    E = edge_attr.shape[0]
    B = u.shape[0]
    cdt = jnp.bfloat16  # MXU operand dtype (f32 accumulation)

    # Row tile (multiple of 8 sublanes).
    tn = min(tile_n, N)
    tn = max(8, (tn // 8) * 8)
    grid = (pl.cdiv(N, tn),)

    # ---- cheap wrapper-side setup (no O(N*E) materialization) ----
    src = edge_index[0].astype(jnp.int32)
    src_row = src.reshape(1, E)                                    # resident int32 indices
    bidx = batch.astype(jnp.int32).reshape(N, 1)                   # per-node graph id
    counts = jax.ops.segment_sum(jnp.ones((E,), jnp.float32), src, num_segments=N)
    inv_count = (1.0 / jnp.maximum(counts, 1.0)).reshape(N, 1)     # f32, precomputed

    # Split first-layer weight (PyTorch Linear weight is [out, in]; pass W.T slices).
    W0 = params["W0"]
    w0x = W0[:, 0 * D:1 * D].T.astype(cdt)                         # [D, D]
    w0v = W0[:, 1 * D:2 * D].T.astype(cdt)                         # [D, D]
    u_proj = (u @ W0[:, 2 * D:3 * D].T).astype(cdt)                # [B, D] folded projection
    w1 = params["W1"].T.astype(cdt)
    w2 = params["W2"].T.astype(cdt)
    b0 = params["b0"].reshape(1, D).astype(jnp.float32)
    b1 = params["b1"].reshape(1, D).astype(jnp.float32)
    b2 = params["b2"].reshape(1, D).astype(jnp.float32)

    x_c = x.astype(cdt)
    ea_c = edge_attr.astype(cdt)

    inputs = (src_row, bidx, inv_count, x_c, ea_c, u_proj,
              w0x, w0v, b0, w1, b1, w2, b2)

    grid_spec = pltpu.PrefetchScalarGridSpec(
        num_scalar_prefetch=0,
        grid=grid,
        in_specs=[
            pl.BlockSpec((1, E), lambda i: (0, 0)),      # edge source indices (resident)
            pl.BlockSpec((tn, 1), lambda i: (i, 0)),     # batch ids (tiled)
            pl.BlockSpec((tn, 1), lambda i: (i, 0)),     # inverse counts (tiled)
            pl.BlockSpec((tn, D), lambda i: (i, 0)),     # x (tiled)
            pl.BlockSpec((E, D), lambda i: (0, 0)),      # edge_attr (resident)
            pl.BlockSpec((B, D), lambda i: (0, 0)),      # u @ W0u (resident)
            pl.BlockSpec((D, D), lambda i: (0, 0)),      # w0x
            pl.BlockSpec((D, D), lambda i: (0, 0)),      # w0v
            pl.BlockSpec((1, D), lambda i: (0, 0)),      # b0
            pl.BlockSpec((D, D), lambda i: (0, 0)),      # w1
            pl.BlockSpec((1, D), lambda i: (0, 0)),      # b1
            pl.BlockSpec((D, D), lambda i: (0, 0)),      # w2
            pl.BlockSpec((1, D), lambda i: (0, 0)),      # b2
        ],
        out_specs=pl.BlockSpec((tn, D), lambda i: (i, 0)),
    )

    return pl.pallas_call(
        _megnet_node_kernel,
        out_shape=jax.ShapeDtypeStruct((N, D), jnp.float32),
        grid_spec=grid_spec,
        compiler_params=pltpu.CompilerParams(dimension_semantics=("parallel",)),
    )(*inputs)


def ref_forward(x, edge_index, edge_attr, u, batch, params):
    """Pure-JAX f32 reference of the PyTorch forward (eval mode, batch_norm=False)."""
    N = x.shape[0]
    seg = edge_index[0]
    sums = jax.ops.segment_sum(edge_attr, seg, num_segments=N)
    counts = jax.ops.segment_sum(jnp.ones((edge_attr.shape[0],), jnp.float32), seg,
                                 num_segments=N)
    ve = sums / jnp.maximum(counts, 1.0)[:, None]
    comb = jnp.concatenate([x, ve, u[batch]], axis=1)
    h = jax.nn.relu(comb @ params["W0"].T + params["b0"])
    h = jax.nn.relu(h @ params["W1"].T + params["b1"])
    h = jax.nn.relu(h @ params["W2"].T + params["b2"])
    return h


def init_params(key, dim):
    """Deterministic init mimicking PyTorch Linear (uniform +-1/sqrt(fan_in))."""
    ks = jax.random.split(key, 6)

    def lin(kw, kb, fan_in, fan_out):
        bound = 1.0 / jnp.sqrt(fan_in)
        W = jax.random.uniform(kw, (fan_out, fan_in), jnp.float32, -bound, bound)
        b = jax.random.uniform(kb, (fan_out,), jnp.float32, -bound, bound)
        return W, b

    W0, b0 = lin(ks[0], ks[1], 3 * dim, dim)
    W1, b1 = lin(ks[2], ks[3], dim, dim)
    W2, b2 = lin(ks[4], ks[5], dim, dim)
    return {"W0": W0, "b0": b0, "W1": W1, "b1": b1, "W2": W2, "b2": b2}


if __name__ == "__main__":
    key = jax.random.PRNGKey(0)
    dim = 32        # hidden size
    N = 512         # nodes (multi-tile grid with tile_n=128)
    E = 2048        # edges
    B = 4           # graphs in the batch

    k_x, k_ea, k_u, k_src, k_dst, k_p = jax.random.split(key, 6)
    x = jax.random.normal(k_x, (N, dim), jnp.float32)
    edge_attr = jax.random.normal(k_ea, (E, dim), jnp.float32)
    u = jax.random.normal(k_u, (B, dim), jnp.float32)
    # ensure source indices cover [0, N) so scatter_mean's length matches x (as torch.cat requires)
    src = jnp.concatenate([jnp.arange(N, dtype=jnp.int32),
                           jax.random.randint(k_src, (E - N,), 0, N, jnp.int32)])
    dst = jax.random.randint(k_dst, (E,), 0, N, jnp.int32)
    edge_index = jnp.stack([src, dst], axis=0)                 # [2, E]
    batch = (jnp.arange(N) * B // N).astype(jnp.int32)         # node -> graph id

    params = init_params(k_p, dim)

    out = megnet_node_model(x, edge_index, edge_attr, u, batch, params, tile_n=128)
    out = jax.block_until_ready(out)

    ref = ref_forward(x, edge_index, edge_attr, u, batch, params)
    assert out.shape == (N, dim)
    # bf16 MXU operands with f32 accumulation -> relaxed tolerance vs pure-f32 reference.
    assert jnp.allclose(out, ref, atol=5e-2, rtol=5e-2), "mismatch vs pure-JAX reference"

    print("KERNEL_OK")
</pallas_src>

<mosaic_0001>
module attributes {stable_mosaic.version = 11 : i64} {
  func.func @_megnet_node_kernel(%arg0: i32, %arg1: memref<1x2048xi32, #tpu.memory_space<vmem>>, %arg2: memref<128x1xi32, #tpu.memory_space<vmem>>, %arg3: memref<128x1xf32, #tpu.memory_space<vmem>>, %arg4: memref<128x32xbf16, #tpu.memory_space<vmem>>, %arg5: memref<2048x32xbf16, #tpu.memory_space<vmem>>, %arg6: memref<4x32xbf16, #tpu.memory_space<vmem>>, %arg7: memref<32x32xbf16, #tpu.memory_space<vmem>>, %arg8: memref<32x32xbf16, #tpu.memory_space<vmem>>, %arg9: memref<1x32xf32, #tpu.memory_space<vmem>>, %arg10: memref<32x32xbf16, #tpu.memory_space<vmem>>, %arg11: memref<1x32xf32, #tpu.memory_space<vmem>>, %arg12: memref<32x32xbf16, #tpu.memory_space<vmem>>, %arg13: memref<1x32xf32, #tpu.memory_space<vmem>>, %arg14: memref<128x32xf32, #tpu.memory_space<vmem>>) attributes {dimension_semantics = [#tpu.dimension_semantics<parallel>], iteration_bounds = array<i64: 4>, scalar_prefetch = 0 : i64, scratch_operands = 0 : i64, tpu.core_type = #tpu.core_type<tc>, window_params = [{pipeline_mode = #tpu.pipeline_mode<synchronous>, transform_indices = @transform_0, window_bounds = array<i64: 1, 2048>}, {transform_indices = @transform_1, window_bounds = array<i64: 128, 1>}, {transform_indices = @transform_2, window_bounds = array<i64: 128, 1>}, {transform_indices = @transform_3, window_bounds = array<i64: 128, 32>}, {pipeline_mode = #tpu.pipeline_mode<synchronous>, transform_indices = @transform_4, window_bounds = array<i64: 2048, 32>}, {pipeline_mode = #tpu.pipeline_mode<synchronous>, transform_indices = @transform_5, window_bounds = array<i64: 4, 32>}, {pipeline_mode = #tpu.pipeline_mode<synchronous>, transform_indices = @transform_6, window_bounds = array<i64: 32, 32>}, {pipeline_mode = #tpu.pipeline_mode<synchronous>, transform_indices = @transform_7, window_bounds = array<i64: 32, 32>}, {pipeline_mode = #tpu.pipeline_mode<synchronous>, transform_indices = @transform_8, window_bounds = array<i64: 1, 32>}, {pipeline_mode = #tpu.pipeline_mode<synchronous>, transform_indices = @transform_9, window_bounds = array<i64: 32, 32>}, {pipeline_mode = #tpu.pipeline_mode<synchronous>, transform_indices = @transform_10, window_bounds = array<i64: 1, 32>}, {pipeline_mode = #tpu.pipeline_mode<synchronous>, transform_indices = @transform_11, window_bounds = array<i64: 32, 32>}, {pipeline_mode = #tpu.pipeline_mode<synchronous>, transform_indices = @transform_12, window_bounds = array<i64: 1, 32>}, {transform_indices = @transform_13, window_bounds = array<i64: 128, 32>}]} {
    %c128_i32 = arith.constant 128 : i32
    %0 = arith.muli %arg0, %c128_i32 : i32
    %1 = tpu.iota {dimensions = array<i32: 0>} : vector<128x2048xi32>
    %2 = vector.broadcast %0 : i32 to vector<128x2048xi32>
    %3 = arith.addi %1, %2 : vector<128x2048xi32>
    %c0 = arith.constant 0 : index
    %c0_0 = arith.constant 0 : index
    %4 = vector.load %arg1[%c0, %c0_0] : memref<1x2048xi32, #tpu.memory_space<vmem>>, vector<1x2048xi32>
    %5 = vector.broadcast %4 : vector<1x2048xi32> to vector<128x2048xi32>
    %6 = arith.cmpi eq, %3, %5 : vector<128x2048xi32>
    %7 = arith.extui %6 : vector<128x2048xi1> to vector<128x2048xi32>
    %8 = arith.sitofp %7 : vector<128x2048xi32> to vector<128x2048xf32>
    %9 = arith.truncf %8 : vector<128x2048xf32> to vector<128x2048xbf16>
    %c0_1 = arith.constant 0 : index
    %c0_2 = arith.constant 0 : index
    %10 = vector.load %arg5[%c0_1, %c0_2] : memref<2048x32xbf16, #tpu.memory_space<vmem>>, vector<2048x32xbf16>
    %cst = arith.constant dense<0.000000e+00> : vector<128x32xf32>
    %11 = tpu.matmul %9, %10, %cst {dimension_numbers = #tpu.dot_dimension_numbers<[1], [0], [0], [1], [0, 0, 1, 1], [], []>} : vector<128x2048xbf16>, vector<2048x32xbf16>, vector<128x32xf32> -> vector<128x32xf32>
    %c0_3 = arith.constant 0 : index
    %c0_4 = arith.constant 0 : index
    %12 = vector.load %arg3[%c0_3, %c0_4] : memref<128x1xf32, #tpu.memory_space<vmem>>, vector<128x1xf32>
    %13 = vector.broadcast %12 : vector<128x1xf32> to vector<128x32xf32>
    %14 = arith.mulf %11, %13 : vector<128x32xf32>
    %c0_5 = arith.constant 0 : index
    %c0_6 = arith.constant 0 : index
    %15 = vector.load %arg2[%c0_5, %c0_6] : memref<128x1xi32, #tpu.memory_space<vmem>>, vector<128x1xi32>
    %16 = tpu.iota {dimensions = array<i32: 1>} : vector<128x4xi32>
    %17 = vector.broadcast %15 : vector<128x1xi32> to vector<128x4xi32>
    %18 = arith.cmpi eq, %17, %16 : vector<128x4xi32>
    %19 = arith.extui %18 : vector<128x4xi1> to vector<128x4xi32>
    %20 = arith.sitofp %19 : vector<128x4xi32> to vector<128x4xf32>
    %21 = arith.truncf %20 : vector<128x4xf32> to vector<128x4xbf16>
    %c0_7 = arith.constant 0 : index
    %c0_8 = arith.constant 0 : index
    %22 = vector.load %arg6[%c0_7, %c0_8] : memref<4x32xbf16, #tpu.memory_space<vmem>>, vector<4x32xbf16>
    %cst_9 = arith.constant dense<0.000000e+00> : vector<128x32xf32>
    %23 = tpu.matmul %21, %22, %cst_9 {dimension_numbers = #tpu.dot_dimension_numbers<[1], [0], [0], [1], [0, 0, 1, 1], [], []>} : vector<128x4xbf16>, vector<4x32xbf16>, vector<128x32xf32> -> vector<128x32xf32>
    %c0_10 = arith.constant 0 : index
    %c0_11 = arith.constant 0 : index
    %24 = vector.load %arg4[%c0_10, %c0_11] : memref<128x32xbf16, #tpu.memory_space<vmem>>, vector<128x32xbf16>
    %c0_12 = arith.constant 0 : index
    %c0_13 = arith.constant 0 : index
    %25 = vector.load %arg7[%c0_12, %c0_13] : memref<32x32xbf16, #tpu.memory_space<vmem>>, vector<32x32xbf16>
    %cst_14 = arith.constant dense<0.000000e+00> : vector<128x32xf32>
    %26 = tpu.matmul %24, %25, %cst_14 {dimension_numbers = #tpu.dot_dimension_numbers<[1], [0], [0], [1], [0, 0, 1, 1], [], []>} : vector<128x32xbf16>, vector<32x32xbf16>, vector<128x32xf32> -> vector<128x32xf32>
    %27 = arith.truncf %14 : vector<128x32xf32> to vector<128x32xbf16>
    %c0_15 = arith.constant 0 : index
    %c0_16 = arith.constant 0 : index
    %28 = vector.load %arg8[%c0_15, %c0_16] : memref<32x32xbf16, #tpu.memory_space<vmem>>, vector<32x32xbf16>
    %cst_17 = arith.constant dense<0.000000e+00> : vector<128x32xf32>
    %29 = tpu.matmul %27, %28, %cst_17 {dimension_numbers = #tpu.dot_dimension_numbers<[1], [0], [0], [1], [0, 0, 1, 1], [], []>} : vector<128x32xbf16>, vector<32x32xbf16>, vector<128x32xf32> -> vector<128x32xf32>
    %30 = arith.addf %26, %29 : vector<128x32xf32>
    %31 = arith.addf %30, %23 : vector<128x32xf32>
    %c0_18 = arith.constant 0 : index
    %c0_19 = arith.constant 0 : index
    %32 = vector.load %arg9[%c0_18, %c0_19] : memref<1x32xf32, #tpu.memory_space<vmem>>, vector<1x32xf32>
    %33 = vector.broadcast %32 : vector<1x32xf32> to vector<128x32xf32>
    %34 = arith.addf %31, %33 : vector<128x32xf32>
    %cst_20 = arith.constant 0.000000e+00 : f32
    %35 = vector.broadcast %cst_20 : f32 to vector<128x32xf32>
    %36 = arith.maximumf %34, %35 : vector<128x32xf32>
    %37 = arith.truncf %36 : vector<128x32xf32> to vector<128x32xbf16>
    %c0_21 = arith.constant 0 : index
    %c0_22 = arith.constant 0 : index
    %38 = vector.load %arg10[%c0_21, %c0_22] : memref<32x32xbf16, #tpu.memory_space<vmem>>, vector<32x32xbf16>
    %cst_23 = arith.constant dense<0.000000e+00> : vector<128x32xf32>
    %39 = tpu.matmul %37, %38, %cst_23 {dimension_numbers = #tpu.dot_dimension_numbers<[1], [0], [0], [1], [0, 0, 1, 1], [], []>} : vector<128x32xbf16>, vector<32x32xbf16>, vector<128x32xf32> -> vector<128x32xf32>
    %c0_24 = arith.constant 0 : index
    %c0_25 = arith.constant 0 : index
    %40 = vector.load %arg11[%c0_24, %c0_25] : memref<1x32xf32, #tpu.memory_space<vmem>>, vector<1x32xf32>
    %41 = vector.broadcast %40 : vector<1x32xf32> to vector<128x32xf32>
    %42 = arith.addf %39, %41 : vector<128x32xf32>
    %cst_26 = arith.constant 0.000000e+00 : f32
    %43 = vector.broadcast %cst_26 : f32 to vector<128x32xf32>
    %44 = arith.maximumf %42, %43 : vector<128x32xf32>
    %45 = arith.truncf %44 : vector<128x32xf32> to vector<128x32xbf16>
    %c0_27 = arith.constant 0 : index
    %c0_28 = arith.constant 0 : index
    %46 = vector.load %arg12[%c0_27, %c0_28] : memref<32x32xbf16, #tpu.memory_space<vmem>>, vector<32x32xbf16>
    %cst_29 = arith.constant dense<0.000000e+00> : vector<128x32xf32>
    %47 = tpu.matmul %45, %46, %cst_29 {dimension_numbers = #tpu.dot_dimension_numbers<[1], [0], [0], [1], [0, 0, 1, 1], [], []>} : vector<128x32xbf16>, vector<32x32xbf16>, vector<128x32xf32> -> vector<128x32xf32>
    %c0_30 = arith.constant 0 : index
    %c0_31 = arith.constant 0 : index
    %48 = vector.load %arg13[%c0_30, %c0_31] : memref<1x32xf32, #tpu.memory_space<vmem>>, vector<1x32xf32>
    %49 = vector.broadcast %48 : vector<1x32xf32> to vector<128x32xf32>
    %50 = arith.addf %47, %49 : vector<128x32xf32>
    %cst_32 = arith.constant 0.000000e+00 : f32
    %51 = vector.broadcast %cst_32 : f32 to vector<128x32xf32>
    %52 = arith.maximumf %50, %51 : vector<128x32xf32>
    %c0_33 = arith.constant 0 : index
    %c0_34 = arith.constant 0 : index
    %53 = vector.load %arg14[%c0_33, %c0_34] : memref<128x32xf32, #tpu.memory_space<vmem>>, vector<128x32xf32>
    tpu.vector_store %arg14[%c0_33, %c0_34], %52 {strides = array<i32>} : memref<128x32xf32, #tpu.memory_space<vmem>>, vector<128x32xf32>,
    return
  }
  func.func @transform_0(%arg0: i32) -> (i32, i32) {
    %c0_i32 = arith.constant 0 : i32
    %c0_i32_0 = arith.constant 0 : i32
    %c0_i32_1 = arith.constant 0 : i32
    return %c0_i32, %c0_i32_0 : i32, i32
  }
  func.func @transform_1(%arg0: i32) -> (i32, i32) {
    %c0_i32 = arith.constant 0 : i32
    %c0_i32_0 = arith.constant 0 : i32
    return %arg0, %c0_i32 : i32, i32
  }
  func.func @transform_2(%arg0: i32) -> (i32, i32) {
    %c0_i32 = arith.constant 0 : i32
    %c0_i32_0 = arith.constant 0 : i32
    return %arg0, %c0_i32 : i32, i32
  }
  func.func @transform_3(%arg0: i32) -> (i32, i32) {
    %c0_i32 = arith.constant 0 : i32
    %c0_i32_0 = arith.constant 0 : i32
    return %arg0, %c0_i32 : i32, i32
  }
  func.func @transform_4(%arg0: i32) -> (i32, i32) {
    %c0_i32 = arith.constant 0 : i32
    %c0_i32_0 = arith.constant 0 : i32
    %c0_i32_1 = arith.constant 0 : i32
    return %c0_i32, %c0_i32_0 : i32, i32
  }
  func.func @transform_5(%arg0: i32) -> (i32, i32) {
    %c0_i32 = arith.constant 0 : i32
    %c0_i32_0 = arith.constant 0 : i32
    %c0_i32_1 = arith.constant 0 : i32
    return %c0_i32, %c0_i32_0 : i32, i32
  }
  func.func @transform_6(%arg0: i32) -> (i32, i32) {
    %c0_i32 = arith.constant 0 : i32
    %c0_i32_0 = arith.constant 0 : i32
    %c0_i32_1 = arith.constant 0 : i32
    return %c0_i32, %c0_i32_0 : i32, i32
  }
  func.func @transform_7(%arg0: i32) -> (i32, i32) {
    %c0_i32 = arith.constant 0 : i32
    %c0_i32_0 = arith.constant 0 : i32
    %c0_i32_1 = arith.constant 0 : i32
    return %c0_i32, %c0_i32_0 : i32, i32
  }
  func.func @transform_8(%arg0: i32) -> (i32, i32) {
    %c0_i32 = arith.constant 0 : i32
    %c0_i32_0 = arith.constant 0 : i32
    %c0_i32_1 = arith.constant 0 : i32
    return %c0_i32, %c0_i32_0 : i32, i32
  }
  func.func @transform_9(%arg0: i32) -> (i32, i32) {
    %c0_i32 = arith.constant 0 : i32
    %c0_i32_0 = arith.constant 0 : i32
    %c0_i32_1 = arith.constant 0 : i32
    return %c0_i32, %c0_i32_0 : i32, i32
  }
  func.func @transform_10(%arg0: i32) -> (i32, i32) {
    %c0_i32 = arith.constant 0 : i32
    %c0_i32_0 = arith.constant 0 : i32
    %c0_i32_1 = arith.constant 0 : i32
    return %c0_i32, %c0_i32_0 : i32, i32
  }
  func.func @transform_11(%arg0: i32) -> (i32, i32) {
    %c0_i32 = arith.constant 0 : i32
    %c0_i32_0 = arith.constant 0 : i32
    %c0_i32_1 = arith.constant 0 : i32
    return %c0_i32, %c0_i32_0 : i32, i32
  }
  func.func @transform_12(%arg0: i32) -> (i32, i32) {
    %c0_i32 = arith.constant 0 : i32
    %c0_i32_0 = arith.constant 0 : i32
    %c0_i32_1 = arith.constant 0 : i32
    return %c0_i32, %c0_i32_0 : i32, i32
  }
  func.func @transform_13(%arg0: i32) -> (i32, i32) {
    %c0_i32 = arith.constant 0 : i32
    %c0_i32_0 = arith.constant 0 : i32
    return %arg0, %c0_i32 : i32, i32
  }
}

</mosaic_0001>

<llo_original>
// kernel: tpu_custom_call.1
$region0: #{tpu_custom_call.1}
  #allocation0 [shape = 'u32[]', space=smem, size = 0x4, offset = 0x4, fixed_abs, tag = 'smem constant byte address 0x4 - core index']
  #allocation1 [shape = 'u32[144,128]{1,0:T(1,128)}', space=vmem, size = 0x12000, scoped, tag = 'internal scratch']
  %s0 = inlined_call_operand.vmem [shape: s32[1,2048], index: 0, kind: input, shape index: {}]
  %s1 = inlined_call_operand.vmem [shape: s32[512,1], index: 1, kind: input, shape index: {}]
  %s2 = inlined_call_operand.vmem [shape: f32[512,1], index: 2, kind: input, shape index: {}]
  %s3 = inlined_call_operand.vmem [shape: bf16[512,32], index: 3, kind: input, shape index: {}]
  %s4 = inlined_call_operand.vmem [shape: bf16[2048,32], index: 4, kind: input, shape index: {}]
  %s5 = inlined_call_operand.vmem [shape: bf16[4,32], index: 5, kind: input, shape index: {}]
  %s6 = inlined_call_operand.vmem [shape: bf16[32,32], index: 6, kind: input, shape index: {}]
  %s7 = inlined_call_operand.vmem [shape: bf16[32,32], index: 7, kind: input, shape index: {}]
  %s8 = inlined_call_operand.vmem [shape: f32[1,32], index: 8, kind: input, shape index: {}]
  %s9 = inlined_call_operand.vmem [shape: bf16[32,32], index: 9, kind: input, shape index: {}]
  %s10 = inlined_call_operand.vmem [shape: f32[1,32], index: 10, kind: input, shape index: {}]
  %s11 = inlined_call_operand.vmem [shape: bf16[32,32], index: 11, kind: input, shape index: {}]
  %s12 = inlined_call_operand.vmem [shape: f32[1,32], index: 12, kind: input, shape index: {}]
  %s13 = inlined_call_operand.vmem [shape: f32[512,32], index: 13, kind: output, shape index: {}]
  %s14 = sld [smem:[#allocation0]]
  $region85: #{tpu_custom_call.1} parent=0
    _
  %s16 = ssub.s32 1, %s14
  %s17 = scalar_select 0, %s16, %s14
  loop: start=0, step=1, limit=6
  $region2: #{tpu_custom_call.1} parent=0 // loop_pre_header
    _
  $region3: #{tpu_custom_call.1} parent=0 // loop_header
    %s19 = sphi 0, %s23
    %p20 = scmp.ge.s32.totalorder %s19, 6
    %s27 = sphi 0, %s27
    %s29 = sphi 0, %s27
    %s30 = sphi 0, %s29
    %s44 = sphi 0, %s30
    %s50 = sphi 0, %s52
    %s53 = sphi 0, %s50
    %s54 = sphi 0, %s53
    %s70 = sphi 0, %s54
    %s76 = sphi 0, %s78
    %s79 = sphi 0, %s76
    %s80 = sphi 0, %s79
    %s96 = sphi 0, %s80
    %s102 = sphi 0, %s104
    %s105 = sphi 0, %s102
    %s106 = sphi 0, %s105
    %s122 = sphi 0, %s106
    %s126 = sphi 0, %s126
    %s128 = sphi 0, %s126
    %s129 = sphi 0, %s128
    %s143 = sphi 0, %s129
    %s147 = sphi 0, %s147
    %s149 = sphi 0, %s147
    %s150 = sphi 0, %s149
    %s164 = sphi 0, %s150
    %s168 = sphi 0, %s168
    %s170 = sphi 0, %s168
    %s171 = sphi 0, %s170
    %s185 = sphi 0, %s171
    %s189 = sphi 0, %s189
    %s191 = sphi 0, %s189
    %s192 = sphi 0, %s191
    %s206 = sphi 0, %s192
    %s210 = sphi 0, %s210
    %s212 = sphi 0, %s210
    %s213 = sphi 0, %s212
    %s227 = sphi 0, %s213
    %s231 = sphi 0, %s231
    %s233 = sphi 0, %s231
    %s234 = sphi 0, %s233
    %s248 = sphi 0, %s234
    %s252 = sphi 0, %s252
    %s254 = sphi 0, %s252
    %s255 = sphi 0, %s254
    %s269 = sphi 0, %s255
    %s273 = sphi 0, %s273
    %s275 = sphi 0, %s273
    %s276 = sphi 0, %s275
    %s290 = sphi 0, %s276
    %s294 = sphi 0, %s294
    %s296 = sphi 0, %s294
    %s297 = sphi 0, %s296
    %s311 = sphi 0, %s297
    %s317 = sphi 0, %s319
    %s320 = sphi 0, %s317
    %s321 = sphi 0, %s320
    %s337 = sphi 0, %s321
  $region4: #{tpu_custom_call.1} parent=0 // loop_header_branch
    %22 = sbr.rel (%p20) target = $region8
  $region5: #{tpu_custom_call.1} parent=0 // loop_body
    %s24 = ssub.s32 %s19, 1
    %s25 = ssub.s32 %s19, 2
    %s26 = sadd.s32 %s19, 1
    %s28 = sadd.s32 %s27, 1
    %p31 = scmp.eq.s32.totalorder %s19, 3
    %p32 = scmp.ne.s32.totalorder %s27, %s29
    %p33 = scmp.eq.s32.totalorder %s19, 0
    %p34 = por %p32, %p33
    %p35 = scmp.ne.s32.totalorder %s27, %s29
    %p36 = scmp.eq.s32.totalorder %s24, 3
    %p37 = por %p35, %p36
    %p38 = scmp.ne.s32.totalorder %s29, %s30
    %p39 = scmp.eq.s32.totalorder %s24, 0
    %p40 = por %p38, %p39
    %p41 = scmp.ne.s32.totalorder %s29, %s30
    %p42 = scmp.eq.s32.totalorder %s25, 3
    %p43 = por %p41, %p42
    %p45 = scmp.ne.s32.totalorder %s30, %s44
    %p46 = scmp.eq.s32.totalorder %s25, 0
    %p47 = por %p45, %p46
    %s48 = ssub.s32 %s19, %s26
    %p49 = scmp.eq.s32.totalorder %s48, 0
    %s51 = sadd.s32 %s50, 1
    %s52 = scalar_select %p49, %s50, %s51
    %p55 = pneg %p49
    %p56 = scmp.eq.s32.totalorder %s19, 3
    %p57 = por %p55, %p56
    %p58 = scmp.ne.s32.totalorder %s50, %s53
    %p59 = scmp.eq.s32.totalorder %s19, 0
    %p60 = por %p58, %p59
    %p61 = scmp.ne.s32.totalorder %s50, %s53
    %p62 = scmp.eq.s32.totalorder %s24, 3
    %p63 = por %p61, %p62
    %p64 = scmp.ne.s32.totalorder %s53, %s54
    %p65 = scmp.eq.s32.totalorder %s24, 0
    %p66 = por %p64, %p65
    %p67 = scmp.ne.s32.totalorder %s53, %s54
    %p68 = scmp.eq.s32.totalorder %s25, 3
    %p69 = por %p67, %p68
    %p71 = scmp.ne.s32.totalorder %s54, %s70
    %p72 = scmp.eq.s32.totalorder %s25, 0
    %p73 = por %p71, %p72
    %s74 = ssub.s32 %s19, %s26
    %p75 = scmp.eq.s32.totalorder %s74, 0
    %s77 = sadd.s32 %s76, 1
    %s78 = scalar_select %p75, %s76, %s77
    %p81 = pneg %p75
    %p82 = scmp.eq.s32.totalorder %s19, 3
    %p83 = por %p81, %p82
    %p84 = scmp.ne.s32.totalorder %s76, %s79
    %p85 = scmp.eq.s32.totalorder %s19, 0
    %p86 = por %p84, %p85
    %p87 = scmp.ne.s32.totalorder %s76, %s79
    %p88 = scmp.eq.s32.totalorder %s24, 3
    %p89 = por %p87, %p88
    %p90 = scmp.ne.s32.totalorder %s79, %s80
    %p91 = scmp.eq.s32.totalorder %s24, 0
    %p92 = por %p90, %p91
    %p93 = scmp.ne.s32.totalorder %s79, %s80
    %p94 = scmp.eq.s32.totalorder %s25, 3
    %p95 = por %p93, %p94
    %p97 = scmp.ne.s32.totalorder %s80, %s96
    %p98 = scmp.eq.s32.totalorder %s25, 0
    %p99 = por %p97, %p98
    %s100 = ssub.s32 %s19, %s26
    %p101 = scmp.eq.s32.totalorder %s100, 0
    %s103 = sadd.s32 %s102, 1
    %s104 = scalar_select %p101, %s102, %s103
    %p107 = pneg %p101
    %p108 = scmp.eq.s32.totalorder %s19, 3
    %p109 = por %p107, %p108
    %p110 = scmp.ne.s32.totalorder %s102, %s105
    %p111 = scmp.eq.s32.totalorder %s19, 0
    %p112 = por %p110, %p111
    %p113 = scmp.ne.s32.totalorder %s102, %s105
    %p114 = scmp.eq.s32.totalorder %s24, 3
    %p115 = por %p113, %p114
    %p116 = scmp.ne.s32.totalorder %s105, %s106
    %p117 = scmp.eq.s32.totalorder %s24, 0
    %p118 = por %p116, %p117
    %p119 = scmp.ne.s32.totalorder %s105, %s106
    %p120 = scmp.eq.s32.totalorder %s25, 3
    %p121 = por %p119, %p120
    %p123 = scmp.ne.s32.totalorder %s106, %s122
    %p124 = scmp.eq.s32.totalorder %s25, 0
    %p125 = por %p123, %p124
    %s127 = sadd.s32 %s126, 1
    %p130 = scmp.eq.s32.totalorder %s19, 3
    %p131 = scmp.ne.s32.totalorder %s126, %s128
    %p132 = scmp.eq.s32.totalorder %s19, 0
    %p133 = por %p131, %p132
    %p134 = scmp.ne.s32.totalorder %s126, %s128
    %p135 = scmp.eq.s32.totalorder %s24, 3
    %p136 = por %p134, %p135
    %p137 = scmp.ne.s32.totalorder %s128, %s129
    %p138 = scmp.eq.s32.totalorder %s24, 0
    %p139 = por %p137, %p138
    %p140 = scmp.ne.s32.totalorder %s128, %s129
    %p141 = scmp.eq.s32.totalorder %s25, 3
    %p142 = por %p140, %p141
    %p144 = scmp.ne.s32.totalorder %s129, %s143
    %p145 = scmp.eq.s32.totalorder %s25, 0
    %p146 = por %p144, %p145
    %s148 = sadd.s32 %s147, 1
    %p151 = scmp.eq.s32.totalorder %s19, 3
    %p152 = scmp.ne.s32.totalorder %s147, %s149
    %p153 = scmp.eq.s32.totalorder %s19, 0
    %p154 = por %p152, %p153
    %p155 = scmp.ne.s32.totalorder %s147, %s149
    %p156 = scmp.eq.s32.totalorder %s24, 3
    %p157 = por %p155, %p156
    %p158 = scmp.ne.s32.totalorder %s149, %s150
    %p159 = scmp.eq.s32.totalorder %s24, 0
    %p160 = por %p158, %p159
    %p161 = scmp.ne.s32.totalorder %s149, %s150
    %p162 = scmp.eq.s32.totalorder %s25, 3
    %p163 = por %p161, %p162
    %p165 = scmp.ne.s32.totalorder %s150, %s164
    %p166 = scmp.eq.s32.totalorder %s25, 0
    %p167 = por %p165, %p166
    %s169 = sadd.s32 %s168, 1
    %p172 = scmp.eq.s32.totalorder %s19, 3
    %p173 = scmp.ne.s32.totalorder %s168, %s170
    %p174 = scmp.eq.s32.totalorder %s19, 0
    %p175 = por %p173, %p174
    %p176 = scmp.ne.s32.totalorder %s168, %s170
    %p177 = scmp.eq.s32.totalorder %s24, 3
    %p178 = por %p176, %p177
    %p179 = scmp.ne.s32.totalorder %s170, %s171
    %p180 = scmp.eq.s32.totalorder %s24, 0
    %p181 = por %p179, %p180
    %p182 = scmp.ne.s32.totalorder %s170, %s171
    %p183 = scmp.eq.s32.totalorder %s25, 3
    %p184 = por %p182, %p183
    %p186 = scmp.ne.s32.totalorder %s171, %s185
    %p187 = scmp.eq.s32.totalorder %s25, 0
    %p188 = por %p186, %p187
    %s190 = sadd.s32 %s189, 1
    %p193 = scmp.eq.s32.totalorder %s19, 3
    %p194 = scmp.ne.s32.totalorder %s189, %s191
    %p195 = scmp.eq.s32.totalorder %s19, 0
    %p196 = por %p194, %p195
    %p197 = scmp.ne.s32.totalorder %s189, %s191
    %p198 = scmp.eq.s32.totalorder %s24, 3
    %p199 = por %p197, %p198
    %p200 = scmp.ne.s32.totalorder %s191, %s192
    %p201 = scmp.eq.s32.totalorder %s24, 0
    %p202 = por %p200, %p201
    %p203 = scmp.ne.s32.totalorder %s191, %s192
    %p204 = scmp.eq.s32.totalorder %s25, 3
    %p205 = por %p203, %p204
    %p207 = scmp.ne.s32.totalorder %s192, %s206
    %p208 = scmp.eq.s32.totalorder %s25, 0
    %p209 = por %p207, %p208
    %s211 = sadd.s32 %s210, 1
    %p214 = scmp.eq.s32.totalorder %s19, 3
    %p215 = scmp.ne.s32.totalorder %s210, %s212
    %p216 = scmp.eq.s32.totalorder %s19, 0
    %p217 = por %p215, %p216
    %p218 = scmp.ne.s32.totalorder %s210, %s212
    %p219 = scmp.eq.s32.totalorder %s24, 3
    %p220 = por %p218, %p219
    %p221 = scmp.ne.s32.totalorder %s212, %s213
    %p222 = scmp.eq.s32.totalorder %s24, 0
    %p223 = por %p221, %p222
    %p224 = scmp.ne.s32.totalorder %s212, %s213
    %p225 = scmp.eq.s32.totalorder %s25, 3
    %p226 = por %p224, %p225
    %p228 = scmp.ne.s32.totalorder %s213, %s227
    %p229 = scmp.eq.s32.totalorder %s25, 0
    %p230 = por %p228, %p229
    %s232 = sadd.s32 %s231, 1
    %p235 = scmp.eq.s32.totalorder %s19, 3
    %p236 = scmp.ne.s32.totalorder %s231, %s233
    %p237 = scmp.eq.s32.totalorder %s19, 0
    %p238 = por %p236, %p237
    %p239 = scmp.ne.s32.totalorder %s231, %s233
    %p240 = scmp.eq.s32.totalorder %s24, 3
    %p241 = por %p239, %p240
    %p242 = scmp.ne.s32.totalorder %s233, %s234
    %p243 = scmp.eq.s32.totalorder %s24, 0
    %p244 = por %p242, %p243
    %p245 = scmp.ne.s32.totalorder %s233, %s234
    %p246 = scmp.eq.s32.totalorder %s25, 3
    %p247 = por %p245, %p246
    %p249 = scmp.ne.s32.totalorder %s234, %s248
    %p250 = scmp.eq.s32.totalorder %s25, 0
    %p251 = por %p249, %p250
    %s253 = sadd.s32 %s252, 1
    %p256 = scmp.eq.s32.totalorder %s19, 3
    %p257 = scmp.ne.s32.totalorder %s252, %s254
    %p258 = scmp.eq.s32.totalorder %s19, 0
    %p259 = por %p257, %p258
    %p260 = scmp.ne.s32.totalorder %s252, %s254
    %p261 = scmp.eq.s32.totalorder %s24, 3
    %p262 = por %p260, %p261
    %p263 = scmp.ne.s32.totalorder %s254, %s255
    %p264 = scmp.eq.s32.totalorder %s24, 0
    %p265 = por %p263, %p264
    %p266 = scmp.ne.s32.totalorder %s254, %s255
    %p267 = scmp.eq.s32.totalorder %s25, 3
    %p268 = por %p266, %p267
    %p270 = scmp.ne.s32.totalorder %s255, %s269
    %p271 = scmp.eq.s32.totalorder %s25, 0
    %p272 = por %p270, %p271
    %s274 = sadd.s32 %s273, 1
    %p277 = scmp.eq.s32.totalorder %s19, 3
    %p278 = scmp.ne.s32.totalorder %s273, %s275
    %p279 = scmp.eq.s32.totalorder %s19, 0
    %p280 = por %p278, %p279
    %p281 = scmp.ne.s32.totalorder %s273, %s275
    %p282 = scmp.eq.s32.totalorder %s24, 3
    %p283 = por %p281, %p282
    %p284 = scmp.ne.s32.totalorder %s275, %s276
    %p285 = scmp.eq.s32.totalorder %s24, 0
    %p286 = por %p284, %p285
    %p287 = scmp.ne.s32.totalorder %s275, %s276
    %p288 = scmp.eq.s32.totalorder %s25, 3
    %p289 = por %p287, %p288
    %p291 = scmp.ne.s32.totalorder %s276, %s290
    %p292 = scmp.eq.s32.totalorder %s25, 0
    %p293 = por %p291, %p292
    %s295 = sadd.s32 %s294, 1
    %p298 = scmp.eq.s32.totalorder %s19, 3
    %p299 = scmp.ne.s32.totalorder %s294, %s296
    %p300 = scmp.eq.s32.totalorder %s19, 0
    %p301 = por %p299, %p300
    %p302 = scmp.ne.s32.totalorder %s294, %s296
    %p303 = scmp.eq.s32.totalorder %s24, 3
    %p304 = por %p302, %p303
    %p305 = scmp.ne.s32.totalorder %s296, %s297
    %p306 = scmp.eq.s32.totalorder %s24, 0
    %p307 = por %p305, %p306
    %p308 = scmp.ne.s32.totalorder %s296, %s297
    %p309 = scmp.eq.s32.totalorder %s25, 3
    %p310 = por %p308, %p309
    %p312 = scmp.ne.s32.totalorder %s297, %s311
    %p313 = scmp.eq.s32.totalorder %s25, 0
    %p314 = por %p312, %p313
    %s315 = ssub.s32 %s19, %s26
    %p316 = scmp.eq.s32.totalorder %s315, 0
    %s318 = sadd.s32 %s317, 1
    %s319 = scalar_select %p316, %s317, %s318
    %p322 = pneg %p316
    %p323 = scmp.eq.s32.totalorder %s19, 3
    %p324 = por %p322, %p323
    %p325 = scmp.ne.s32.totalorder %s317, %s320
    %p326 = scmp.eq.s32.totalorder %s19, 0
    %p327 = por %p325, %p326
    %p328 = scmp.ne.s32.totalorder %s317, %s320
    %p329 = scmp.eq.s32.totalorder %s24, 3
    %p330 = por %p328, %p329
    %p331 = scmp.ne.s32.totalorder %s320, %s321
    %p332 = scmp.eq.s32.totalorder %s24, 0
    %p333 = por %p331, %p332
    %p334 = scmp.ne.s32.totalorder %s320, %s321
    %p335 = scmp.eq.s32.totalorder %s25, 3
    %p336 = por %p334, %p335
    %p338 = scmp.ne.s32.totalorder %s321, %s337
    %p339 = scmp.eq.s32.totalorder %s25, 0
    %p340 = por %p338, %p339
    %p341 = scmp.le.s32.totalorder 1, %s19
    %p342 = scmp.lt.s32.totalorder %s19, 5
    %p343 = pnand %p341, %p342
    %p344 = pneg %p343
    // Predicated region
    $region9: #{tpu_custom_call.1} parent=5 // pred_check
      _
    $region10: #{tpu_custom_call.1} parent=5 // pred_check_branch
      %346 = sbr.rel (%p343) target = $region12
    $region11: #{tpu_custom_call.1} parent=5 // pred_region
      %s347 = ssub.s32 %s19, 1
      // Predicated region
      $region13: #{tpu_custom_call.1} parent=11 // pred_check
        %p348 = pneg %p40
      $region14: #{tpu_custom_call.1} parent=11 // pred_check_branch
        %350 = sbr.rel (%p348) target = $region16
      $region15: #{tpu_custom_call.1} parent=11 // pred_region
        _
      $region16: #{tpu_custom_call.1} parent=11 // pred_fallthru
        _
      // Predicated region
      $region17: #{tpu_custom_call.1} parent=11 // pred_check
        %p351 = pneg %p139
      $region18: #{tpu_custom_call.1} parent=11 // pred_check_branch
        %353 = sbr.rel (%p351) target = $region20
      $region19: #{tpu_custom_call.1} parent=11 // pred_region
        _
      $region20: #{tpu_custom_call.1} parent=11 // pred_fallthru
        _
      // Predicated region
      $region21: #{tpu_custom_call.1} parent=11 // pred_check
        %p354 = pneg %p160
      $region22: #{tpu_custom_call.1} parent=11 // pred_check_branch
        %356 = sbr.rel (%p354) target = $region24
      $region23: #{tpu_custom_call.1} parent=11 // pred_region
        _
      $region24: #{tpu_custom_call.1} parent=11 // pred_fallthru
        _
      // Predicated region
      $region25: #{tpu_custom_call.1} parent=11 // pred_check
        %p357 = pneg %p181
      $region26: #{tpu_custom_call.1} parent=11 // pred_check_branch
        %359 = sbr.rel (%p357) target = $region28
      $region27: #{tpu_custom_call.1} parent=11 // pred_region
        _
      $region28: #{tpu_custom_call.1} parent=11 // pred_fallthru
        _
      // Predicated region
      $region29: #{tpu_custom_call.1} parent=11 // pred_check
        %p360 = pneg %p202
      $region30: #{tpu_custom_call.1} parent=11 // pred_check_branch
        %362 = sbr.rel (%p360) target = $region32
      $region31: #{tpu_custom_call.1} parent=11 // pred_region
        _
      $region32: #{tpu_custom_call.1} parent=11 // pred_fallthru
        _
      // Predicated region
      $region33: #{tpu_custom_call.1} parent=11 // pred_check
        %p363 = pneg %p223
      $region34: #{tpu_custom_call.1} parent=11 // pred_check_branch
        %365 = sbr.rel (%p363) target = $region36
      $region35: #{tpu_custom_call.1} parent=11 // pred_region
        _
      $region36: #{tpu_custom_call.1} parent=11 // pred_fallthru
        _
      // Predicated region
      $region37: #{tpu_custom_call.1} parent=11 // pred_check
        %p366 = pneg %p244
      $region38: #{tpu_custom_call.1} parent=11 // pred_check_branch
        %368 = sbr.rel (%p366) target = $region40
      $region39: #{tpu_custom_call.1} parent=11 // pred_region
        _
      $region40: #{tpu_custom_call.1} parent=11 // pred_fallthru
        _
      // Predicated region
      $region41: #{tpu_custom_call.1} parent=11 // pred_check
        %p369 = pneg %p265
      $region42: #{tpu_custom_call.1} parent=11 // pred_check_branch
        %371 = sbr.rel (%p369) target = $region44
      $region43: #{tpu_custom_call.1} parent=11 // pred_region
        _
      $region44: #{tpu_custom_call.1} parent=11 // pred_fallthru
        _
      // Predicated region
      $region45: #{tpu_custom_call.1} parent=11 // pred_check
        %p372 = pneg %p286
      $region46: #{tpu_custom_call.1} parent=11 // pred_check_branch
        %374 = sbr.rel (%p372) target = $region48
      $region47: #{tpu_custom_call.1} parent=11 // pred_region
        _
      $region48: #{tpu_custom_call.1} parent=11 // pred_fallthru
        _
      // Predicated region
      $region49: #{tpu_custom_call.1} parent=11 // pred_check
        %p375 = pneg %p307
      $region50: #{tpu_custom_call.1} parent=11 // pred_check_branch
        %377 = sbr.rel (%p375) target = $region52
      $region51: #{tpu_custom_call.1} parent=11 // pred_region
        _
      $region52: #{tpu_custom_call.1} parent=11 // pred_fallthru
        _
    $region12: #{tpu_custom_call.1} parent=5 // pred_fallthru
      _
    %p378 = scmp.lt.s32.totalorder %s19, 4
    // Predicated region
    $region53: #{tpu_custom_call.1} parent=5 // pred_check
      %p379 = pneg %p378
    $region54: #{tpu_custom_call.1} parent=5 // pred_check_branch
      %381 = sbr.rel (%p379) target = $region56
    $region55: #{tpu_custom_call.1} parent=5 // pred_region
      // Predicated region
      $region57: #{tpu_custom_call.1} parent=55 // pred_check
        %p382 = pneg %p60
      $region58: #{tpu_custom_call.1} parent=55 // pred_check_branch
        %384 = sbr.rel (%p382) target = $region60
      $region59: #{tpu_custom_call.1} parent=55 // pred_region
        %s385 = smul.u32 16, %s19
        %p386 = scmp.lt.s32.totalorder %s385, 63
        %s387 = scalar_select %p386, %s385, 63
        %s388 = smul.addr %s387, 8
        %s389 = scalar_lea.vmem %s1, %s388
        %s390 = smul.u32 16, %s19
      $region60: #{tpu_custom_call.1} parent=55 // pred_fallthru
        _
      // Predicated region
      $region61: #{tpu_custom_call.1} parent=55 // pred_check
        %p391 = pneg %p86
      $region62: #{tpu_custom_call.1} parent=55 // pred_check_branch
        %393 = sbr.rel (%p391) target = $region64
      $region63: #{tpu_custom_call.1} parent=55 // pred_region
        %s394 = smul.u32 16, %s19
        %p395 = scmp.lt.s32.totalorder %s394, 63
        %s396 = scalar_select %p395, %s394, 63
        %s397 = smul.addr %s396, 8
        %s398 = scalar_lea.vmem %s2, %s397
        %s399 = smul.u32 16, %s19
      $region64: #{tpu_custom_call.1} parent=55 // pred_fallthru
        _
      // Predicated region
      $region65: #{tpu_custom_call.1} parent=55 // pred_check
        %p400 = pneg %p112
      $region66: #{tpu_custom_call.1} parent=55 // pred_check_branch
        %402 = sbr.rel (%p400) target = $region68
      $region67: #{tpu_custom_call.1} parent=55 // pred_region
        %s403 = smul.u32 16, %s19
        %p404 = scmp.lt.s32.totalorder %s403, 63
        %s405 = scalar_select %p404, %s403, 63
        %s406 = smul.addr %s405, 4
        %s407 = scalar_lea.vmem %s3, %s406
        %s408 = smul.u32 16, %s19
      $region68: #{tpu_custom_call.1} parent=55 // pred_fallthru
        _
    $region56: #{tpu_custom_call.1} parent=5 // pred_fallthru
      _
    %p409 = scmp.le.s32.totalorder 1, %s19
    %p410 = scmp.lt.s32.totalorder %s19, 5
    %p411 = pnand %p409, %p410
    %p412 = pneg %p411
    // Predicated region
    $region69: #{tpu_custom_call.1} parent=5 // pred_check
      _
    $region70: #{tpu_custom_call.1} parent=5 // pred_check_branch
      %414 = sbr.rel (%p411) target = $region72
    $region71: #{tpu_custom_call.1} parent=5 // pred_region
      %s415 = ssub.s32 %s19, 1
      %p416 = pneg %p40
      %p417 = pneg %p37
      %s418 = smul.u32 16, %s24
      %p419 = scmp.lt.s32.totalorder %s418, 63
      %s420 = scalar_select %p419, %s418, 63
      %s421 = smul.addr %s420, 8
      %s422 = scalar_lea.vmem %s1, %s421
      %p423 = pneg %p66
      %p424 = pneg %p63
      %s425 = smul.u32 16, %s24
      %p426 = scmp.lt.s32.totalorder %s425, 63
      %s427 = scalar_select %p426, %s425, 63
      %s428 = smul.addr %s427, 8
      %s429 = scalar_lea.vmem %s2, %s428
      %p430 = pneg %p92
      %p431 = pneg %p89
      %s432 = smul.u32 16, %s24
      %p433 = scmp.lt.s32.totalorder %s432, 63
      %s434 = scalar_select %p433, %s432, 63
      %s435 = smul.addr %s434, 4
      %s436 = scalar_lea.vmem %s3, %s435
      %p437 = pneg %p118
      %p438 = pneg %p115
      %p439 = pneg %p139
      %p440 = pneg %p136
      %p441 = pneg %p160
      %p442 = pneg %p157
      %p443 = pneg %p181
      %p444 = pneg %p178
      %p445 = pneg %p202
      %p446 = pneg %p199
      %p447 = pneg %p223
      %p448 = pneg %p220
      %p449 = pneg %p244
      %p450 = pneg %p241
      %p451 = pneg %p265
      %p452 = pneg %p262
      %p453 = pneg %p286
      %p454 = pneg %p283
      %p455 = pneg %p307
      %p456 = pneg %p304
      %p457 = pneg %p333
      %p458 = pneg %p330
      %s459 = smul.u32 16, %s24
      %p460 = scmp.lt.s32.totalorder %s459, 63
      %s461 = scalar_select %p460, %s459, 63
      %s462 = smul.addr %s461, 8
      %s463 = scalar_lea.vmem %s13, %s462
      %s464 = smul.u32 16, %s24
      %p465 = scmp.lt.s32.totalorder %s464, 63
      %s466 = scalar_select %p465, %s464, 63
      %s467 = smul.addr %s466, 8
      %s468 = scalar_lea.vmem %s1, %s467
      %s469 = smul.u32 16, %s24
      %s470 = smul.u32 16, %s24
      %p471 = scmp.lt.s32.totalorder %s470, 63
      %s472 = scalar_select %p471, %s470, 63
      %s473 = smul.addr %s472, 8
      %s474 = scalar_lea.vmem %s2, %s473
      %s475 = smul.u32 16, %s24
      %s476 = smul.u32 16, %s24
      %p477 = scmp.lt.s32.totalorder %s476, 63
      %s478 = scalar_select %p477, %s476, 63
      %s479 = smul.addr %s478, 4
      %s480 = scalar_lea.vmem %s3, %s479
      %s481 = smul.u32 16, %s24
      %s482 = smul.u32 16, %s24
      %p483 = scmp.lt.s32.totalorder %s482, 63
      %s484 = scalar_select %p483, %s482, 63
      %s485 = smul.addr %s484, 8
      %s486 = scalar_lea.vmem %s13, %s485
      %s487 = smul.u32 16, %s24
      %s489 = smul.u32 %s24, 128
      %v490 = vlaneseq
      %v491 = vshrl.u32 %v490, 7
      %v492 = vadd.s32 %v491, 8
      %v493 = vadd.s32 %v491, 16
      %v494 = vadd.s32 %v491, 24
      %v495 = vadd.s32 %v491, 32
      %v496 = vadd.s32 %v491, 40
      %v497 = vadd.s32 %v491, 48
      %v498 = vadd.s32 %v491, 56
      %v499 = vadd.s32 %v491, 64
      %v500 = vadd.s32 %v491, 72
      %v501 = vadd.s32 %v491, 80
      %v502 = vadd.s32 %v491, 88
      %v503 = vadd.s32 %v491, 96
      %v504 = vadd.s32 %v491, 104
      %v505 = vadd.s32 %v491, 112
      %v506 = vadd.s32 %v491, 120
      %v507 = vstv %s489
      %v508 = vadd.s32 %v491, %v507
      %v509 = vadd.s32 %v492, %v507
      %v510 = vadd.s32 %v493, %v507
      %v511 = vadd.s32 %v494, %v507
      %v512 = vadd.s32 %v495, %v507
      %v513 = vadd.s32 %v496, %v507
      %v514 = vadd.s32 %v497, %v507
      %v515 = vadd.s32 %v498, %v507
      %v516 = vadd.s32 %v499, %v507
      %v517 = vadd.s32 %v500, %v507
      %v518 = vadd.s32 %v501, %v507
      %v519 = vadd.s32 %v502, %v507
      %v520 = vadd.s32 %v503, %v507
      %v521 = vadd.s32 %v504, %v507
      %v522 = vadd.s32 %v505, %v507
      %v523 = vadd.s32 %v506, %v507
      %v524 = vld [vmem:[%s0] sm:$0xff]
      %v525 = vld [vmem:[%s0 + $0x8] sm:$0xff]
      %v526 = vlaneseq
      %v527 = vshrl.u32 %v526, 7
      %v528 = vsub.s32 0, %v527
      %v529 = vrot.slane %v524, %v528
      %v530 = vlaneseq
      %v531 = vshrl.u32 %v530, 7
      %v532 = vsub.s32 1, %v531
      %v533 = vrot.slane %v524, %v532
      %v534 = vlaneseq
      %v535 = vshrl.u32 %v534, 7
      %v536 = vsub.s32 2, %v535
      %v537 = vrot.slane %v524, %v536
      %v538 = vlaneseq
      %v539 = vshrl.u32 %v538, 7
      %v540 = vsub.s32 3, %v539
      %v541 = vrot.slane %v524, %v540
      %v542 = vlaneseq
      %v543 = vshrl.u32 %v542, 7
      %v544 = vsub.s32 4, %v543
      %v545 = vrot.slane %v524, %v544
      %v546 = vlaneseq
      %v547 = vshrl.u32 %v546, 7
      %v548 = vsub.s32 5, %v547
      %v549 = vrot.slane %v524, %v548
      %v550 = vlaneseq
      %v551 = vshrl.u32 %v550, 7
      %v552 = vsub.s32 6, %v551
      %v553 = vrot.slane %v524, %v552
      %v554 = vlaneseq
      %v555 = vshrl.u32 %v554, 7
      %v556 = vsub.s32 7, %v555
      %v557 = vrot.slane %v524, %v556
      %v558 = vlaneseq
      %v559 = vshrl.u32 %v558, 7
      %v560 = vsub.s32 0, %v559
      %v561 = vrot.slane %v525, %v560
      %v562 = vlaneseq
      %v563 = vshrl.u32 %v562, 7
      %v564 = vsub.s32 1, %v563
      %v565 = vrot.slane %v525, %v564
      %v566 = vlaneseq
      %v567 = vshrl.u32 %v566, 7
      %v568 = vsub.s32 2, %v567
      %v569 = vrot.slane %v525, %v568
      %v570 = vlaneseq
      %v571 = vshrl.u32 %v570, 7
      %v572 = vsub.s32 3, %v571
      %v573 = vrot.slane %v525, %v572
      %v574 = vlaneseq
      %v575 = vshrl.u32 %v574, 7
      %v576 = vsub.s32 4, %v575
      %v577 = vrot.slane %v525, %v576
      %v578 = vlaneseq
      %v579 = vshrl.u32 %v578, 7
      %v580 = vsub.s32 5, %v579
      %v581 = vrot.slane %v525, %v580
      %v582 = vlaneseq
      %v583 = vshrl.u32 %v582, 7
      %v584 = vsub.s32 6, %v583
      %v585 = vrot.slane %v525, %v584
      %v586 = vlaneseq
      %v587 = vshrl.u32 %v586, 7
      %v588 = vsub.s32 7, %v587
      %v589 = vrot.slane %v525, %v588
      %vm590 = vcmp.eq.s32.totalorder %v508, %v529
      %vm591 = vcmp.eq.s32.totalorder %v508, %v533
      %vm592 = vcmp.eq.s32.totalorder %v508, %v537
      %vm593 = vcmp.eq.s32.totalorder %v508, %v541
      %vm594 = vcmp.eq.s32.totalorder %v508, %v545
      %vm595 = vcmp.eq.s32.totalorder %v508, %v549
      %vm596 = vcmp.eq.s32.totalorder %v508, %v553
      %vm597 = vcmp.eq.s32.totalorder %v508, %v557
      %vm598 = vcmp.eq.s32.totalorder %v508, %v561
      %vm599 = vcmp.eq.s32.totalorder %v508, %v565
      %vm600 = vcmp.eq.s32.totalorder %v508, %v569
      %vm601 = vcmp.eq.s32.totalorder %v508, %v573
      %vm602 = vcmp.eq.s32.totalorder %v508, %v577
      %vm603 = vcmp.eq.s32.totalorder %v508, %v581
      %vm604 = vcmp.eq.s32.totalorder %v508, %v585
      %vm605 = vcmp.eq.s32.totalorder %v508, %v589
      %vm606 = vcmp.eq.s32.totalorder %v509, %v529
      %vm607 = vcmp.eq.s32.totalorder %v509, %v533
      %vm608 = vcmp.eq.s32.totalorder %v509, %v537
      %vm609 = vcmp.eq.s32.totalorder %v509, %v541
      %vm610 = vcmp.eq.s32.totalorder %v509, %v545
      %vm611 = vcmp.eq.s32.totalorder %v509, %v549
      %vm612 = vcmp.eq.s32.totalorder %v509, %v553
      %vm613 = vcmp.eq.s32.totalorder %v509, %v557
      %vm614 = vcmp.eq.s32.totalorder %v509, %v561
      %vm615 = vcmp.eq.s32.totalorder %v509, %v565
      %vm616 = vcmp.eq.s32.totalorder %v509, %v569
      %vm617 = vcmp.eq.s32.totalorder %v509, %v573
      %vm618 = vcmp.eq.s32.totalorder %v509, %v577
      %vm619 = vcmp.eq.s32.totalorder %v509, %v581
      %vm620 = vcmp.eq.s32.totalorder %v509, %v585
      %vm621 = vcmp.eq.s32.totalorder %v509, %v589
      %vm622 = vcmp.eq.s32.totalorder %v510, %v529
      %vm623 = vcmp.eq.s32.totalorder %v510, %v533
      %vm624 = vcmp.eq.s32.totalorder %v510, %v537
      %vm625 = vcmp.eq.s32.totalorder %v510, %v541
      %vm626 = vcmp.eq.s32.totalorder %v510, %v545
      %vm627 = vcmp.eq.s32.totalorder %v510, %v549
      %vm628 = vcmp.eq.s32.totalorder %v510, %v553
      %vm629 = vcmp.eq.s32.totalorder %v510, %v557
      %vm630 = vcmp.eq.s32.totalorder %v510, %v561
      %vm631 = vcmp.eq.s32.totalorder %v510, %v565
      %vm632 = vcmp.eq.s32.totalorder %v510, %v569
      %vm633 = vcmp.eq.s32.totalorder %v510, %v573
      %vm634 = vcmp.eq.s32.totalorder %v510, %v577
      %vm635 = vcmp.eq.s32.totalorder %v510, %v581
      %vm636 = vcmp.eq.s32.totalorder %v510, %v585
      %vm637 = vcmp.eq.s32.totalorder %v510, %v589
      %vm638 = vcmp.eq.s32.totalorder %v511, %v529
      %vm639 = vcmp.eq.s32.totalorder %v511, %v533
      %vm640 = vcmp.eq.s32.totalorder %v511, %v537
      %vm641 = vcmp.eq.s32.totalorder %v511, %v541
      %vm642 = vcmp.eq.s32.totalorder %v511, %v545
      %vm643 = vcmp.eq.s32.totalorder %v511, %v549
      %vm644 = vcmp.eq.s32.totalorder %v511, %v553
      %vm645 = vcmp.eq.s32.totalorder %v511, %v557
      %vm646 = vcmp.eq.s32.totalorder %v511, %v561
      %vm647 = vcmp.eq.s32.totalorder %v511, %v565
      %vm648 = vcmp.eq.s32.totalorder %v511, %v569
      %vm649 = vcmp.eq.s32.totalorder %v511, %v573
      %vm650 = vcmp.eq.s32.totalorder %v511, %v577
      %vm651 = vcmp.eq.s32.totalorder %v511, %v581
      %vm652 = vcmp.eq.s32.totalorder %v511, %v585
      %vm653 = vcmp.eq.s32.totalorder %v511, %v589
      %vm654 = vcmp.eq.s32.totalorder %v512, %v529
      %vm655 = vcmp.eq.s32.totalorder %v512, %v533
      %vm656 = vcmp.eq.s32.totalorder %v512, %v537
      %vm657 = vcmp.eq.s32.totalorder %v512, %v541
      %vm658 = vcmp.eq.s32.totalorder %v512, %v545
      %vm659 = vcmp.eq.s32.totalorder %v512, %v549
      %vm660 = vcmp.eq.s32.totalorder %v512, %v553
      %vm661 = vcmp.eq.s32.totalorder %v512, %v557
      %vm662 = vcmp.eq.s32.totalorder %v512, %v561
      %vm663 = vcmp.eq.s32.totalorder %v512, %v565
      %vm664 = vcmp.eq.s32.totalorder %v512, %v569
      %vm665 = vcmp.eq.s32.totalorder %v512, %v573
      %vm666 = vcmp.eq.s32.totalorder %v512, %v577
      %vm667 = vcmp.eq.s32.totalorder %v512, %v581
      %vm668 = vcmp.eq.s32.totalorder %v512, %v585
      %vm669 = vcmp.eq.s32.totalorder %v512, %v589
      %vm670 = vcmp.eq.s32.totalorder %v513, %v529
      %vm671 = vcmp.eq.s32.totalorder %v513, %v533
      %vm672 = vcmp.eq.s32.totalorder %v513, %v537
      %vm673 = vcmp.eq.s32.totalorder %v513, %v541
      %vm674 = vcmp.eq.s32.totalorder %v513, %v545
      %vm675 = vcmp.eq.s32.totalorder %v513, %v549
      %vm676 = vcmp.eq.s32.totalorder %v513, %v553
      %vm677 = vcmp.eq.s32.totalorder %v513, %v557
      %vm678 = vcmp.eq.s32.totalorder %v513, %v561
      %vm679 = vcmp.eq.s32.totalorder %v513, %v565
      %vm680 = vcmp.eq.s32.totalorder %v513, %v569
      %vm681 = vcmp.eq.s32.totalorder %v513, %v573
      %vm682 = vcmp.eq.s32.totalorder %v513, %v577
      %vm683 = vcmp.eq.s32.totalorder %v513, %v581
      %vm684 = vcmp.eq.s32.totalorder %v513, %v585
      %vm685 = vcmp.eq.s32.totalorder %v513, %v589
      %vm686 = vcmp.eq.s32.totalorder %v514, %v529
      %vm687 = vcmp.eq.s32.totalorder %v514, %v533
      %vm688 = vcmp.eq.s32.totalorder %v514, %v537
      %vm689 = vcmp.eq.s32.totalorder %v514, %v541
      %vm690 = vcmp.eq.s32.totalorder %v514, %v545
      %vm691 = vcmp.eq.s32.totalorder %v514, %v549
      %vm692 = vcmp.eq.s32.totalorder %v514, %v553
      %vm693 = vcmp.eq.s32.totalorder %v514, %v557
      %vm694 = vcmp.eq.s32.totalorder %v514, %v561
      %vm695 = vcmp.eq.s32.totalorder %v514, %v565
      %vm696 = vcmp.eq.s32.totalorder %v514, %v569
      %vm697 = vcmp.eq.s32.totalorder %v514, %v573
      %vm698 = vcmp.eq.s32.totalorder %v514, %v577
      %vm699 = vcmp.eq.s32.totalorder %v514, %v581
      %vm700 = vcmp.eq.s32.totalorder %v514, %v585
      %vm701 = vcmp.eq.s32.totalorder %v514, %v589
      %vm702 = vcmp.eq.s32.totalorder %v515, %v529
      %vm703 = vcmp.eq.s32.totalorder %v515, %v533
      %vm704 = vcmp.eq.s32.totalorder %v515, %v537
      %vm705 = vcmp.eq.s32.totalorder %v515, %v541
      %vm706 = vcmp.eq.s32.totalorder %v515, %v545
      %vm707 = vcmp.eq.s32.totalorder %v515, %v549
      %vm708 = vcmp.eq.s32.totalorder %v515, %v553
      %vm709 = vcmp.eq.s32.totalorder %v515, %v557
      %vm710 = vcmp.eq.s32.totalorder %v515, %v561
      %vm711 = vcmp.eq.s32.totalorder %v515, %v565
      %vm712 = vcmp.eq.s32.totalorder %v515, %v569
      %vm713 = vcmp.eq.s32.totalorder %v515, %v573
      %vm714 = vcmp.eq.s32.totalorder %v515, %v577
      %vm715 = vcmp.eq.s32.totalorder %v515, %v581
      %vm716 = vcmp.eq.s32.totalorder %v515, %v585
      %vm717 = vcmp.eq.s32.totalorder %v515, %v589
      %vm718 = vcmp.eq.s32.totalorder %v516, %v529
      %vm719 = vcmp.eq.s32.totalorder %v516, %v533
      %vm720 = vcmp.eq.s32.totalorder %v516, %v537
      %vm721 = vcmp.eq.s32.totalorder %v516, %v541
      %vm722 = vcmp.eq.s32.totalorder %v516, %v545
      %vm723 = vcmp.eq.s32.totalorder %v516, %v549
      %vm724 = vcmp.eq.s32.totalorder %v516, %v553
      %vm725 = vcmp.eq.s32.totalorder %v516, %v557
      %vm726 = vcmp.eq.s32.totalorder %v516, %v561
      %vm727 = vcmp.eq.s32.totalorder %v516, %v565
      %vm728 = vcmp.eq.s32.totalorder %v516, %v569
      %vm729 = vcmp.eq.s32.totalorder %v516, %v573
      %vm730 = vcmp.eq.s32.totalorder %v516, %v577
      %vm731 = vcmp.eq.s32.totalorder %v516, %v581
      %vm732 = vcmp.eq.s32.totalorder %v516, %v585
      %vm733 = vcmp.eq.s32.totalorder %v516, %v589
      %vm734 = vcmp.eq.s32.totalorder %v517, %v529
      %vm735 = vcmp.eq.s32.totalorder %v517, %v533
      %vm736 = vcmp.eq.s32.totalorder %v517, %v537
      %vm737 = vcmp.eq.s32.totalorder %v517, %v541
      %vm738 = vcmp.eq.s32.totalorder %v517, %v545
      %vm739 = vcmp.eq.s32.totalorder %v517, %v549
      %vm740 = vcmp.eq.s32.totalorder %v517, %v553
      %vm741 = vcmp.eq.s32.totalorder %v517, %v557
      %vm742 = vcmp.eq.s32.totalorder %v517, %v561
      %vm743 = vcmp.eq.s32.totalorder %v517, %v565
      %vm744 = vcmp.eq.s32.totalorder %v517, %v569
      %vm745 = vcmp.eq.s32.totalorder %v517, %v573
      %vm746 = vcmp.eq.s32.totalorder %v517, %v577
      %vm747 = vcmp.eq.s32.totalorder %v517, %v581
      %vm748 = vcmp.eq.s32.totalorder %v517, %v585
      %vm749 = vcmp.eq.s32.totalorder %v517, %v589
      %vm750 = vcmp.eq.s32.totalorder %v518, %v529
      %vm751 = vcmp.eq.s32.totalorder %v518, %v533
      %vm752 = vcmp.eq.s32.totalorder %v518, %v537
      %vm753 = vcmp.eq.s32.totalorder %v518, %v541
      %vm754 = vcmp.eq.s32.totalorder %v518, %v545
      %vm755 = vcmp.eq.s32.totalorder %v518, %v549
      %vm756 = vcmp.eq.s32.totalorder %v518, %v553
      %vm757 = vcmp.eq.s32.totalorder %v518, %v557
      %vm758 = vcmp.eq.s32.totalorder %v518, %v561
      %vm759 = vcmp.eq.s32.totalorder %v518, %v565
      %vm760 = vcmp.eq.s32.totalorder %v518, %v569
      %vm761 = vcmp.eq.s32.totalorder %v518, %v573
      %vm762 = vcmp.eq.s32.totalorder %v518, %v577
      %vm763 = vcmp.eq.s32.totalorder %v518, %v581
      %vm764 = vcmp.eq.s32.totalorder %v518, %v585
      %vm765 = vcmp.eq.s32.totalorder %v518, %v589
      %vm766 = vcmp.eq.s32.totalorder %v519, %v529
      %vm767 = vcmp.eq.s32.totalorder %v519, %v533
      %vm768 = vcmp.eq.s32.totalorder %v519, %v537
      %vm769 = vcmp.eq.s32.totalorder %v519, %v541
      %vm770 = vcmp.eq.s32.totalorder %v519, %v545
      %vm771 = vcmp.eq.s32.totalorder %v519, %v549
      %vm772 = vcmp.eq.s32.totalorder %v519, %v553
      %vm773 = vcmp.eq.s32.totalorder %v519, %v557
      %vm774 = vcmp.eq.s32.totalorder %v519, %v561
      %vm775 = vcmp.eq.s32.totalorder %v519, %v565
      %vm776 = vcmp.eq.s32.totalorder %v519, %v569
      %vm777 = vcmp.eq.s32.totalorder %v519, %v573
      %vm778 = vcmp.eq.s32.totalorder %v519, %v577
      %vm779 = vcmp.eq.s32.totalorder %v519, %v581
      %vm780 = vcmp.eq.s32.totalorder %v519, %v585
      %vm781 = vcmp.eq.s32.totalorder %v519, %v589
      %vm782 = vcmp.eq.s32.totalorder %v520, %v529
      %vm783 = vcmp.eq.s32.totalorder %v520, %v533
      %vm784 = vcmp.eq.s32.totalorder %v520, %v537
      %vm785 = vcmp.eq.s32.totalorder %v520, %v541
      %vm786 = vcmp.eq.s32.totalorder %v520, %v545
      %vm787 = vcmp.eq.s32.totalorder %v520, %v549
      %vm788 = vcmp.eq.s32.totalorder %v520, %v553
      %vm789 = vcmp.eq.s32.totalorder %v520, %v557
      %vm790 = vcmp.eq.s32.totalorder %v520, %v561
      %vm791 = vcmp.eq.s32.totalorder %v520, %v565
      %vm792 = vcmp.eq.s32.totalorder %v520, %v569
      %vm793 = vcmp.eq.s32.totalorder %v520, %v573
      %vm794 = vcmp.eq.s32.totalorder %v520, %v577
      %vm795 = vcmp.eq.s32.totalorder %v520, %v581
      %vm796 = vcmp.eq.s32.totalorder %v520, %v585
      %vm797 = vcmp.eq.s32.totalorder %v520, %v589
      %vm798 = vcmp.eq.s32.totalorder %v521, %v529
      %vm799 = vcmp.eq.s32.totalorder %v521, %v533
      %vm800 = vcmp.eq.s32.totalorder %v521, %v537
      %vm801 = vcmp.eq.s32.totalorder %v521, %v541
      %vm802 = vcmp.eq.s32.totalorder %v521, %v545
      %vm803 = vcmp.eq.s32.totalorder %v521, %v549
      %vm804 = vcmp.eq.s32.totalorder %v521, %v553
      %vm805 = vcmp.eq.s32.totalorder %v521, %v557
      %vm806 = vcmp.eq.s32.totalorder %v521, %v561
      %vm807 = vcmp.eq.s32.totalorder %v521, %v565
      %vm808 = vcmp.eq.s32.totalorder %v521, %v569
      %vm809 = vcmp.eq.s32.totalorder %v521, %v573
      %vm810 = vcmp.eq.s32.totalorder %v521, %v577
      %vm811 = vcmp.eq.s32.totalorder %v521, %v581
      %vm812 = vcmp.eq.s32.totalorder %v521, %v585
      %vm813 = vcmp.eq.s32.totalorder %v521, %v589
      %vm814 = vcmp.eq.s32.totalorder %v522, %v529
      %vm815 = vcmp.eq.s32.totalorder %v522, %v533
      %vm816 = vcmp.eq.s32.totalorder %v522, %v537
      %vm817 = vcmp.eq.s32.totalorder %v522, %v541
      %vm818 = vcmp.eq.s32.totalorder %v522, %v545
      %vm819 = vcmp.eq.s32.totalorder %v522, %v549
      %vm820 = vcmp.eq.s32.totalorder %v522, %v553
      %vm821 = vcmp.eq.s32.totalorder %v522, %v557
      %vm822 = vcmp.eq.s32.totalorder %v522, %v561
      %vm823 = vcmp.eq.s32.totalorder %v522, %v565
      %vm824 = vcmp.eq.s32.totalorder %v522, %v569
      %vm825 = vcmp.eq.s32.totalorder %v522, %v573
      %vm826 = vcmp.eq.s32.totalorder %v522, %v577
      %vm827 = vcmp.eq.s32.totalorder %v522, %v581
      %vm828 = vcmp.eq.s32.totalorder %v522, %v585
      %vm829 = vcmp.eq.s32.totalorder %v522, %v589
      %vm830 = vcmp.eq.s32.totalorder %v523, %v529
      %vm831 = vcmp.eq.s32.totalorder %v523, %v533
      %vm832 = vcmp.eq.s32.totalorder %v523, %v537
      %vm833 = vcmp.eq.s32.totalorder %v523, %v541
      %vm834 = vcmp.eq.s32.totalorder %v523, %v545
      %vm835 = vcmp.eq.s32.totalorder %v523, %v549
      %vm836 = vcmp.eq.s32.totalorder %v523, %v553
      %vm837 = vcmp.eq.s32.totalorder %v523, %v557
      %vm838 = vcmp.eq.s32.totalorder %v523, %v561
      %vm839 = vcmp.eq.s32.totalorder %v523, %v565
      %vm840 = vcmp.eq.s32.totalorder %v523, %v569
      %vm841 = vcmp.eq.s32.totalorder %v523, %v573
      %vm842 = vcmp.eq.s32.totalorder %v523, %v577
      %vm843 = vcmp.eq.s32.totalorder %v523, %v581
      %vm844 = vcmp.eq.s32.totalorder %v523, %v585
      %vm845 = vcmp.eq.s32.totalorder %v523, %v589
      %v846 = vsel %vm590, 1, 0
      %v847 = vsel %vm591, 1, 0
      %v848 = vsel %vm592, 1, 0
      %v849 = vsel %vm593, 1, 0
      %v850 = vsel %vm594, 1, 0
      %v851 = vsel %vm595, 1, 0
      %v852 = vsel %vm596, 1, 0
      %v853 = vsel %vm597, 1, 0
      %v854 = vsel %vm598, 1, 0
      %v855 = vsel %vm599, 1, 0
      %v856 = vsel %vm600, 1, 0
      %v857 = vsel %vm601, 1, 0
      %v858 = vsel %vm602, 1, 0
      %v859 = vsel %vm603, 1, 0
      %v860 = vsel %vm604, 1, 0
      %v861 = vsel %vm605, 1, 0
      %v862 = vsel %vm606, 1, 0
      %v863 = vsel %vm607, 1, 0
      %v864 = vsel %vm608, 1, 0
      %v865 = vsel %vm609, 1, 0
      %v866 = vsel %vm610, 1, 0
      %v867 = vsel %vm611, 1, 0
      %v868 = vsel %vm612, 1, 0
      %v869 = vsel %vm613, 1, 0
      %v870 = vsel %vm614, 1, 0
      %v871 = vsel %vm615, 1, 0
      %v872 = vsel %vm616, 1, 0
      %v873 = vsel %vm617, 1, 0
      %v874 = vsel %vm618, 1, 0
      %v875 = vsel %vm619, 1, 0
      %v876 = vsel %vm620, 1, 0
      %v877 = vsel %vm621, 1, 0
      %v878 = vsel %vm622, 1, 0
      %v879 = vsel %vm623, 1, 0
      %v880 = vsel %vm624, 1, 0
      %v881 = vsel %vm625, 1, 0
      %v882 = vsel %vm626, 1, 0
      %v883 = vsel %vm627, 1, 0
      %v884 = vsel %vm628, 1, 0
      %v885 = vsel %vm629, 1, 0
      %v886 = vsel %vm630, 1, 0
      %v887 = vsel %vm631, 1, 0
      %v888 = vsel %vm632, 1, 0
      %v889 = vsel %vm633, 1, 0
      %v890 = vsel %vm634, 1, 0
      %v891 = vsel %vm635, 1, 0
      %v892 = vsel %vm636, 1, 0
      %v893 = vsel %vm637, 1, 0
      %v894 = vsel %vm638, 1, 0
      %v895 = vsel %vm639, 1, 0
      %v896 = vsel %vm640, 1, 0
      %v897 = vsel %vm641, 1, 0
      %v898 = vsel %vm642, 1, 0
      %v899 = vsel %vm643, 1, 0
      %v900 = vsel %vm644, 1, 0
      %v901 = vsel %vm645, 1, 0
      %v902 = vsel %vm646, 1, 0
      %v903 = vsel %vm647, 1, 0
      %v904 = vsel %vm648, 1, 0
      %v905 = vsel %vm649, 1, 0
      %v906 = vsel %vm650, 1, 0
      %v907 = vsel %vm651, 1, 0
      %v908 = vsel %vm652, 1, 0
      %v909 = vsel %vm653, 1, 0
      %v910 = vsel %vm654, 1, 0
      %v911 = vsel %vm655, 1, 0
      %v912 = vsel %vm656, 1, 0
      %v913 = vsel %vm657, 1, 0
      %v914 = vsel %vm658, 1, 0
      %v915 = vsel %vm659, 1, 0
      %v916 = vsel %vm660, 1, 0
      %v917 = vsel %vm661, 1, 0
      %v918 = vsel %vm662, 1, 0
      %v919 = vsel %vm663, 1, 0
      %v920 = vsel %vm664, 1, 0
      %v921 = vsel %vm665, 1, 0
      %v922 = vsel %vm666, 1, 0
      %v923 = vsel %vm667, 1, 0
      %v924 = vsel %vm668, 1, 0
      %v925 = vsel %vm669, 1, 0
      %v926 = vsel %vm670, 1, 0
      %v927 = vsel %vm671, 1, 0
      %v928 = vsel %vm672, 1, 0
      %v929 = vsel %vm673, 1, 0
      %v930 = vsel %vm674, 1, 0
      %v931 = vsel %vm675, 1, 0
      %v932 = vsel %vm676, 1, 0
      %v933 = vsel %vm677, 1, 0
      %v934 = vsel %vm678, 1, 0
      %v935 = vsel %vm679, 1, 0
      %v936 = vsel %vm680, 1, 0
      %v937 = vsel %vm681, 1, 0
      %v938 = vsel %vm682, 1, 0
      %v939 = vsel %vm683, 1, 0
      %v940 = vsel %vm684, 1, 0
      %v941 = vsel %vm685, 1, 0
      %v942 = vsel %vm686, 1, 0
      %v943 = vsel %vm687, 1, 0
      %v944 = vsel %vm688, 1, 0
      %v945 = vsel %vm689, 1, 0
      %v946 = vsel %vm690, 1, 0
      %v947 = vsel %vm691, 1, 0
      %v948 = vsel %vm692, 1, 0
      %v949 = vsel %vm693, 1, 0
      %v950 = vsel %vm694, 1, 0
      %v951 = vsel %vm695, 1, 0
      %v952 = vsel %vm696, 1, 0
      %v953 = vsel %vm697, 1, 0
      %v954 = vsel %vm698, 1, 0
      %v955 = vsel %vm699, 1, 0
      %v956 = vsel %vm700, 1, 0
      %v957 = vsel %vm701, 1, 0
      %v958 = vsel %vm702, 1, 0
      %v959 = vsel %vm703, 1, 0
      %v960 = vsel %vm704, 1, 0
      %v961 = vsel %vm705, 1, 0
      %v962 = vsel %vm706, 1, 0
      %v963 = vsel %vm707, 1, 0
      %v964 = vsel %vm708, 1, 0
      %v965 = vsel %vm709, 1, 0
      %v966 = vsel %vm710, 1, 0
      %v967 = vsel %vm711, 1, 0
      %v968 = vsel %vm712, 1, 0
      %v969 = vsel %vm713, 1, 0
      %v970 = vsel %vm714, 1, 0
      %v971 = vsel %vm715, 1, 0
      %v972 = vsel %vm716, 1, 0
      %v973 = vsel %vm717, 1, 0
      %v974 = vsel %vm718, 1, 0
      %v975 = vsel %vm719, 1, 0
      %v976 = vsel %vm720, 1, 0
      %v977 = vsel %vm721, 1, 0
      %v978 = vsel %vm722, 1, 0
      %v979 = vsel %vm723, 1, 0
      %v980 = vsel %vm724, 1, 0
      %v981 = vsel %vm725, 1, 0
      %v982 = vsel %vm726, 1, 0
      %v983 = vsel %vm727, 1, 0
      %v984 = vsel %vm728, 1, 0
      %v985 = vsel %vm729, 1, 0
      %v986 = vsel %vm730, 1, 0
      %v987 = vsel %vm731, 1, 0
      %v988 = vsel %vm732, 1, 0
      %v989 = vsel %vm733, 1, 0
      %v990 = vsel %vm734, 1, 0
      %v991 = vsel %vm735, 1, 0
      %v992 = vsel %vm736, 1, 0
      %v993 = vsel %vm737, 1, 0
      %v994 = vsel %vm738, 1, 0
      %v995 = vsel %vm739, 1, 0
      %v996 = vsel %vm740, 1, 0
      %v997 = vsel %vm741, 1, 0
      %v998 = vsel %vm742, 1, 0
      %v999 = vsel %vm743, 1, 0
      %v1000 = vsel %vm744, 1, 0
      %v1001 = vsel %vm745, 1, 0
      %v1002 = vsel %vm746, 1, 0
      %v1003 = vsel %vm747, 1, 0
      %v1004 = vsel %vm748, 1, 0
      %v1005 = vsel %vm749, 1, 0
      %v1006 = vsel %vm750, 1, 0
      %v1007 = vsel %vm751, 1, 0
      %v1008 = vsel %vm752, 1, 0
      %v1009 = vsel %vm753, 1, 0
      %v1010 = vsel %vm754, 1, 0
      %v1011 = vsel %vm755, 1, 0
      %v1012 = vsel %vm756, 1, 0
      %v1013 = vsel %vm757, 1, 0
      %v1014 = vsel %vm758, 1, 0
      %v1015 = vsel %vm759, 1, 0
      %v1016 = vsel %vm760, 1, 0
      %v1017 = vsel %vm761, 1, 0
      %v1018 = vsel %vm762, 1, 0
      %v1019 = vsel %vm763, 1, 0
      %v1020 = vsel %vm764, 1, 0
      %v1021 = vsel %vm765, 1, 0
      %v1022 = vsel %vm766, 1, 0
      %v1023 = vsel %vm767, 1, 0
      %v1024 = vsel %vm768, 1, 0
      %v1025 = vsel %vm769, 1, 0
      %v1026 = vsel %vm770, 1, 0
      %v1027 = vsel %vm771, 1, 0
      %v1028 = vsel %vm772, 1, 0
      %v1029 = vsel %vm773, 1, 0
      %v1030 = vsel %vm774, 1, 0
      %v1031 = vsel %vm775, 1, 0
      %v1032 = vsel %vm776, 1, 0
      %v1033 = vsel %vm777, 1, 0
      %v1034 = vsel %vm778, 1, 0
      %v1035 = vsel %vm779, 1, 0
      %v1036 = vsel %vm780, 1, 0
      %v1037 = vsel %vm781, 1, 0
      %v1038 = vsel %vm782, 1, 0
      %v1039 = vsel %vm783, 1, 0
      %v1040 = vsel %vm784, 1, 0
      %v1041 = vsel %vm785, 1, 0
      %v1042 = vsel %vm786, 1, 0
      %v1043 = vsel %vm787, 1, 0
      %v1044 = vsel %vm788, 1, 0
      %v1045 = vsel %vm789, 1, 0
      %v1046 = vsel %vm790, 1, 0
      %v1047 = vsel %vm791, 1, 0
      %v1048 = vsel %vm792, 1, 0
      %v1049 = vsel %vm793, 1, 0
      %v1050 = vsel %vm794, 1, 0
      %v1051 = vsel %vm795, 1, 0
      %v1052 = vsel %vm796, 1, 0
      %v1053 = vsel %vm797, 1, 0
      %v1054 = vsel %vm798, 1, 0
      %v1055 = vsel %vm799, 1, 0
      %v1056 = vsel %vm800, 1, 0
      %v1057 = vsel %vm801, 1, 0
      %v1058 = vsel %vm802, 1, 0
      %v1059 = vsel %vm803, 1, 0
      %v1060 = vsel %vm804, 1, 0
      %v1061 = vsel %vm805, 1, 0
      %v1062 = vsel %vm806, 1, 0
      %v1063 = vsel %vm807, 1, 0
      %v1064 = vsel %vm808, 1, 0
      %v1065 = vsel %vm809, 1, 0
      %v1066 = vsel %vm810, 1, 0
      %v1067 = vsel %vm811, 1, 0
      %v1068 = vsel %vm812, 1, 0
      %v1069 = vsel %vm813, 1, 0
      %v1070 = vsel %vm814, 1, 0
      %v1071 = vsel %vm815, 1, 0
      %v1072 = vsel %vm816, 1, 0
      %v1073 = vsel %vm817, 1, 0
      %v1074 = vsel %vm818, 1, 0
      %v1075 = vsel %vm819, 1, 0
      %v1076 = vsel %vm820, 1, 0
      %v1077 = vsel %vm821, 1, 0
      %v1078 = vsel %vm822, 1, 0
      %v1079 = vsel %vm823, 1, 0
      %v1080 = vsel %vm824, 1, 0
      %v1081 = vsel %vm825, 1, 0
      %v1082 = vsel %vm826, 1, 0
      %v1083 = vsel %vm827, 1, 0
      %v1084 = vsel %vm828, 1, 0
      %v1085 = vsel %vm829, 1, 0
      %v1086 = vsel %vm830, 1, 0
      %v1087 = vsel %vm831, 1, 0
      %v1088 = vsel %vm832, 1, 0
      %v1089 = vsel %vm833, 1, 0
      %v1090 = vsel %vm834, 1, 0
      %v1091 = vsel %vm835, 1, 0
      %v1092 = vsel %vm836, 1, 0
      %v1093 = vsel %vm837, 1, 0
      %v1094 = vsel %vm838, 1, 0
      %v1095 = vsel %vm839, 1, 0
      %v1096 = vsel %vm840, 1, 0
      %v1097 = vsel %vm841, 1, 0
      %v1098 = vsel %vm842, 1, 0
      %v1099 = vsel %vm843, 1, 0
      %v1100 = vsel %vm844, 1, 0
      %v1101 = vsel %vm845, 1, 0
      %v1102 = vcvt.s32.f32 %v846
      %v1103 = vcvt.s32.f32 %v847
      %v1104 = vcvt.s32.f32 %v848
      %v1105 = vcvt.s32.f32 %v849
      %v1106 = vcvt.s32.f32 %v850
      %v1107 = vcvt.s32.f32 %v851
      %v1108 = vcvt.s32.f32 %v852
      %v1109 = vcvt.s32.f32 %v853
      %v1110 = vcvt.s32.f32 %v854
      %v1111 = vcvt.s32.f32 %v855
      %v1112 = vcvt.s32.f32 %v856
      %v1113 = vcvt.s32.f32 %v857
      %v1114 = vcvt.s32.f32 %v858
      %v1115 = vcvt.s32.f32 %v859
      %v1116 = vcvt.s32.f32 %v860
      %v1117 = vcvt.s32.f32 %v861
      %v1118 = vcvt.s32.f32 %v862
      %v1119 = vcvt.s32.f32 %v863
      %v1120 = vcvt.s32.f32 %v864
      %v1121 = vcvt.s32.f32 %v865
      %v1122 = vcvt.s32.f32 %v866
      %v1123 = vcvt.s32.f32 %v867
      %v1124 = vcvt.s32.f32 %v868
      %v1125 = vcvt.s32.f32 %v869
      %v1126 = vcvt.s32.f32 %v870
      %v1127 = vcvt.s32.f32 %v871
      %v1128 = vcvt.s32.f32 %v872
      %v1129 = vcvt.s32.f32 %v873
      %v1130 = vcvt.s32.f32 %v874
      %v1131 = vcvt.s32.f32 %v875
      %v1132 = vcvt.s32.f32 %v876
      %v1133 = vcvt.s32.f32 %v877
      %v1134 = vcvt.s32.f32 %v878
      %v1135 = vcvt.s32.f32 %v879
      %v1136 = vcvt.s32.f32 %v880
      %v1137 = vcvt.s32.f32 %v881
      %v1138 = vcvt.s32.f32 %v882
      %v1139 = vcvt.s32.f32 %v883
      %v1140 = vcvt.s32.f32 %v884
      %v1141 = vcvt.s32.f32 %v885
      %v1142 = vcvt.s32.f32 %v886
      %v1143 = vcvt.s32.f32 %v887
      %v1144 = vcvt.s32.f32 %v888
      %v1145 = vcvt.s32.f32 %v889
      %v1146 = vcvt.s32.f32 %v890
      %v1147 = vcvt.s32.f32 %v891
      %v1148 = vcvt.s32.f32 %v892
      %v1149 = vcvt.s32.f32 %v893
      %v1150 = vcvt.s32.f32 %v894
      %v1151 = vcvt.s32.f32 %v895
      %v1152 = vcvt.s32.f32 %v896
      %v1153 = vcvt.s32.f32 %v897
      %v1154 = vcvt.s32.f32 %v898
      %v1155 = vcvt.s32.f32 %v899
      %v1156 = vcvt.s32.f32 %v900
      %v1157 = vcvt.s32.f32 %v901
      %v1158 = vcvt.s32.f32 %v902
      %v1159 = vcvt.s32.f32 %v903
      %v1160 = vcvt.s32.f32 %v904
      %v1161 = vcvt.s32.f32 %v905
      %v1162 = vcvt.s32.f32 %v906
      %v1163 = vcvt.s32.f32 %v907
      %v1164 = vcvt.s32.f32 %v908
      %v1165 = vcvt.s32.f32 %v909
      %v1166 = vcvt.s32.f32 %v910
      %v1167 = vcvt.s32.f32 %v911
      %v1168 = vcvt.s32.f32 %v912
      %v1169 = vcvt.s32.f32 %v913
      %v1170 = vcvt.s32.f32 %v914
      %v1171 = vcvt.s32.f32 %v915
      %v1172 = vcvt.s32.f32 %v916
      %v1173 = vcvt.s32.f32 %v917
      %v1174 = vcvt.s32.f32 %v918
      %v1175 = vcvt.s32.f32 %v919
      %v1176 = vcvt.s32.f32 %v920
      %v1177 = vcvt.s32.f32 %v921
      %v1178 = vcvt.s32.f32 %v922
      %v1179 = vcvt.s32.f32 %v923
      %v1180 = vcvt.s32.f32 %v924
      %v1181 = vcvt.s32.f32 %v925
      %v1182 = vcvt.s32.f32 %v926
      %v1183 = vcvt.s32.f32 %v927
      %v1184 = vcvt.s32.f32 %v928
      %v1185 = vcvt.s32.f32 %v929
      %v1186 = vcvt.s32.f32 %v930
      %v1187 = vcvt.s32.f32 %v931
      %v1188 = vcvt.s32.f32 %v932
      %v1189 = vcvt.s32.f32 %v933
      %v1190 = vcvt.s32.f32 %v934
      %v1191 = vcvt.s32.f32 %v935
      %v1192 = vcvt.s32.f32 %v936
      %v1193 = vcvt.s32.f32 %v937
      %v1194 = vcvt.s32.f32 %v938
      %v1195 = vcvt.s32.f32 %v939
      %v1196 = vcvt.s32.f32 %v940
      %v1197 = vcvt.s32.f32 %v941
      %v1198 = vcvt.s32.f32 %v942
      %v1199 = vcvt.s32.f32 %v943
      %v1200 = vcvt.s32.f32 %v944
      %v1201 = vcvt.s32.f32 %v945
      %v1202 = vcvt.s32.f32 %v946
      %v1203 = vcvt.s32.f32 %v947
      %v1204 = vcvt.s32.f32 %v948
      %v1205 = vcvt.s32.f32 %v949
      %v1206 = vcvt.s32.f32 %v950
      %v1207 = vcvt.s32.f32 %v951
      %v1208 = vcvt.s32.f32 %v952
      %v1209 = vcvt.s32.f32 %v953
      %v1210 = vcvt.s32.f32 %v954
      %v1211 = vcvt.s32.f32 %v955
      %v1212 = vcvt.s32.f32 %v956
      %v1213 = vcvt.s32.f32 %v957
      %v1214 = vcvt.s32.f32 %v958
      %v1215 = vcvt.s32.f32 %v959
      %v1216 = vcvt.s32.f32 %v960
      %v1217 = vcvt.s32.f32 %v961
      %v1218 = vcvt.s32.f32 %v962
      %v1219 = vcvt.s32.f32 %v963
      %v1220 = vcvt.s32.f32 %v964
      %v1221 = vcvt.s32.f32 %v965
      %v1222 = vcvt.s32.f32 %v966
      %v1223 = vcvt.s32.f32 %v967
      %v1224 = vcvt.s32.f32 %v968
      %v1225 = vcvt.s32.f32 %v969
      %v1226 = vcvt.s32.f32 %v970
      %v1227 = vcvt.s32.f32 %v971
      %v1228 = vcvt.s32.f32 %v972
      %v1229 = vcvt.s32.f32 %v973
      %v1230 = vcvt.s32.f32 %v974
      %v1231 = vcvt.s32.f32 %v975
      %v1232 = vcvt.s32.f32 %v976
      %v1233 = vcvt.s32.f32 %v977
      %v1234 = vcvt.s32.f32 %v978
      %v1235 = vcvt.s32.f32 %v979
      %v1236 = vcvt.s32.f32 %v980
      %v1237 = vcvt.s32.f32 %v981
      %v1238 = vcvt.s32.f32 %v982
      %v1239 = vcvt.s32.f32 %v983
      %v1240 = vcvt.s32.f32 %v984
      %v1241 = vcvt.s32.f32 %v985
      %v1242 = vcvt.s32.f32 %v986
      %v1243 = vcvt.s32.f32 %v987
      %v1244 = vcvt.s32.f32 %v988
      %v1245 = vcvt.s32.f32 %v989
      %v1246 = vcvt.s32.f32 %v990
      %v1247 = vcvt.s32.f32 %v991
      %v1248 = vcvt.s32.f32 %v992
      %v1249 = vcvt.s32.f32 %v993
      %v1250 = vcvt.s32.f32 %v994
      %v1251 = vcvt.s32.f32 %v995
      %v1252 = vcvt.s32.f32 %v996
      %v1253 = vcvt.s32.f32 %v997
      %v1254 = vcvt.s32.f32 %v998
      %v1255 = vcvt.s32.f32 %v999
      %v1256 = vcvt.s32.f32 %v1000
      %v1257 = vcvt.s32.f32 %v1001
      %v1258 = vcvt.s32.f32 %v1002
      %v1259 = vcvt.s32.f32 %v1003
      %v1260 = vcvt.s32.f32 %v1004
      %v1261 = vcvt.s32.f32 %v1005
      %v1262 = vcvt.s32.f32 %v1006
      %v1263 = vcvt.s32.f32 %v1007
      %v1264 = vcvt.s32.f32 %v1008
      %v1265 = vcvt.s32.f32 %v1009
      %v1266 = vcvt.s32.f32 %v1010
      %v1267 = vcvt.s32.f32 %v1011
      %v1268 = vcvt.s32.f32 %v1012
      %v1269 = vcvt.s32.f32 %v1013
      %v1270 = vcvt.s32.f32 %v1014
      %v1271 = vcvt.s32.f32 %v1015
      %v1272 = vcvt.s32.f32 %v1016
      %v1273 = vcvt.s32.f32 %v1017
      %v1274 = vcvt.s32.f32 %v1018
      %v1275 = vcvt.s32.f32 %v1019
      %v1276 = vcvt.s32.f32 %v1020
      %v1277 = vcvt.s32.f32 %v1021
      %v1278 = vcvt.s32.f32 %v1022
      %v1279 = vcvt.s32.f32 %v1023
      %v1280 = vcvt.s32.f32 %v1024
      %v1281 = vcvt.s32.f32 %v1025
      %v1282 = vcvt.s32.f32 %v1026
      %v1283 = vcvt.s32.f32 %v1027
      %v1284 = vcvt.s32.f32 %v1028
      %v1285 = vcvt.s32.f32 %v1029
      %v1286 = vcvt.s32.f32 %v1030
      %v1287 = vcvt.s32.f32 %v1031
      %v1288 = vcvt.s32.f32 %v1032
      %v1289 = vcvt.s32.f32 %v1033
      %v1290 = vcvt.s32.f32 %v1034
      %v1291 = vcvt.s32.f32 %v1035
      %v1292 = vcvt.s32.f32 %v1036
      %v1293 = vcvt.s32.f32 %v1037
      %v1294 = vcvt.s32.f32 %v1038
      %v1295 = vcvt.s32.f32 %v1039
      %v1296 = vcvt.s32.f32 %v1040
      %v1297 = vcvt.s32.f32 %v1041
      %v1298 = vcvt.s32.f32 %v1042
      %v1299 = vcvt.s32.f32 %v1043
      %v1300 = vcvt.s32.f32 %v1044
      %v1301 = vcvt.s32.f32 %v1045
      %v1302 = vcvt.s32.f32 %v1046
      %v1303 = vcvt.s32.f32 %v1047
      %v1304 = vcvt.s32.f32 %v1048
      %v1305 = vcvt.s32.f32 %v1049
      %v1306 = vcvt.s32.f32 %v1050
      %v1307 = vcvt.s32.f32 %v1051
      %v1308 = vcvt.s32.f32 %v1052
      %v1309 = vcvt.s32.f32 %v1053
      %v1310 = vcvt.s32.f32 %v1054
      %v1311 = vcvt.s32.f32 %v1055
      %v1312 = vcvt.s32.f32 %v1056
      %v1313 = vcvt.s32.f32 %v1057
      %v1314 = vcvt.s32.f32 %v1058
      %v1315 = vcvt.s32.f32 %v1059
      %v1316 = vcvt.s32.f32 %v1060
      %v1317 = vcvt.s32.f32 %v1061
      %v1318 = vcvt.s32.f32 %v1062
      %v1319 = vcvt.s32.f32 %v1063
      %v1320 = vcvt.s32.f32 %v1064
      %v1321 = vcvt.s32.f32 %v1065
      %v1322 = vcvt.s32.f32 %v1066
      %v1323 = vcvt.s32.f32 %v1067
      %v1324 = vcvt.s32.f32 %v1068
      %v1325 = vcvt.s32.f32 %v1069
      %v1326 = vcvt.s32.f32 %v1070
      %v1327 = vcvt.s32.f32 %v1071
      %v1328 = vcvt.s32.f32 %v1072
      %v1329 = vcvt.s32.f32 %v1073
      %v1330 = vcvt.s32.f32 %v1074
      %v1331 = vcvt.s32.f32 %v1075
      %v1332 = vcvt.s32.f32 %v1076
      %v1333 = vcvt.s32.f32 %v1077
      %v1334 = vcvt.s32.f32 %v1078
      %v1335 = vcvt.s32.f32 %v1079
      %v1336 = vcvt.s32.f32 %v1080
      %v1337 = vcvt.s32.f32 %v1081
      %v1338 = vcvt.s32.f32 %v1082
      %v1339 = vcvt.s32.f32 %v1083
      %v1340 = vcvt.s32.f32 %v1084
      %v1341 = vcvt.s32.f32 %v1085
      %v1342 = vcvt.s32.f32 %v1086
      %v1343 = vcvt.s32.f32 %v1087
      %v1344 = vcvt.s32.f32 %v1088
      %v1345 = vcvt.s32.f32 %v1089
      %v1346 = vcvt.s32.f32 %v1090
      %v1347 = vcvt.s32.f32 %v1091
      %v1348 = vcvt.s32.f32 %v1092
      %v1349 = vcvt.s32.f32 %v1093
      %v1350 = vcvt.s32.f32 %v1094
      %v1351 = vcvt.s32.f32 %v1095
      %v1352 = vcvt.s32.f32 %v1096
      %v1353 = vcvt.s32.f32 %v1097
      %v1354 = vcvt.s32.f32 %v1098
      %v1355 = vcvt.s32.f32 %v1099
      %v1356 = vcvt.s32.f32 %v1100
      %v1357 = vcvt.s32.f32 %v1101
      %v1358 = vpack.c.bf16 %v1118, %v1102
      %v1359 = vpack.c.bf16 %v1119, %v1103
      %v1360 = vpack.c.bf16 %v1120, %v1104
      %v1361 = vpack.c.bf16 %v1121, %v1105
      %v1362 = vpack.c.bf16 %v1122, %v1106
      %v1363 = vpack.c.bf16 %v1123, %v1107
      %v1364 = vpack.c.bf16 %v1124, %v1108
      %v1365 = vpack.c.bf16 %v1125, %v1109
      %v1366 = vpack.c.bf16 %v1126, %v1110
      %v1367 = vpack.c.bf16 %v1127, %v1111
      %v1368 = vpack.c.bf16 %v1128, %v1112
      %v1369 = vpack.c.bf16 %v1129, %v1113
      %v1370 = vpack.c.bf16 %v1130, %v1114
      %v1371 = vpack.c.bf16 %v1131, %v1115
      %v1372 = vpack.c.bf16 %v1132, %v1116
      %v1373 = vpack.c.bf16 %v1133, %v1117
      %v1374 = vpack.c.bf16 %v1150, %v1134
      %v1375 = vpack.c.bf16 %v1151, %v1135
      %v1376 = vpack.c.bf16 %v1152, %v1136
      %v1377 = vpack.c.bf16 %v1153, %v1137
      %v1378 = vpack.c.bf16 %v1154, %v1138
      %v1379 = vpack.c.bf16 %v1155, %v1139
      %v1380 = vpack.c.bf16 %v1156, %v1140
      %v1381 = vpack.c.bf16 %v1157, %v1141
      %v1382 = vpack.c.bf16 %v1158, %v1142
      %v1383 = vpack.c.bf16 %v1159, %v1143
      %v1384 = vpack.c.bf16 %v1160, %v1144
      %v1385 = vpack.c.bf16 %v1161, %v1145
      %v1386 = vpack.c.bf16 %v1162, %v1146
      %v1387 = vpack.c.bf16 %v1163, %v1147
      %v1388 = vpack.c.bf16 %v1164, %v1148
      %v1389 = vpack.c.bf16 %v1165, %v1149
      %v1390 = vpack.c.bf16 %v1182, %v1166
      %v1391 = vpack.c.bf16 %v1183, %v1167
      %v1392 = vpack.c.bf16 %v1184, %v1168
      %v1393 = vpack.c.bf16 %v1185, %v1169
      %v1394 = vpack.c.bf16 %v1186, %v1170
      %v1395 = vpack.c.bf16 %v1187, %v1171
      %v1396 = vpack.c.bf16 %v1188, %v1172
      %v1397 = vpack.c.bf16 %v1189, %v1173
      %v1398 = vpack.c.bf16 %v1190, %v1174
      %v1399 = vpack.c.bf16 %v1191, %v1175
      %v1400 = vpack.c.bf16 %v1192, %v1176
      %v1401 = vpack.c.bf16 %v1193, %v1177
      %v1402 = vpack.c.bf16 %v1194, %v1178
      %v1403 = vpack.c.bf16 %v1195, %v1179
      %v1404 = vpack.c.bf16 %v1196, %v1180
      %v1405 = vpack.c.bf16 %v1197, %v1181
      %v1406 = vpack.c.bf16 %v1214, %v1198
      %v1407 = vpack.c.bf16 %v1215, %v1199
      %v1408 = vpack.c.bf16 %v1216, %v1200
      %v1409 = vpack.c.bf16 %v1217, %v1201
      %v1410 = vpack.c.bf16 %v1218, %v1202
      %v1411 = vpack.c.bf16 %v1219, %v1203
      %v1412 = vpack.c.bf16 %v1220, %v1204
      %v1413 = vpack.c.bf16 %v1221, %v1205
      %v1414 = vpack.c.bf16 %v1222, %v1206
      %v1415 = vpack.c.bf16 %v1223, %v1207
      %v1416 = vpack.c.bf16 %v1224, %v1208
      %v1417 = vpack.c.bf16 %v1225, %v1209
      %v1418 = vpack.c.bf16 %v1226, %v1210
      %v1419 = vpack.c.bf16 %v1227, %v1211
      %v1420 = vpack.c.bf16 %v1228, %v1212
      %v1421 = vpack.c.bf16 %v1229, %v1213
      %v1422 = vpack.c.bf16 %v1246, %v1230
      %v1423 = vpack.c.bf16 %v1247, %v1231
      %v1424 = vpack.c.bf16 %v1248, %v1232
      %v1425 = vpack.c.bf16 %v1249, %v1233
      %v1426 = vpack.c.bf16 %v1250, %v1234
      %v1427 = vpack.c.bf16 %v1251, %v1235
      %v1428 = vpack.c.bf16 %v1252, %v1236
      %v1429 = vpack.c.bf16 %v1253, %v1237
      %v1430 = vpack.c.bf16 %v1254, %v1238
      %v1431 = vpack.c.bf16 %v1255, %v1239
      %v1432 = vpack.c.bf16 %v1256, %v1240
      %v1433 = vpack.c.bf16 %v1257, %v1241
      %v1434 = vpack.c.bf16 %v1258, %v1242
      %v1435 = vpack.c.bf16 %v1259, %v1243
      %v1436 = vpack.c.bf16 %v1260, %v1244
      %v1437 = vpack.c.bf16 %v1261, %v1245
      %v1438 = vpack.c.bf16 %v1278, %v1262
      %v1439 = vpack.c.bf16 %v1279, %v1263
      %v1440 = vpack.c.bf16 %v1280, %v1264
      %v1441 = vpack.c.bf16 %v1281, %v1265
      %v1442 = vpack.c.bf16 %v1282, %v1266
      %v1443 = vpack.c.bf16 %v1283, %v1267
      %v1444 = vpack.c.bf16 %v1284, %v1268
      %v1445 = vpack.c.bf16 %v1285, %v1269
      %v1446 = vpack.c.bf16 %v1286, %v1270
      %v1447 = vpack.c.bf16 %v1287, %v1271
      %v1448 = vpack.c.bf16 %v1288, %v1272
      %v1449 = vpack.c.bf16 %v1289, %v1273
      %v1450 = vpack.c.bf16 %v1290, %v1274
      %v1451 = vpack.c.bf16 %v1291, %v1275
      %v1452 = vpack.c.bf16 %v1292, %v1276
      %v1453 = vpack.c.bf16 %v1293, %v1277
      %v1454 = vpack.c.bf16 %v1310, %v1294
      %v1455 = vpack.c.bf16 %v1311, %v1295
      %v1456 = vpack.c.bf16 %v1312, %v1296
      %v1457 = vpack.c.bf16 %v1313, %v1297
      %v1458 = vpack.c.bf16 %v1314, %v1298
      %v1459 = vpack.c.bf16 %v1315, %v1299
      %v1460 = vpack.c.bf16 %v1316, %v1300
      %v1461 = vpack.c.bf16 %v1317, %v1301
      %v1462 = vpack.c.bf16 %v1318, %v1302
      %v1463 = vpack.c.bf16 %v1319, %v1303
      %v1464 = vpack.c.bf16 %v1320, %v1304
      %v1465 = vpack.c.bf16 %v1321, %v1305
      %v1466 = vpack.c.bf16 %v1322, %v1306
      %v1467 = vpack.c.bf16 %v1323, %v1307
      %v1468 = vpack.c.bf16 %v1324, %v1308
      %v1469 = vpack.c.bf16 %v1325, %v1309
      %v1470 = vpack.c.bf16 %v1342, %v1326
      %v1471 = vpack.c.bf16 %v1343, %v1327
      %v1472 = vpack.c.bf16 %v1344, %v1328
      %v1473 = vpack.c.bf16 %v1345, %v1329
      %v1474 = vpack.c.bf16 %v1346, %v1330
      %v1475 = vpack.c.bf16 %v1347, %v1331
      %v1476 = vpack.c.bf16 %v1348, %v1332
      %v1477 = vpack.c.bf16 %v1349, %v1333
      %v1478 = vpack.c.bf16 %v1350, %v1334
      %v1479 = vpack.c.bf16 %v1351, %v1335
      %v1480 = vpack.c.bf16 %v1352, %v1336
      %v1481 = vpack.c.bf16 %v1353, %v1337
      %v1482 = vpack.c.bf16 %v1354, %v1338
      %v1483 = vpack.c.bf16 %v1355, %v1339
      %v1484 = vpack.c.bf16 %v1356, %v1340
      %v1485 = vpack.c.bf16 %v1357, %v1341
      %v1486 = vld [vmem:[%s4] sm:$0xf]
      %v1487 = vld [vmem:[%s4 + $0x4] sm:$0xf]
      %v1488 = vld [vmem:[%s4 + $0x8] sm:$0xf]
      %v1489 = vld [vmem:[%s4 + $0xc] sm:$0xf]
      %v1490 = vld [vmem:[%s4 + $0x10] sm:$0xf]
      %v1491 = vld [vmem:[%s4 + $0x14] sm:$0xf]
      %v1492 = vld [vmem:[%s4 + $0x18] sm:$0xf]
      %v1493 = vld [vmem:[%s4 + $0x1c] sm:$0xf]
      %v1494 = vld [vmem:[%s4 + $0x20] sm:$0xf]
      %v1495 = vld [vmem:[%s4 + $0x24] sm:$0xf]
      %v1496 = vld [vmem:[%s4 + $0x28] sm:$0xf]
      %v1497 = vld [vmem:[%s4 + $0x2c] sm:$0xf]
      %v1498 = vld [vmem:[%s4 + $0x30] sm:$0xf]
      %v1499 = vld [vmem:[%s4 + $0x34] sm:$0xf]
      %v1500 = vld [vmem:[%s4 + $0x38] sm:$0xf]
      %v1501 = vld [vmem:[%s4 + $0x3c] sm:$0xf]
      %v1502 = vld [vmem:[%s4 + $0x40] sm:$0xf]
      %v1503 = vld [vmem:[%s4 + $0x44] sm:$0xf]
      %v1504 = vld [vmem:[%s4 + $0x48] sm:$0xf]
      %v1505 = vld [vmem:[%s4 + $0x4c] sm:$0xf]
      %v1506 = vld [vmem:[%s4 + $0x50] sm:$0xf]
      %v1507 = vld [vmem:[%s4 + $0x54] sm:$0xf]
      %v1508 = vld [vmem:[%s4 + $0x58] sm:$0xf]
      %v1509 = vld [vmem:[%s4 + $0x5c] sm:$0xf]
      %v1510 = vld [vmem:[%s4 + $0x60] sm:$0xf]
      %v1511 = vld [vmem:[%s4 + $0x64] sm:$0xf]
      %v1512 = vld [vmem:[%s4 + $0x68] sm:$0xf]
      %v1513 = vld [vmem:[%s4 + $0x6c] sm:$0xf]
      %v1514 = vld [vmem:[%s4 + $0x70] sm:$0xf]
      %v1515 = vld [vmem:[%s4 + $0x74] sm:$0xf]
      %v1516 = vld [vmem:[%s4 + $0x78] sm:$0xf]
      %v1517 = vld [vmem:[%s4 + $0x7c] sm:$0xf]
      %v1518 = vld [vmem:[%s4 + $0x80] sm:$0xf]
      %v1519 = vld [vmem:[%s4 + $0x84] sm:$0xf]
      %v1520 = vld [vmem:[%s4 + $0x88] sm:$0xf]
      %v1521 = vld [vmem:[%s4 + $0x8c] sm:$0xf]
      %v1522 = vld [vmem:[%s4 + $0x90] sm:$0xf]
      %v1523 = vld [vmem:[%s4 + $0x94] sm:$0xf]
      %v1524 = vld [vmem:[%s4 + $0x98] sm:$0xf]
      %v1525 = vld [vmem:[%s4 + $0x9c] sm:$0xf]
      %v1526 = vld [vmem:[%s4 + $0xa0] sm:$0xf]
      %v1527 = vld [vmem:[%s4 + $0xa4] sm:$0xf]
      %v1528 = vld [vmem:[%s4 + $0xa8] sm:$0xf]
      %v1529 = vld [vmem:[%s4 + $0xac] sm:$0xf]
      %v1530 = vld [vmem:[%s4 + $0xb0] sm:$0xf]
      %v1531 = vld [vmem:[%s4 + $0xb4] sm:$0xf]
      %v1532 = vld [vmem:[%s4 + $0xb8] sm:$0xf]
      %v1533 = vld [vmem:[%s4 + $0xbc] sm:$0xf]
      %v1534 = vld [vmem:[%s4 + $0xc0] sm:$0xf]
      %v1535 = vld [vmem:[%s4 + $0xc4] sm:$0xf]
      %v1536 = vld [vmem:[%s4 + $0xc8] sm:$0xf]
      %v1537 = vld [vmem:[%s4 + $0xcc] sm:$0xf]
      %v1538 = vld [vmem:[%s4 + $0xd0] sm:$0xf]
      %v1539 = vld [vmem:[%s4 + $0xd4] sm:$0xf]
      %v1540 = vld [vmem:[%s4 + $0xd8] sm:$0xf]
      %v1541 = vld [vmem:[%s4 + $0xdc] sm:$0xf]
      %v1542 = vld [vmem:[%s4 + $0xe0] sm:$0xf]
      %v1543 = vld [vmem:[%s4 + $0xe4] sm:$0xf]
      %v1544 = vld [vmem:[%s4 + $0xe8] sm:$0xf]
      %v1545 = vld [vmem:[%s4 + $0xec] sm:$0xf]
      %v1546 = vld [vmem:[%s4 + $0xf0] sm:$0xf]
      %v1547 = vld [vmem:[%s4 + $0xf4] sm:$0xf]
      %v1548 = vld [vmem:[%s4 + $0xf8] sm:$0xf]
      %v1549 = vld [vmem:[%s4 + $0xfc] sm:$0xf]
      %v1550 = vld [vmem:[%s4 + $0x100] sm:$0xf]
      %v1551 = vld [vmem:[%s4 + $0x104] sm:$0xf]
      %v1552 = vld [vmem:[%s4 + $0x108] sm:$0xf]
      %v1553 = vld [vmem:[%s4 + $0x10c] sm:$0xf]
      %v1554 = vld [vmem:[%s4 + $0x110] sm:$0xf]
      %v1555 = vld [vmem:[%s4 + $0x114] sm:$0xf]
      %v1556 = vld [vmem:[%s4 + $0x118] sm:$0xf]
      %v1557 = vld [vmem:[%s4 + $0x11c] sm:$0xf]
      %v1558 = vld [vmem:[%s4 + $0x120] sm:$0xf]
      %v1559 = vld [vmem:[%s4 + $0x124] sm:$0xf]
      %v1560 = vld [vmem:[%s4 + $0x128] sm:$0xf]
      %v1561 = vld [vmem:[%s4 + $0x12c] sm:$0xf]
      %v1562 = vld [vmem:[%s4 + $0x130] sm:$0xf]
      %v1563 = vld [vmem:[%s4 + $0x134] sm:$0xf]
      %v1564 = vld [vmem:[%s4 + $0x138] sm:$0xf]
      %v1565 = vld [vmem:[%s4 + $0x13c] sm:$0xf]
      %v1566 = vld [vmem:[%s4 + $0x140] sm:$0xf]
      %v1567 = vld [vmem:[%s4 + $0x144] sm:$0xf]
      %v1568 = vld [vmem:[%s4 + $0x148] sm:$0xf]
      %v1569 = vld [vmem:[%s4 + $0x14c] sm:$0xf]
      %v1570 = vld [vmem:[%s4 + $0x150] sm:$0xf]
      %v1571 = vld [vmem:[%s4 + $0x154] sm:$0xf]
      %v1572 = vld [vmem:[%s4 + $0x158] sm:$0xf]
      %v1573 = vld [vmem:[%s4 + $0x15c] sm:$0xf]
      %v1574 = vld [vmem:[%s4 + $0x160] sm:$0xf]
      %v1575 = vld [vmem:[%s4 + $0x164] sm:$0xf]
      %v1576 = vld [vmem:[%s4 + $0x168] sm:$0xf]
      %v1577 = vld [vmem:[%s4 + $0x16c] sm:$0xf]
      %v1578 = vld [vmem:[%s4 + $0x170] sm:$0xf]
      %v1579 = vld [vmem:[%s4 + $0x174] sm:$0xf]
      %v1580 = vld [vmem:[%s4 + $0x178] sm:$0xf]
      %v1581 = vld [vmem:[%s4 + $0x17c] sm:$0xf]
      %v1582 = vld [vmem:[%s4 + $0x180] sm:$0xf]
      %v1583 = vld [vmem:[%s4 + $0x184] sm:$0xf]
      %v1584 = vld [vmem:[%s4 + $0x188] sm:$0xf]
      %v1585 = vld [vmem:[%s4 + $0x18c] sm:$0xf]
      %v1586 = vld [vmem:[%s4 + $0x190] sm:$0xf]
      %v1587 = vld [vmem:[%s4 + $0x194] sm:$0xf]
      %v1588 = vld [vmem:[%s4 + $0x198] sm:$0xf]
      %v1589 = vld [vmem:[%s4 + $0x19c] sm:$0xf]
      %v1590 = vld [vmem:[%s4 + $0x1a0] sm:$0xf]
      %v1591 = vld [vmem:[%s4 + $0x1a4] sm:$0xf]
      %v1592 = vld [vmem:[%s4 + $0x1a8] sm:$0xf]
      %v1593 = vld [vmem:[%s4 + $0x1ac] sm:$0xf]
      %v1594 = vld [vmem:[%s4 + $0x1b0] sm:$0xf]
      %v1595 = vld [vmem:[%s4 + $0x1b4] sm:$0xf]
      %v1596 = vld [vmem:[%s4 + $0x1b8] sm:$0xf]
      %v1597 = vld [vmem:[%s4 + $0x1bc] sm:$0xf]
      %v1598 = vld [vmem:[%s4 + $0x1c0] sm:$0xf]
      %v1599 = vld [vmem:[%s4 + $0x1c4] sm:$0xf]
      %v1600 = vld [vmem:[%s4 + $0x1c8] sm:$0xf]
      %v1601 = vld [vmem:[%s4 + $0x1cc] sm:$0xf]
      %v1602 = vld [vmem:[%s4 + $0x1d0] sm:$0xf]
      %v1603 = vld [vmem:[%s4 + $0x1d4] sm:$0xf]
      %v1604 = vld [vmem:[%s4 + $0x1d8] sm:$0xf]
      %v1605 = vld [vmem:[%s4 + $0x1dc] sm:$0xf]
      %v1606 = vld [vmem:[%s4 + $0x1e0] sm:$0xf]
      %v1607 = vld [vmem:[%s4 + $0x1e4] sm:$0xf]
      %v1608 = vld [vmem:[%s4 + $0x1e8] sm:$0xf]
      %v1609 = vld [vmem:[%s4 + $0x1ec] sm:$0xf]
      %v1610 = vld [vmem:[%s4 + $0x1f0] sm:$0xf]
      %v1611 = vld [vmem:[%s4 + $0x1f4] sm:$0xf]
      %v1612 = vld [vmem:[%s4 + $0x1f8] sm:$0xf]
      %v1613 = vld [vmem:[%s4 + $0x1fc] sm:$0xf]
      %v1614 = vld [vmem:[%s4 + $0x200] sm:$0xf]
      %v1615 = vld [vmem:[%s4 + $0x204] sm:$0xf]
      %v1616 = vld [vmem:[%s4 + $0x208] sm:$0xf]
      %v1617 = vld [vmem:[%s4 + $0x20c] sm:$0xf]
      %v1618 = vld [vmem:[%s4 + $0x210] sm:$0xf]
      %v1619 = vld [vmem:[%s4 + $0x214] sm:$0xf]
      %v1620 = vld [vmem:[%s4 + $0x218] sm:$0xf]
      %v1621 = vld [vmem:[%s4 + $0x21c] sm:$0xf]
      %v1622 = vld [vmem:[%s4 + $0x220] sm:$0xf]
      %v1623 = vld [vmem:[%s4 + $0x224] sm:$0xf]
      %v1624 = vld [vmem:[%s4 + $0x228] sm:$0xf]
      %v1625 = vld [vmem:[%s4 + $0x22c] sm:$0xf]
      %v1626 = vld [vmem:[%s4 + $0x230] sm:$0xf]
      %v1627 = vld [vmem:[%s4 + $0x234] sm:$0xf]
      %v1628 = vld [vmem:[%s4 + $0x238] sm:$0xf]
      %v1629 = vld [vmem:[%s4 + $0x23c] sm:$0xf]
      %v1630 = vld [vmem:[%s4 + $0x240] sm:$0xf]
      %v1631 = vld [vmem:[%s4 + $0x244] sm:$0xf]
      %v1632 = vld [vmem:[%s4 + $0x248] sm:$0xf]
      %v1633 = vld [vmem:[%s4 + $0x24c] sm:$0xf]
      %v1634 = vld [vmem:[%s4 + $0x250] sm:$0xf]
      %v1635 = vld [vmem:[%s4 + $0x254] sm:$0xf]
      %v1636 = vld [vmem:[%s4 + $0x258] sm:$0xf]
      %v1637 = vld [vmem:[%s4 + $0x25c] sm:$0xf]
      %v1638 = vld [vmem:[%s4 + $0x260] sm:$0xf]
      %v1639 = vld [vmem:[%s4 + $0x264] sm:$0xf]
      %v1640 = vld [vmem:[%s4 + $0x268] sm:$0xf]
      %v1641 = vld [vmem:[%s4 + $0x26c] sm:$0xf]
      %v1642 = vld [vmem:[%s4 + $0x270] sm:$0xf]
      %v1643 = vld [vmem:[%s4 + $0x274] sm:$0xf]
      %v1644 = vld [vmem:[%s4 + $0x278] sm:$0xf]
      %v1645 = vld [vmem:[%s4 + $0x27c] sm:$0xf]
      %v1646 = vld [vmem:[%s4 + $0x280] sm:$0xf]
      %v1647 = vld [vmem:[%s4 + $0x284] sm:$0xf]
      %v1648 = vld [vmem:[%s4 + $0x288] sm:$0xf]
      %v1649 = vld [vmem:[%s4 + $0x28c] sm:$0xf]
      %v1650 = vld [vmem:[%s4 + $0x290] sm:$0xf]
      %v1651 = vld [vmem:[%s4 + $0x294] sm:$0xf]
      %v1652 = vld [vmem:[%s4 + $0x298] sm:$0xf]
      %v1653 = vld [vmem:[%s4 + $0x29c] sm:$0xf]
      %v1654 = vld [vmem:[%s4 + $0x2a0] sm:$0xf]
      %v1655 = vld [vmem:[%s4 + $0x2a4] sm:$0xf]
      %v1656 = vld [vmem:[%s4 + $0x2a8] sm:$0xf]
      %v1657 = vld [vmem:[%s4 + $0x2ac] sm:$0xf]
      %v1658 = vld [vmem:[%s4 + $0x2b0] sm:$0xf]
      %v1659 = vld [vmem:[%s4 + $0x2b4] sm:$0xf]
      %v1660 = vld [vmem:[%s4 + $0x2b8] sm:$0xf]
      %v1661 = vld [vmem:[%s4 + $0x2bc] sm:$0xf]
      %v1662 = vld [vmem:[%s4 + $0x2c0] sm:$0xf]
      %v1663 = vld [vmem:[%s4 + $0x2c4] sm:$0xf]
      %v1664 = vld [vmem:[%s4 + $0x2c8] sm:$0xf]
      %v1665 = vld [vmem:[%s4 + $0x2cc] sm:$0xf]
      %v1666 = vld [vmem:[%s4 + $0x2d0] sm:$0xf]
      %v1667 = vld [vmem:[%s4 + $0x2d4] sm:$0xf]
      %v1668 = vld [vmem:[%s4 + $0x2d8] sm:$0xf]
      %v1669 = vld [vmem:[%s4 + $0x2dc] sm:$0xf]
      %v1670 = vld [vmem:[%s4 + $0x2e0] sm:$0xf]
      %v1671 = vld [vmem:[%s4 + $0x2e4] sm:$0xf]
      %v1672 = vld [vmem:[%s4 + $0x2e8] sm:$0xf]
      %v1673 = vld [vmem:[%s4 + $0x2ec] sm:$0xf]
      %v1674 = vld [vmem:[%s4 + $0x2f0] sm:$0xf]
      %v1675 = vld [vmem:[%s4 + $0x2f4] sm:$0xf]
      %v1676 = vld [vmem:[%s4 + $0x2f8] sm:$0xf]
      %v1677 = vld [vmem:[%s4 + $0x2fc] sm:$0xf]
      %v1678 = vld [vmem:[%s4 + $0x300] sm:$0xf]
      %v1679 = vld [vmem:[%s4 + $0x304] sm:$0xf]
      %v1680 = vld [vmem:[%s4 + $0x308] sm:$0xf]
      %v1681 = vld [vmem:[%s4 + $0x30c] sm:$0xf]
      %v1682 = vld [vmem:[%s4 + $0x310] sm:$0xf]
      %v1683 = vld [vmem:[%s4 + $0x314] sm:$0xf]
      %v1684 = vld [vmem:[%s4 + $0x318] sm:$0xf]
      %v1685 = vld [vmem:[%s4 + $0x31c] sm:$0xf]
      %v1686 = vld [vmem:[%s4 + $0x320] sm:$0xf]
      %v1687 = vld [vmem:[%s4 + $0x324] sm:$0xf]
      %v1688 = vld [vmem:[%s4 + $0x328] sm:$0xf]
      %v1689 = vld [vmem:[%s4 + $0x32c] sm:$0xf]
      %v1690 = vld [vmem:[%s4 + $0x330] sm:$0xf]
      %v1691 = vld [vmem:[%s4 + $0x334] sm:$0xf]
      %v1692 = vld [vmem:[%s4 + $0x338] sm:$0xf]
      %v1693 = vld [vmem:[%s4 + $0x33c] sm:$0xf]
      %v1694 = vld [vmem:[%s4 + $0x340] sm:$0xf]
      %v1695 = vld [vmem:[%s4 + $0x344] sm:$0xf]
      %v1696 = vld [vmem:[%s4 + $0x348] sm:$0xf]
      %v1697 = vld [vmem:[%s4 + $0x34c] sm:$0xf]
      %v1698 = vld [vmem:[%s4 + $0x350] sm:$0xf]
      %v1699 = vld [vmem:[%s4 + $0x354] sm:$0xf]
      %v1700 = vld [vmem:[%s4 + $0x358] sm:$0xf]
      %v1701 = vld [vmem:[%s4 + $0x35c] sm:$0xf]
      %v1702 = vld [vmem:[%s4 + $0x360] sm:$0xf]
      %v1703 = vld [vmem:[%s4 + $0x364] sm:$0xf]
      %v1704 = vld [vmem:[%s4 + $0x368] sm:$0xf]
      %v1705 = vld [vmem:[%s4 + $0x36c] sm:$0xf]
      %v1706 = vld [vmem:[%s4 + $0x370] sm:$0xf]
      %v1707 = vld [vmem:[%s4 + $0x374] sm:$0xf]
      %v1708 = vld [vmem:[%s4 + $0x378] sm:$0xf]
      %v1709 = vld [vmem:[%s4 + $0x37c] sm:$0xf]
      %v1710 = vld [vmem:[%s4 + $0x380] sm:$0xf]
      %v1711 = vld [vmem:[%s4 + $0x384] sm:$0xf]
      %v1712 = vld [vmem:[%s4 + $0x388] sm:$0xf]
      %v1713 = vld [vmem:[%s4 + $0x38c] sm:$0xf]
      %v1714 = vld [vmem:[%s4 + $0x390] sm:$0xf]
      %v1715 = vld [vmem:[%s4 + $0x394] sm:$0xf]
      %v1716 = vld [vmem:[%s4 + $0x398] sm:$0xf]
      %v1717 = vld [vmem:[%s4 + $0x39c] sm:$0xf]
      %v1718 = vld [vmem:[%s4 + $0x3a0] sm:$0xf]
      %v1719 = vld [vmem:[%s4 + $0x3a4] sm:$0xf]
      %v1720 = vld [vmem:[%s4 + $0x3a8] sm:$0xf]
      %v1721 = vld [vmem:[%s4 + $0x3ac] sm:$0xf]
      %v1722 = vld [vmem:[%s4 + $0x3b0] sm:$0xf]
      %v1723 = vld [vmem:[%s4 + $0x3b4] sm:$0xf]
      %v1724 = vld [vmem:[%s4 + $0x3b8] sm:$0xf]
      %v1725 = vld [vmem:[%s4 + $0x3bc] sm:$0xf]
      %v1726 = vld [vmem:[%s4 + $0x3c0] sm:$0xf]
      %v1727 = vld [vmem:[%s4 + $0x3c4] sm:$0xf]
      %v1728 = vld [vmem:[%s4 + $0x3c8] sm:$0xf]
      %v1729 = vld [vmem:[%s4 + $0x3cc] sm:$0xf]
      %v1730 = vld [vmem:[%s4 + $0x3d0] sm:$0xf]
      %v1731 = vld [vmem:[%s4 + $0x3d4] sm:$0xf]
      %v1732 = vld [vmem:[%s4 + $0x3d8] sm:$0xf]
      %v1733 = vld [vmem:[%s4 + $0x3dc] sm:$0xf]
      %v1734 = vld [vmem:[%s4 + $0x3e0] sm:$0xf]
      %v1735 = vld [vmem:[%s4 + $0x3e4] sm:$0xf]
      %v1736 = vld [vmem:[%s4 + $0x3e8] sm:$0xf]
      %v1737 = vld [vmem:[%s4 + $0x3ec] sm:$0xf]
      %v1738 = vld [vmem:[%s4 + $0x3f0] sm:$0xf]
      %v1739 = vld [vmem:[%s4 + $0x3f4] sm:$0xf]
      %v1740 = vld [vmem:[%s4 + $0x3f8] sm:$0xf]
      %v1741 = vld [vmem:[%s4 + $0x3fc] sm:$0xf]
      %v1998 = vunpack.c.l.b16 %v1486
      %v1999 = vunpack.c.l.b16 %v1487
      %v2000 = vunpack.c.l.b16 %v1488
      %v2001 = vunpack.c.l.b16 %v1489
      %v2002 = vunpack.c.l.b16 %v1490
      %v2003 = vunpack.c.l.b16 %v1491
      %v2004 = vunpack.c.l.b16 %v1492
      %v2005 = vunpack.c.l.b16 %v1493
      %v2006 = vunpack.c.l.b16 %v1494
      %v2007 = vunpack.c.l.b16 %v1495
      %v2008 = vunpack.c.l.b16 %v1496
      %v2009 = vunpack.c.l.b16 %v1497
      %v2010 = vunpack.c.l.b16 %v1498
      %v2011 = vunpack.c.l.b16 %v1499
      %v2012 = vunpack.c.l.b16 %v1500
      %v2013 = vunpack.c.l.b16 %v1501
      %v2014 = vunpack.c.l.b16 %v1502
      %v2015 = vunpack.c.l.b16 %v1503
      %v2016 = vunpack.c.l.b16 %v1504
      %v2017 = vunpack.c.l.b16 %v1505
      %v2018 = vunpack.c.l.b16 %v1506
      %v2019 = vunpack.c.l.b16 %v1507
      %v2020 = vunpack.c.l.b16 %v1508
      %v2021 = vunpack.c.l.b16 %v1509
      %v2022 = vunpack.c.l.b16 %v1510
      %v2023 = vunpack.c.l.b16 %v1511
      %v2024 = vunpack.c.l.b16 %v1512
      %v2025 = vunpack.c.l.b16 %v1513
      %v2026 = vunpack.c.l.b16 %v1514
      %v2027 = vunpack.c.l.b16 %v1515
      %v2028 = vunpack.c.l.b16 %v1516
      %v2029 = vunpack.c.l.b16 %v1517
      %v2030 = vunpack.c.l.b16 %v1518
      %v2031 = vunpack.c.l.b16 %v1519
      %v2032 = vunpack.c.l.b16 %v1520
      %v2033 = vunpack.c.l.b16 %v1521
      %v2034 = vunpack.c.l.b16 %v1522
      %v2035 = vunpack.c.l.b16 %v1523
      %v2036 = vunpack.c.l.b16 %v1524
      %v2037 = vunpack.c.l.b16 %v1525
      %v2038 = vunpack.c.l.b16 %v1526
      %v2039 = vunpack.c.l.b16 %v1527
      %v2040 = vunpack.c.l.b16 %v1528
      %v2041 = vunpack.c.l.b16 %v1529
      %v2042 = vunpack.c.l.b16 %v1530
      %v2043 = vunpack.c.l.b16 %v1531
      %v2044 = vunpack.c.l.b16 %v1532
      %v2045 = vunpack.c.l.b16 %v1533
      %v2046 = vunpack.c.l.b16 %v1534
      %v2047 = vunpack.c.l.b16 %v1535
      %v2048 = vunpack.c.l.b16 %v1536
      %v2049 = vunpack.c.l.b16 %v1537
      %v2050 = vunpack.c.l.b16 %v1538
      %v2051 = vunpack.c.l.b16 %v1539
      %v2052 = vunpack.c.l.b16 %v1540
      %v2053 = vunpack.c.l.b16 %v1541
      %v2054 = vunpack.c.l.b16 %v1542
      %v2055 = vunpack.c.l.b16 %v1543
      %v2056 = vunpack.c.l.b16 %v1544
      %v2057 = vunpack.c.l.b16 %v1545
      %v2058 = vunpack.c.l.b16 %v1546
      %v2059 = vunpack.c.l.b16 %v1547
      %v2060 = vunpack.c.l.b16 %v1548
      %v2061 = vunpack.c.l.b16 %v1549
      %v2062 = vunpack.c.l.b16 %v1550
      %v2063 = vunpack.c.l.b16 %v1551
      %v2064 = vunpack.c.l.b16 %v1552
      %v2065 = vunpack.c.l.b16 %v1553
      %v2066 = vunpack.c.l.b16 %v1554
      %v2067 = vunpack.c.l.b16 %v1555
      %v2068 = vunpack.c.l.b16 %v1556
      %v2069 = vunpack.c.l.b16 %v1557
      %v2070 = vunpack.c.l.b16 %v1558
      %v2071 = vunpack.c.l.b16 %v1559
      %v2072 = vunpack.c.l.b16 %v1560
      %v2073 = vunpack.c.l.b16 %v1561
      %v2074 = vunpack.c.l.b16 %v1562
      %v2075 = vunpack.c.l.b16 %v1563
      %v2076 = vunpack.c.l.b16 %v1564
      %v2077 = vunpack.c.l.b16 %v1565
      %v2078 = vunpack.c.l.b16 %v1566
      %v2079 = vunpack.c.l.b16 %v1567
      %v2080 = vunpack.c.l.b16 %v1568
      %v2081 = vunpack.c.l.b16 %v1569
      %v2082 = vunpack.c.l.b16 %v1570
      %v2083 = vunpack.c.l.b16 %v1571
      %v2084 = vunpack.c.l.b16 %v1572
      %v2085 = vunpack.c.l.b16 %v1573
      %v2086 = vunpack.c.l.b16 %v1574
      %v2087 = vunpack.c.l.b16 %v1575
      %v2088 = vunpack.c.l.b16 %v1576
      %v2089 = vunpack.c.l.b16 %v1577
      %v2090 = vunpack.c.l.b16 %v1578
      %v2091 = vunpack.c.l.b16 %v1579
      %v2092 = vunpack.c.l.b16 %v1580
      %v2093 = vunpack.c.l.b16 %v1581
      %v2094 = vunpack.c.l.b16 %v1582
      %v2095 = vunpack.c.l.b16 %v1583
      %v2096 = vunpack.c.l.b16 %v1584
      %v2097 = vunpack.c.l.b16 %v1585
      %v2098 = vunpack.c.l.b16 %v1586
      %v2099 = vunpack.c.l.b16 %v1587
      %v2100 = vunpack.c.l.b16 %v1588
      %v2101 = vunpack.c.l.b16 %v1589
      %v2102 = vunpack.c.l.b16 %v1590
      %v2103 = vunpack.c.l.b16 %v1591
      %v2104 = vunpack.c.l.b16 %v1592
      %v2105 = vunpack.c.l.b16 %v1593
      %v2106 = vunpack.c.l.b16 %v1594
      %v2107 = vunpack.c.l.b16 %v1595
      %v2108 = vunpack.c.l.b16 %v1596
      %v2109 = vunpack.c.l.b16 %v1597
      %v2110 = vunpack.c.l.b16 %v1598
      %v2111 = vunpack.c.l.b16 %v1599
      %v2112 = vunpack.c.l.b16 %v1600
      %v2113 = vunpack.c.l.b16 %v1601
      %v2114 = vunpack.c.l.b16 %v1602
      %v2115 = vunpack.c.l.b16 %v1603
      %v2116 = vunpack.c.l.b16 %v1604
      %v2117 = vunpack.c.l.b16 %v1605
      %v2118 = vunpack.c.l.b16 %v1606
      %v2119 = vunpack.c.l.b16 %v1607
      %v2120 = vunpack.c.l.b16 %v1608
      %v2121 = vunpack.c.l.b16 %v1609
      %v2122 = vunpack.c.l.b16 %v1610
      %v2123 = vunpack.c.l.b16 %v1611
      %v2124 = vunpack.c.l.b16 %v1612
      %v2125 = vunpack.c.l.b16 %v1613
      %v2126 = vunpack.c.l.b16 %v1614
      %v2127 = vunpack.c.l.b16 %v1615
      %v2128 = vunpack.c.l.b16 %v1616
      %v2129 = vunpack.c.l.b16 %v1617
      %v2130 = vunpack.c.l.b16 %v1618
      %v2131 = vunpack.c.l.b16 %v1619
      %v2132 = vunpack.c.l.b16 %v1620
      %v2133 = vunpack.c.l.b16 %v1621
      %v2134 = vunpack.c.l.b16 %v1622
      %v2135 = vunpack.c.l.b16 %v1623
      %v2136 = vunpack.c.l.b16 %v1624
      %v2137 = vunpack.c.l.b16 %v1625
      %v2138 = vunpack.c.l.b16 %v1626
      %v2139 = vunpack.c.l.b16 %v1627
      %v2140 = vunpack.c.l.b16 %v1628
      %v2141 = vunpack.c.l.b16 %v1629
      %v2142 = vunpack.c.l.b16 %v1630
      %v2143 = vunpack.c.l.b16 %v1631
      %v2144 = vunpack.c.l.b16 %v1632
      %v2145 = vunpack.c.l.b16 %v1633
      %v2146 = vunpack.c.l.b16 %v1634
      %v2147 = vunpack.c.l.b16 %v1635
      %v2148 = vunpack.c.l.b16 %v1636
      %v2149 = vunpack.c.l.b16 %v1637
      %v2150 = vunpack.c.l.b16 %v1638
      %v2151 = vunpack.c.l.b16 %v1639
      %v2152 = vunpack.c.l.b16 %v1640
      %v2153 = vunpack.c.l.b16 %v1641
      %v2154 = vunpack.c.l.b16 %v1642
      %v2155 = vunpack.c.l.b16 %v1643
      %v2156 = vunpack.c.l.b16 %v1644
      %v2157 = vunpack.c.l.b16 %v1645
      %v2158 = vunpack.c.l.b16 %v1646
      %v2159 = vunpack.c.l.b16 %v1647
      %v2160 = vunpack.c.l.b16 %v1648
      %v2161 = vunpack.c.l.b16 %v1649
      %v2162 = vunpack.c.l.b16 %v1650
      %v2163 = vunpack.c.l.b16 %v1651
      %v2164 = vunpack.c.l.b16 %v1652
      %v2165 = vunpack.c.l.b16 %v1653
      %v2166 = vunpack.c.l.b16 %v1654
      %v2167 = vunpack.c.l.b16 %v1655
      %v2168 = vunpack.c.l.b16 %v1656
      %v2169 = vunpack.c.l.b16 %v1657
      %v2170 = vunpack.c.l.b16 %v1658
      %v2171 = vunpack.c.l.b16 %v1659
      %v2172 = vunpack.c.l.b16 %v1660
      %v2173 = vunpack.c.l.b16 %v1661
      %v2174 = vunpack.c.l.b16 %v1662
      %v2175 = vunpack.c.l.b16 %v1663
      %v2176 = vunpack.c.l.b16 %v1664
      %v2177 = vunpack.c.l.b16 %v1665
      %v2178 = vunpack.c.l.b16 %v1666
      %v2179 = vunpack.c.l.b16 %v1667
      %v2180 = vunpack.c.l.b16 %v1668
      %v2181 = vunpack.c.l.b16 %v1669
      %v2182 = vunpack.c.l.b16 %v1670
      %v2183 = vunpack.c.l.b16 %v1671
      %v2184 = vunpack.c.l.b16 %v1672
      %v2185 = vunpack.c.l.b16 %v1673
      %v2186 = vunpack.c.l.b16 %v1674
      %v2187 = vunpack.c.l.b16 %v1675
      %v2188 = vunpack.c.l.b16 %v1676
      %v2189 = vunpack.c.l.b16 %v1677
      %v2190 = vunpack.c.l.b16 %v1678
      %v2191 = vunpack.c.l.b16 %v1679
      %v2192 = vunpack.c.l.b16 %v1680
      %v2193 = vunpack.c.l.b16 %v1681
      %v2194 = vunpack.c.l.b16 %v1682
      %v2195 = vunpack.c.l.b16 %v1683
      %v2196 = vunpack.c.l.b16 %v1684
      %v2197 = vunpack.c.l.b16 %v1685
      %v2198 = vunpack.c.l.b16 %v1686
      %v2199 = vunpack.c.l.b16 %v1687
      %v2200 = vunpack.c.l.b16 %v1688
      %v2201 = vunpack.c.l.b16 %v1689
      %v2202 = vunpack.c.l.b16 %v1690
      %v2203 = vunpack.c.l.b16 %v1691
      %v2204 = vunpack.c.l.b16 %v1692
      %v2205 = vunpack.c.l.b16 %v1693
      %v2206 = vunpack.c.l.b16 %v1694
      %v2207 = vunpack.c.l.b16 %v1695
      %v2208 = vunpack.c.l.b16 %v1696
      %v2209 = vunpack.c.l.b16 %v1697
      %v2210 = vunpack.c.l.b16 %v1698
      %v2211 = vunpack.c.l.b16 %v1699
      %v2212 = vunpack.c.l.b16 %v1700
      %v2213 = vunpack.c.l.b16 %v1701
      %v2214 = vunpack.c.l.b16 %v1702
      %v2215 = vunpack.c.l.b16 %v1703
      %v2216 = vunpack.c.l.b16 %v1704
      %v2217 = vunpack.c.l.b16 %v1705
      %v2218 = vunpack.c.l.b16 %v1706
      %v2219 = vunpack.c.l.b16 %v1707
      %v2220 = vunpack.c.l.b16 %v1708
      %v2221 = vunpack.c.l.b16 %v1709
      %v2222 = vunpack.c.l.b16 %v1710
      %v2223 = vunpack.c.l.b16 %v1711
      %v2224 = vunpack.c.l.b16 %v1712
      %v2225 = vunpack.c.l.b16 %v1713
      %v2226 = vunpack.c.l.b16 %v1714
      %v2227 = vunpack.c.l.b16 %v1715
      %v2228 = vunpack.c.l.b16 %v1716
      %v2229 = vunpack.c.l.b16 %v1717
      %v2230 = vunpack.c.l.b16 %v1718
      %v2231 = vunpack.c.l.b16 %v1719
      %v2232 = vunpack.c.l.b16 %v1720
      %v2233 = vunpack.c.l.b16 %v1721
      %v2234 = vunpack.c.l.b16 %v1722
      %v2235 = vunpack.c.l.b16 %v1723
      %v2236 = vunpack.c.l.b16 %v1724
      %v2237 = vunpack.c.l.b16 %v1725
      %v2238 = vunpack.c.l.b16 %v1726
      %v2239 = vunpack.c.l.b16 %v1727
      %v2240 = vunpack.c.l.b16 %v1728
      %v2241 = vunpack.c.l.b16 %v1729
      %v2242 = vunpack.c.l.b16 %v1730
      %v2243 = vunpack.c.l.b16 %v1731
      %v2244 = vunpack.c.l.b16 %v1732
      %v2245 = vunpack.c.l.b16 %v1733
      %v2246 = vunpack.c.l.b16 %v1734
      %v2247 = vunpack.c.l.b16 %v1735
      %v2248 = vunpack.c.l.b16 %v1736
      %v2249 = vunpack.c.l.b16 %v1737
      %v2250 = vunpack.c.l.b16 %v1738
      %v2251 = vunpack.c.l.b16 %v1739
      %v2252 = vunpack.c.l.b16 %v1740
      %v2253 = vunpack.c.l.b16 %v1741
      %v2254 = vpack.c.b16 %v1999, %v1998
      %v2255 = vpack.c.b16 %v2001, %v2000
      %v2256 = vpack.c.b16 %v2003, %v2002
      %v2257 = vpack.c.b16 %v2005, %v2004
      %v2258 = vpack.c.b16 %v2007, %v2006
      %v2259 = vpack.c.b16 %v2009, %v2008
      %v2260 = vpack.c.b16 %v2011, %v2010
      %v2261 = vpack.c.b16 %v2013, %v2012
      %v2262 = vpack.c.b16 %v2015, %v2014
      %v2263 = vpack.c.b16 %v2017, %v2016
      %v2264 = vpack.c.b16 %v2019, %v2018
      %v2265 = vpack.c.b16 %v2021, %v2020
      %v2266 = vpack.c.b16 %v2023, %v2022
      %v2267 = vpack.c.b16 %v2025, %v2024
      %v2268 = vpack.c.b16 %v2027, %v2026
      %v2269 = vpack.c.b16 %v2029, %v2028
      %v2270 = vpack.c.b16 %v2031, %v2030
      %v2271 = vpack.c.b16 %v2033, %v2032
      %v2272 = vpack.c.b16 %v2035, %v2034
      %v2273 = vpack.c.b16 %v2037, %v2036
      %v2274 = vpack.c.b16 %v2039, %v2038
      %v2275 = vpack.c.b16 %v2041, %v2040
      %v2276 = vpack.c.b16 %v2043, %v2042
      %v2277 = vpack.c.b16 %v2045, %v2044
      %v2278 = vpack.c.b16 %v2047, %v2046
      %v2279 = vpack.c.b16 %v2049, %v2048
      %v2280 = vpack.c.b16 %v2051, %v2050
      %v2281 = vpack.c.b16 %v2053, %v2052
      %v2282 = vpack.c.b16 %v2055, %v2054
      %v2283 = vpack.c.b16 %v2057, %v2056
      %v2284 = vpack.c.b16 %v2059, %v2058
      %v2285 = vpack.c.b16 %v2061, %v2060
      %v2286 = vpack.c.b16 %v2063, %v2062
      %v2287 = vpack.c.b16 %v2065, %v2064
      %v2288 = vpack.c.b16 %v2067, %v2066
      %v2289 = vpack.c.b16 %v2069, %v2068
      %v2290 = vpack.c.b16 %v2071, %v2070
      %v2291 = vpack.c.b16 %v2073, %v2072
      %v2292 = vpack.c.b16 %v2075, %v2074
      %v2293 = vpack.c.b16 %v2077, %v2076
      %v2294 = vpack.c.b16 %v2079, %v2078
      %v2295 = vpack.c.b16 %v2081, %v2080
      %v2296 = vpack.c.b16 %v2083, %v2082
      %v2297 = vpack.c.b16 %v2085, %v2084
      %v2298 = vpack.c.b16 %v2087, %v2086
      %v2299 = vpack.c.b16 %v2089, %v2088
      %v2300 = vpack.c.b16 %v2091, %v2090
      %v2301 = vpack.c.b16 %v2093, %v2092
      %v2302 = vpack.c.b16 %v2095, %v2094
      %v2303 = vpack.c.b16 %v2097, %v2096
      %v2304 = vpack.c.b16 %v2099, %v2098
      %v2305 = vpack.c.b16 %v2101, %v2100
      %v2306 = vpack.c.b16 %v2103, %v2102
      %v2307 = vpack.c.b16 %v2105, %v2104
      %v2308 = vpack.c.b16 %v2107, %v2106
      %v2309 = vpack.c.b16 %v2109, %v2108
      %v2310 = vpack.c.b16 %v2111, %v2110
      %v2311 = vpack.c.b16 %v2113, %v2112
      %v2312 = vpack.c.b16 %v2115, %v2114
      %v2313 = vpack.c.b16 %v2117, %v2116
      %v2314 = vpack.c.b16 %v2119, %v2118
      %v2315 = vpack.c.b16 %v2121, %v2120
      %v2316 = vpack.c.b16 %v2123, %v2122
      %v2317 = vpack.c.b16 %v2125, %v2124
      %v2318 = vpack.c.b16 %v2127, %v2126
      %v2319 = vpack.c.b16 %v2129, %v2128
      %v2320 = vpack.c.b16 %v2131, %v2130
      %v2321 = vpack.c.b16 %v2133, %v2132
      %v2322 = vpack.c.b16 %v2135, %v2134
      %v2323 = vpack.c.b16 %v2137, %v2136
      %v2324 = vpack.c.b16 %v2139, %v2138
      %v2325 = vpack.c.b16 %v2141, %v2140
      %v2326 = vpack.c.b16 %v2143, %v2142
      %v2327 = vpack.c.b16 %v2145, %v2144
      %v2328 = vpack.c.b16 %v2147, %v2146
      %v2329 = vpack.c.b16 %v2149, %v2148
      %v2330 = vpack.c.b16 %v2151, %v2150
      %v2331 = vpack.c.b16 %v2153, %v2152
      %v2332 = vpack.c.b16 %v2155, %v2154
      %v2333 = vpack.c.b16 %v2157, %v2156
      %v2334 = vpack.c.b16 %v2159, %v2158
      %v2335 = vpack.c.b16 %v2161, %v2160
      %v2336 = vpack.c.b16 %v2163, %v2162
      %v2337 = vpack.c.b16 %v2165, %v2164
      %v2338 = vpack.c.b16 %v2167, %v2166
      %v2339 = vpack.c.b16 %v2169, %v2168
      %v2340 = vpack.c.b16 %v2171, %v2170
      %v2341 = vpack.c.b16 %v2173, %v2172
      %v2342 = vpack.c.b16 %v2175, %v2174
      %v2343 = vpack.c.b16 %v2177, %v2176
      %v2344 = vpack.c.b16 %v2179, %v2178
      %v2345 = vpack.c.b16 %v2181, %v2180
      %v2346 = vpack.c.b16 %v2183, %v2182
      %v2347 = vpack.c.b16 %v2185, %v2184
      %v2348 = vpack.c.b16 %v2187, %v2186
      %v2349 = vpack.c.b16 %v2189, %v2188
      %v2350 = vpack.c.b16 %v2191, %v2190
      %v2351 = vpack.c.b16 %v2193, %v2192
      %v2352 = vpack.c.b16 %v2195, %v2194
      %v2353 = vpack.c.b16 %v2197, %v2196
      %v2354 = vpack.c.b16 %v2199, %v2198
      %v2355 = vpack.c.b16 %v2201, %v2200
      %v2356 = vpack.c.b16 %v2203, %v2202
      %v2357 = vpack.c.b16 %v2205, %v2204
      %v2358 = vpack.c.b16 %v2207, %v2206
      %v2359 = vpack.c.b16 %v2209, %v2208
      %v2360 = vpack.c.b16 %v2211, %v2210
      %v2361 = vpack.c.b16 %v2213, %v2212
      %v2362 = vpack.c.b16 %v2215, %v2214
      %v2363 = vpack.c.b16 %v2217, %v2216
      %v2364 = vpack.c.b16 %v2219, %v2218
      %v2365 = vpack.c.b16 %v2221, %v2220
      %v2366 = vpack.c.b16 %v2223, %v2222
      %v2367 = vpack.c.b16 %v2225, %v2224
      %v2368 = vpack.c.b16 %v2227, %v2226
      %v2369 = vpack.c.b16 %v2229, %v2228
      %v2370 = vpack.c.b16 %v2231, %v2230
      %v2371 = vpack.c.b16 %v2233, %v2232
      %v2372 = vpack.c.b16 %v2235, %v2234
      %v2373 = vpack.c.b16 %v2237, %v2236
      %v2374 = vpack.c.b16 %v2239, %v2238
      %v2375 = vpack.c.b16 %v2241, %v2240
      %v2376 = vpack.c.b16 %v2243, %v2242
      %v2377 = vpack.c.b16 %v2245, %v2244
      %v2378 = vpack.c.b16 %v2247, %v2246
      %v2379 = vpack.c.b16 %v2249, %v2248
      %v2380 = vpack.c.b16 %v2251, %v2250
      %v2381 = vpack.c.b16 %v2253, %v2252
      %2510 = vmatprep.subr.bf16.mxu0 0
      %2511 = vmatpush1.bf16.msra.mxu0 %v2254
      %2512 = vmatprep.subr.bf16.mxu0 0
      %2513 = vmatpush1.bf16.msra.mxu0 %v2255
      %2514 = vmatprep.subr.bf16.mxu0 0
      %2515 = vmatpush1.bf16.msra.mxu0 %v2256
      %2516 = vmatprep.subr.bf16.mxu0 0
      %2517 = vmatpush1.bf16.msra.mxu0 %v2257
      %2518 = vmatprep.subr.bf16.mxu0 0
      %2519 = vmatpush1.bf16.msra.mxu0 %v2258
      %2520 = vmatprep.subr.bf16.mxu0 0
      %2521 = vmatpush1.bf16.msra.mxu0 %v2259
      %2522 = vmatprep.subr.bf16.mxu0 0
      %2523 = vmatpush1.bf16.msra.mxu0 %v2260
      %2524 = vmatprep.subr.bf16.mxu0 0
      %2525 = vmatpush1.bf16.msra.mxu0 %v2261
      %2526 = vmatprep.subr.bf16.mxu0 0
      %2527 = vmatpush1.bf16.msra.mxu0 %v2262
      %2528 = vmatprep.subr.bf16.mxu0 0
      %2529 = vmatpush1.bf16.msra.mxu0 %v2263
      %2530 = vmatprep.subr.bf16.mxu0 0
      %2531 = vmatpush1.bf16.msra.mxu0 %v2264
      %2532 = vmatprep.subr.bf16.mxu0 0
      %2533 = vmatpush1.bf16.msra.mxu0 %v2265
      %2534 = vmatprep.subr.bf16.mxu0 0
      %2535 = vmatpush1.bf16.msra.mxu0 %v2266
      %2536 = vmatprep.subr.bf16.mxu0 0
      %2537 = vmatpush1.bf16.msra.mxu0 %v2267
      %2538 = vmatprep.subr.bf16.mxu0 0
      %2539 = vmatpush1.bf16.msra.mxu0 %v2268
      %2540 = vmatprep.subr.bf16.mxu0 0
      %2541 = vmatpush1.bf16.msra.mxu0 %v2269
      %2542 = vmatprep.mubr.bf16.mxu0 %v1359
      %2543 = vmatmul.mubr.bf16.gmra.mrb[0].mxu0 %v1358
      %v2544 = vpop.f32.mrb[0].mxu0
      %v2545 = vadd.f32 0.0, %v2544
      %v2546 = vpop.f32.mrb[0].mxu0
      %v2547 = vpop.f32.mrb[0].mxu0
      %v2548 = vadd.f32 0.0, %v2547
      %v2549 = vpop.f32.mrb[0].mxu0
      %2550 = vmatprep.mubr.bf16.mxu0 %v1375
      %2551 = vmatmul.mubr.bf16.gmra.mrb[0].mxu0 %v1374
      %v2552 = vpop.f32.mrb[0].mxu0
      %v2553 = vadd.f32 0.0, %v2552
      %v2554 = vpop.f32.mrb[0].mxu0
      %v2555 = vpop.f32.mrb[0].mxu0
      %v2556 = vadd.f32 0.0, %v2555
      %v2557 = vpop.f32.mrb[0].mxu0
      %2558 = vmatprep.mubr.bf16.mxu0 %v1391
      %2559 = vmatmul.mubr.bf16.gmra.mrb[0].mxu0 %v1390
      %v2560 = vpop.f32.mrb[0].mxu0
      %v2561 = vadd.f32 0.0, %v2560
      %v2562 = vpop.f32.mrb[0].mxu0
      %v2563 = vpop.f32.mrb[0].mxu0
      %v2564 = vadd.f32 0.0, %v2563
      %v2565 = vpop.f32.mrb[0].mxu0
      %2566 = vmatprep.mubr.bf16.mxu0 %v1407
      %2567 = vmatmul.mubr.bf16.gmra.mrb[0].mxu0 %v1406
      %v2568 = vpop.f32.mrb[0].mxu0
      %v2569 = vadd.f32 0.0, %v2568
      %v2570 = vpop.f32.mrb[0].mxu0
      %v2571 = vpop.f32.mrb[0].mxu0
      %v2572 = vadd.f32 0.0, %v2571
      %v2573 = vpop.f32.mrb[0].mxu0
      %2574 = vmatprep.mubr.bf16.mxu0 %v1423
      %2575 = vmatmul.mubr.bf16.gmra.mrb[0].mxu0 %v1422
      %v2576 = vpop.f32.mrb[0].mxu0
      %v2577 = vadd.f32 0.0, %v2576
      %v2578 = vpop.f32.mrb[0].mxu0
      %v2579 = vpop.f32.mrb[0].mxu0
      %v2580 = vadd.f32 0.0, %v2579
      %v2581 = vpop.f32.mrb[0].mxu0
      %2582 = vmatprep.mubr.bf16.mxu0 %v1439
      %2583 = vmatmul.mubr.bf16.gmra.mrb[0].mxu0 %v1438
      %v2584 = vpop.f32.mrb[0].mxu0
      %v2585 = vadd.f32 0.0, %v2584
      %v2586 = vpop.f32.mrb[0].mxu0
      %v2587 = vpop.f32.mrb[0].mxu0
      %v2588 = vadd.f32 0.0, %v2587
      %v2589 = vpop.f32.mrb[0].mxu0
      %2590 = vmatprep.mubr.bf16.mxu0 %v1455
      %2591 = vmatmul.mubr.bf16.gmra.mrb[0].mxu0 %v1454
      %v2592 = vpop.f32.mrb[0].mxu0
      %v2593 = vadd.f32 0.0, %v2592
      %v2594 = vpop.f32.mrb[0].mxu0
      %v2595 = vpop.f32.mrb[0].mxu0
      %v2596 = vadd.f32 0.0, %v2595
      %v2597 = vpop.f32.mrb[0].mxu0
      %2598 = vmatprep.mubr.bf16.mxu0 %v1471
      %2599 = vmatmul.mubr.bf16.gmra.mrb[0].mxu0 %v1470
      %v2600 = vpop.f32.mrb[0].mxu0
      %v2601 = vadd.f32 0.0, %v2600
      %v2602 = vpop.f32.mrb[0].mxu0
      %v2603 = vpop.f32.mrb[0].mxu0
      %v2604 = vadd.f32 0.0, %v2603
      %v2605 = vpop.f32.mrb[0].mxu0
      %2606 = vdwg.mxu0
      %2607 = vmatprep.subr.bf16.mxu0 0
      %2608 = vmatpush1.bf16.msra.mxu0 %v2270
      %2609 = vmatprep.subr.bf16.mxu0 0
      %2610 = vmatpush1.bf16.msra.mxu0 %v2271
      %2611 = vmatprep.subr.bf16.mxu0 0
      %2612 = vmatpush1.bf16.msra.mxu0 %v2272
      %2613 = vmatprep.subr.bf16.mxu0 0
      %2614 = vmatpush1.bf16.msra.mxu0 %v2273
      %2615 = vmatprep.subr.bf16.mxu0 0
      %2616 = vmatpush1.bf16.msra.mxu0 %v2274
      %2617 = vmatprep.subr.bf16.mxu0 0
      %2618 = vmatpush1.bf16.msra.mxu0 %v2275
      %2619 = vmatprep.subr.bf16.mxu0 0
      %2620 = vmatpush1.bf16.msra.mxu0 %v2276
      %2621 = vmatprep.subr.bf16.mxu0 0
      %2622 = vmatpush1.bf16.msra.mxu0 %v2277
      %2623 = vmatprep.subr.bf16.mxu0 0
      %2624 = vmatpush1.bf16.msra.mxu0 %v2278
      %2625 = vmatprep.subr.bf16.mxu0 0
      %2626 = vmatpush1.bf16.msra.mxu0 %v2279
      %2627 = vmatprep.subr.bf16.mxu0 0
      %2628 = vmatpush1.bf16.msra.mxu0 %v2280
      %2629 = vmatprep.subr.bf16.mxu0 0
      %2630 = vmatpush1.bf16.msra.mxu0 %v2281
      %2631 = vmatprep.subr.bf16.mxu0 0
      %2632 = vmatpush1.bf16.msra.mxu0 %v2282
      %2633 = vmatprep.subr.bf16.mxu0 0
      %2634 = vmatpush1.bf16.msra.mxu0 %v2283
      %2635 = vmatprep.subr.bf16.mxu0 0
      %2636 = vmatpush1.bf16.msra.mxu0 %v2284
      %2637 = vmatprep.subr.bf16.mxu0 0
      %2638 = vmatpush1.bf16.msra.mxu0 %v2285
      %2639 = vmatprep.mubr.bf16.mxu0 %v1361
      %2640 = vmatmul.mubr.bf16.gmra.mrb[0].mxu0 %v1360
      %v2641 = vpop.f32.mrb[0].mxu0
      %v2642 = vadd.f32 %v2545, %v2641
      %v2643 = vpop.f32.mrb[0].mxu0
      %v2644 = vpop.f32.mrb[0].mxu0
      %v2645 = vadd.f32 %v2548, %v2644
      %v2646 = vpop.f32.mrb[0].mxu0
      %2647 = vmatprep.mubr.bf16.mxu0 %v1377
      %2648 = vmatmul.mubr.bf16.gmra.mrb[0].mxu0 %v1376
      %v2649 = vpop.f32.mrb[0].mxu0
      %v2650 = vadd.f32 %v2553, %v2649
      %v2651 = vpop.f32.mrb[0].mxu0
      %v2652 = vpop.f32.mrb[0].mxu0
      %v2653 = vadd.f32 %v2556, %v2652
      %v2654 = vpop.f32.mrb[0].mxu0
      %2655 = vmatprep.mubr.bf16.mxu0 %v1393
      %2656 = vmatmul.mubr.bf16.gmra.mrb[0].mxu0 %v1392
      %v2657 = vpop.f32.mrb[0].mxu0
      %v2658 = vadd.f32 %v2561, %v2657
      %v2659 = vpop.f32.mrb[0].mxu0
      %v2660 = vpop.f32.mrb[0].mxu0
      %v2661 = vadd.f32 %v2564, %v2660
      %v2662 = vpop.f32.mrb[0].mxu0
      %2663 = vmatprep.mubr.bf16.mxu0 %v1409
      %2664 = vmatmul.mubr.bf16.gmra.mrb[0].mxu0 %v1408
      %v2665 = vpop.f32.mrb[0].mxu0
      %v2666 = vadd.f32 %v2569, %v2665
      %v2667 = vpop.f32.mrb[0].mxu0
      %v2668 = vpop.f32.mrb[0].mxu0
      %v2669 = vadd.f32 %v2572, %v2668
      %v2670 = vpop.f32.mrb[0].mxu0
      %2671 = vmatprep.mubr.bf16.mxu0 %v1425
      %2672 = vmatmul.mubr.bf16.gmra.mrb[0].mxu0 %v1424
      %v2673 = vpop.f32.mrb[0].mxu0
      %v2674 = vadd.f32 %v2577, %v2673
      %v2675 = vpop.f32.mrb[0].mxu0
      %v2676 = vpop.f32.mrb[0].mxu0
      %v2677 = vadd.f32 %v2580, %v2676
      %v2678 = vpop.f32.mrb[0].mxu0
      %2679 = vmatprep.mubr.bf16.mxu0 %v1441
      %2680 = vmatmul.mubr.bf16.gmra.mrb[0].mxu0 %v1440
      %v2681 = vpop.f32.mrb[0].mxu0
      %v2682 = vadd.f32 %v2585, %v2681
      %v2683 = vpop.f32.mrb[0].mxu0
      %v2684 = vpop.f32.mrb[0].mxu0
      %v2685 = vadd.f32 %v2588, %v2684
      %v2686 = vpop.f32.mrb[0].mxu0
      %2687 = vmatprep.mubr.bf16.mxu0 %v1457
      %2688 = vmatmul.mubr.bf16.gmra.mrb[0].mxu0 %v1456
      %v2689 = vpop.f32.mrb[0].mxu0
      %v2690 = vadd.f32 %v2593, %v2689
      %v2691 = vpop.f32.mrb[0].mxu0
      %v2692 = vpop.f32.mrb[0].mxu0
      %v2693 = vadd.f32 %v2596, %v2692
      %v2694 = vpop.f32.mrb[0].mxu0
      %2695 = vmatprep.mubr.bf16.mxu0 %v1473
      %2696 = vmatmul.mubr.bf16.gmra.mrb[0].mxu0 %v1472
      %v2697 = vpop.f32.mrb[0].mxu0
      %v2698 = vadd.f32 %v2601, %v2697
      %v2699 = vpop.f32.mrb[0].mxu0
      %v2700 = vpop.f32.mrb[0].mxu0
      %v2701 = vadd.f32 %v2604, %v2700
      %v2702 = vpop.f32.mrb[0].mxu0
      %2703 = vdwg.mxu0
      %2704 = vmatprep.subr.bf16.mxu0 0
      %2705 = vmatpush1.bf16.msra.mxu0 %v2286
      %2706 = vmatprep.subr.bf16.mxu0 0
      %2707 = vmatpush1.bf16.msra.mxu0 %v2287
      %2708 = vmatprep.subr.bf16.mxu0 0
      %2709 = vmatpush1.bf16.msra.mxu0 %v2288
      %2710 = vmatprep.subr.bf16.mxu0 0
      %2711 = vmatpush1.bf16.msra.mxu0 %v2289
      %2712 = vmatprep.subr.bf16.mxu0 0
      %2713 = vmatpush1.bf16.msra.mxu0 %v2290
      %2714 = vmatprep.subr.bf16.mxu0 0
      %2715 = vmatpush1.bf16.msra.mxu0 %v2291
      %2716 = vmatprep.subr.bf16.mxu0 0
      %2717 = vmatpush1.bf16.msra.mxu0 %v2292
      %2718 = vmatprep.subr.bf16.mxu0 0
      %2719 = vmatpush1.bf16.msra.mxu0 %v2293
      %2720 = vmatprep.subr.bf16.mxu0 0
      %2721 = vmatpush1.bf16.msra.mxu0 %v2294
      %2722 = vmatprep.subr.bf16.mxu0 0
      %2723 = vmatpush1.bf16.msra.mxu0 %v2295
      %2724 = vmatprep.subr.bf16.mxu0 0
      %2725 = vmatpush1.bf16.msra.mxu0 %v2296
      %2726 = vmatprep.subr.bf16.mxu0 0
      %2727 = vmatpush1.bf16.msra.mxu0 %v2297
      %2728 = vmatprep.subr.bf16.mxu0 0
      %2729 = vmatpush1.bf16.msra.mxu0 %v2298
      %2730 = vmatprep.subr.bf16.mxu0 0
      %2731 = vmatpush1.bf16.msra.mxu0 %v2299
      %2732 = vmatprep.subr.bf16.mxu0 0
      %2733 = vmatpush1.bf16.msra.mxu0 %v2300
      %2734 = vmatprep.subr.bf16.mxu0 0
      %2735 = vmatpush1.bf16.msra.mxu0 %v2301
      %2736 = vmatprep.mubr.bf16.mxu0 %v1363
      %2737 = vmatmul.mubr.bf16.gmra.mrb[0].mxu0 %v1362
      %v2738 = vpop.f32.mrb[0].mxu0
      %v2739 = vadd.f32 %v2642, %v2738
      %v2740 = vpop.f32.mrb[0].mxu0
      %v2741 = vpop.f32.mrb[0].mxu0
      %v2742 = vadd.f32 %v2645, %v2741
      %v2743 = vpop.f32.mrb[0].mxu0
      %2744 = vmatprep.mubr.bf16.mxu0 %v1379
      %2745 = vmatmul.mubr.bf16.gmra.mrb[0].mxu0 %v1378
      %v2746 = vpop.f32.mrb[0].mxu0
      %v2747 = vadd.f32 %v2650, %v2746
      %v2748 = vpop.f32.mrb[0].mxu0
      %v2749 = vpop.f32.mrb[0].mxu0
      %v2750 = vadd.f32 %v2653, %v2749
      %v2751 = vpop.f32.mrb[0].mxu0
      %2752 = vmatprep.mubr.bf16.mxu0 %v1395
      %2753 = vmatmul.mubr.bf16.gmra.mrb[0].mxu0 %v1394
      %v2754 = vpop.f32.mrb[0].mxu0
      %v2755 = vadd.f32 %v2658, %v2754
      %v2756 = vpop.f32.mrb[0].mxu0
      %v2757 = vpop.f32.mrb[0].mxu0
      %v2758 = vadd.f32 %v2661, %v2757
      %v2759 = vpop.f32.mrb[0].mxu0
      %2760 = vmatprep.mubr.bf16.mxu0 %v1411
      %2761 = vmatmul.mubr.bf16.gmra.mrb[0].mxu0 %v1410
      %v2762 = vpop.f32.mrb[0].mxu0
      %v2763 = vadd.f32 %v2666, %v2762
      %v2764 = vpop.f32.mrb[0].mxu0
      %v2765 = vpop.f32.mrb[0].mxu0
      %v2766 = vadd.f32 %v2669, %v2765
      %v2767 = vpop.f32.mrb[0].mxu0
      %2768 = vmatprep.mubr.bf16.mxu0 %v1427
      %2769 = vmatmul.mubr.bf16.gmra.mrb[0].mxu0 %v1426
      %v2770 = vpop.f32.mrb[0].mxu0
      %v2771 = vadd.f32 %v2674, %v2770
      %v2772 = vpop.f32.mrb[0].mxu0
      %v2773 = vpop.f32.mrb[0].mxu0
      %v2774 = vadd.f32 %v2677, %v2773
      %v2775 = vpop.f32.mrb[0].mxu0
      %2776 = vmatprep.mubr.bf16.mxu0 %v1443
      %2777 = vmatmul.mubr.bf16.gmra.mrb[0].mxu0 %v1442
      %v2778 = vpop.f32.mrb[0].mxu0
      %v2779 = vadd.f32 %v2682, %v2778
      %v2780 = vpop.f32.mrb[0].mxu0
      %v2781 = vpop.f32.mrb[0].mxu0
      %v2782 = vadd.f32 %v2685, %v2781
      %v2783 = vpop.f32.mrb[0].mxu0
      %2784 = vmatprep.mubr.bf16.mxu0 %v1459
      %2785 = vmatmul.mubr.bf16.gmra.mrb[0].mxu0 %v1458
      %v2786 = vpop.f32.mrb[0].mxu0
      %v2787 = vadd.f32 %v2690, %v2786
      %v2788 = vpop.f32.mrb[0].mxu0
      %v2789 = vpop.f32.mrb[0].mxu0
      %v2790 = vadd.f32 %v2693, %v2789
      %v2791 = vpop.f32.mrb[0].mxu0
      %2792 = vmatprep.mubr.bf16.mxu0 %v1475
      %2793 = vmatmul.mubr.bf16.gmra.mrb[0].mxu0 %v1474
      %v2794 = vpop.f32.mrb[0].mxu0
      %v2795 = vadd.f32 %v2698, %v2794
      %v2796 = vpop.f32.mrb[0].mxu0
      %v2797 = vpop.f32.mrb[0].mxu0
      %v2798 = vadd.f32 %v2701, %v2797
      %v2799 = vpop.f32.mrb[0].mxu0
      %2800 = vdwg.mxu0
      %2801 = vmatprep.subr.bf16.mxu0 0
      %2802 = vmatpush1.bf16.msra.mxu0 %v2302
      %2803 = vmatprep.subr.bf16.mxu0 0
      %2804 = vmatpush1.bf16.msra.mxu0 %v2303
      %2805 = vmatprep.subr.bf16.mxu0 0
      %2806 = vmatpush1.bf16.msra.mxu0 %v2304
      %2807 = vmatprep.subr.bf16.mxu0 0
      %2808 = vmatpush1.bf16.msra.mxu0 %v2305
      %2809 = vmatprep.subr.bf16.mxu0 0
      %2810 = vmatpush1.bf16.msra.mxu0 %v2306
      %2811 = vmatprep.subr.bf16.mxu0 0
      %2812 = vmatpush1.bf16.msra.mxu0 %v2307
      %2813 = vmatprep.subr.bf16.mxu0 0
      %2814 = vmatpush1.bf16.msra.mxu0 %v2308
      %2815 = vmatprep.subr.bf16.mxu0 0
      %2816 = vmatpush1.bf16.msra.mxu0 %v2309
      %2817 = vmatprep.subr.bf16.mxu0 0
      %2818 = vmatpush1.bf16.msra.mxu0 %v2310
      %2819 = vmatprep.subr.bf16.mxu0 0
      %2820 = vmatpush1.bf16.msra.mxu0 %v2311
      %2821 = vmatprep.subr.bf16.mxu0 0
      %2822 = vmatpush1.bf16.msra.mxu0 %v2312
      %2823 = vmatprep.subr.bf16.mxu0 0
      %2824 = vmatpush1.bf16.msra.mxu0 %v2313
      %2825 = vmatprep.subr.bf16.mxu0 0
      %2826 = vmatpush1.bf16.msra.mxu0 %v2314
      %2827 = vmatprep.subr.bf16.mxu0 0
      %2828 = vmatpush1.bf16.msra.mxu0 %v2315
      %2829 = vmatprep.subr.bf16.mxu0 0
      %2830 = vmatpush1.bf16.msra.mxu0 %v2316
      %2831 = vmatprep.subr.bf16.mxu0 0
      %2832 = vmatpush1.bf16.msra.mxu0 %v2317
      %2833 = vmatprep.mubr.bf16.mxu0 %v1365
      %2834 = vmatmul.mubr.bf16.gmra.mrb[0].mxu0 %v1364
      %v2835 = vpop.f32.mrb[0].mxu0
      %v2836 = vadd.f32 %v2739, %v2835
      %v2837 = vpop.f32.mrb[0].mxu0
      %v2838 = vpop.f32.mrb[0].mxu0
      %v2839 = vadd.f32 %v2742, %v2838
      %v2840 = vpop.f32.mrb[0].mxu0
      %2841 = vmatprep.mubr.bf16.mxu0 %v1381
      %2842 = vmatmul.mubr.bf16.gmra.mrb[0].mxu0 %v1380
      %v2843 = vpop.f32.mrb[0].mxu0
      %v2844 = vadd.f32 %v2747, %v2843
      %v2845 = vpop.f32.mrb[0].mxu0
      %v2846 = vpop.f32.mrb[0].mxu0
      %v2847 = vadd.f32 %v2750, %v2846
      %v2848 = vpop.f32.mrb[0].mxu0
      %2849 = vmatprep.mubr.bf16.mxu0 %v1397
      %2850 = vmatmul.mubr.bf16.gmra.mrb[0].mxu0 %v1396
      %v2851 = vpop.f32.mrb[0].mxu0
      %v2852 = vadd.f32 %v2755, %v2851
      %v2853 = vpop.f32.mrb[0].mxu0
      %v2854 = vpop.f32.mrb[0].mxu0
      %v2855 = vadd.f32 %v2758, %v2854
      %v2856 = vpop.f32.mrb[0].mxu0
      %2857 = vmatprep.mubr.bf16.mxu0 %v1413
      %2858 = vmatmul.mubr.bf16.gmra.mrb[0].mxu0 %v1412
      %v2859 = vpop.f32.mrb[0].mxu0
      %v2860 = vadd.f32 %v2763, %v2859
      %v2861 = vpop.f32.mrb[0].mxu0
      %v2862 = vpop.f32.mrb[0].mxu0
      %v2863 = vadd.f32 %v2766, %v2862
      %v2864 = vpop.f32.mrb[0].mxu0
      %2865 = vmatprep.mubr.bf16.mxu0 %v1429
      %2866 = vmatmul.mubr.bf16.gmra.mrb[0].mxu0 %v1428
      %v2867 = vpop.f32.mrb[0].mxu0
      %v2868 = vadd.f32 %v2771, %v2867
      %v2869 = vpop.f32.mrb[0].mxu0
      %v2870 = vpop.f32.mrb[0].mxu0
      %v2871 = vadd.f32 %v2774, %v2870
      %v2872 = vpop.f32.mrb[0].mxu0
      %2873 = vmatprep.mubr.bf16.mxu0 %v1445
      %2874 = vmatmul.mubr.bf16.gmra.mrb[0].mxu0 %v1444
      %v2875 = vpop.f32.mrb[0].mxu0
      %v2876 = vadd.f32 %v2779, %v2875
      %v2877 = vpop.f32.mrb[0].mxu0
      %v2878 = vpop.f32.mrb[0].mxu0
      %v2879 = vadd.f32 %v2782, %v2878
      %v2880 = vpop.f32.mrb[0].mxu0
      %2881 = vmatprep.mubr.bf16.mxu0 %v1461
      %2882 = vmatmul.mubr.bf16.gmra.mrb[0].mxu0 %v1460
      %v2883 = vpop.f32.mrb[0].mxu0
      %v2884 = vadd.f32 %v2787, %v2883
      %v2885 = vpop.f32.mrb[0].mxu0
      %v2886 = vpop.f32.mrb[0].mxu0
      %v2887 = vadd.f32 %v2790, %v2886
      %v2888 = vpop.f32.mrb[0].mxu0
      %2889 = vmatprep.mubr.bf16.mxu0 %v1477
      %2890 = vmatmul.mubr.bf16.gmra.mrb[0].mxu0 %v1476
      %v2891 = vpop.f32.mrb[0].mxu0
      %v2892 = vadd.f32 %v2795, %v2891
      %v2893 = vpop.f32.mrb[0].mxu0
      %v2894 = vpop.f32.mrb[0].mxu0
      %v2895 = vadd.f32 %v2798, %v2894
      %v2896 = vpop.f32.mrb[0].mxu0
      %2897 = vdwg.mxu0
      %2898 = vmatprep.subr.bf16.mxu0 0
      %2899 = vmatpush1.bf16.msra.mxu0 %v2318
      %2900 = vmatprep.subr.bf16.mxu0 0
      %2901 = vmatpush1.bf16.msra.mxu0 %v2319
      %2902 = vmatprep.subr.bf16.mxu0 0
      %2903 = vmatpush1.bf16.msra.mxu0 %v2320
      %2904 = vmatprep.subr.bf16.mxu0 0
      %2905 = vmatpush1.bf16.msra.mxu0 %v2321
      %2906 = vmatprep.subr.bf16.mxu0 0
      %2907 = vmatpush1.bf16.msra.mxu0 %v2322
      %2908 = vmatprep.subr.bf16.mxu0 0
      %2909 = vmatpush1.bf16.msra.mxu0 %v2323
      %2910 = vmatprep.subr.bf16.mxu0 0
      %2911 = vmatpush1.bf16.msra.mxu0 %v2324
      %2912 = vmatprep.subr.bf16.mxu0 0
      %2913 = vmatpush1.bf16.msra.mxu0 %v2325
      %2914 = vmatprep.subr.bf16.mxu0 0
      %2915 = vmatpush1.bf16.msra.mxu0 %v2326
      %2916 = vmatprep.subr.bf16.mxu0 0
      %2917 = vmatpush1.bf16.msra.mxu0 %v2327
      %2918 = vmatprep.subr.bf16.mxu0 0
      %2919 = vmatpush1.bf16.msra.mxu0 %v2328
      %2920 = vmatprep.subr.bf16.mxu0 0
      %2921 = vmatpush1.bf16.msra.mxu0 %v2329
      %2922 = vmatprep.subr.bf16.mxu0 0
      %2923 = vmatpush1.bf16.msra.mxu0 %v2330
      %2924 = vmatprep.subr.bf16.mxu0 0
      %2925 = vmatpush1.bf16.msra.mxu0 %v2331
      %2926 = vmatprep.subr.bf16.mxu0 0
      %2927 = vmatpush1.bf16.msra.mxu0 %v2332
      %2928 = vmatprep.subr.bf16.mxu0 0
      %2929 = vmatpush1.bf16.msra.mxu0 %v2333
      %2930 = vmatprep.mubr.bf16.mxu0 %v1367
      %2931 = vmatmul.mubr.bf16.gmra.mrb[0].mxu0 %v1366
      %v2932 = vpop.f32.mrb[0].mxu0
      %v2933 = vadd.f32 %v2836, %v2932
      %v2934 = vpop.f32.mrb[0].mxu0
      %v2935 = vpop.f32.mrb[0].mxu0
      %v2936 = vadd.f32 %v2839, %v2935
      %v2937 = vpop.f32.mrb[0].mxu0
      %2938 = vmatprep.mubr.bf16.mxu0 %v1383
      %2939 = vmatmul.mubr.bf16.gmra.mrb[0].mxu0 %v1382
      %v2940 = vpop.f32.mrb[0].mxu0
      %v2941 = vadd.f32 %v2844, %v2940
      %v2942 = vpop.f32.mrb[0].mxu0
      %v2943 = vpop.f32.mrb[0].mxu0
      %v2944 = vadd.f32 %v2847, %v2943
      %v2945 = vpop.f32.mrb[0].mxu0
      %2946 = vmatprep.mubr.bf16.mxu0 %v1399
      %2947 = vmatmul.mubr.bf16.gmra.mrb[0].mxu0 %v1398
      %v2948 = vpop.f32.mrb[0].mxu0
      %v2949 = vadd.f32 %v2852, %v2948
      %v2950 = vpop.f32.mrb[0].mxu0
      %v2951 = vpop.f32.mrb[0].mxu0
      %v2952 = vadd.f32 %v2855, %v2951
      %v2953 = vpop.f32.mrb[0].mxu0
      %2954 = vmatprep.mubr.bf16.mxu0 %v1415
      %2955 = vmatmul.mubr.bf16.gmra.mrb[0].mxu0 %v1414
      %v2956 = vpop.f32.mrb[0].mxu0
      %v2957 = vadd.f32 %v2860, %v2956
      %v2958 = vpop.f32.mrb[0].mxu0
      %v2959 = vpop.f32.mrb[0].mxu0
      %v2960 = vadd.f32 %v2863, %v2959
      %v2961 = vpop.f32.mrb[0].mxu0
      %2962 = vmatprep.mubr.bf16.mxu0 %v1431
      %2963 = vmatmul.mubr.bf16.gmra.mrb[0].mxu0 %v1430
      %v2964 = vpop.f32.mrb[0].mxu0
      %v2965 = vadd.f32 %v2868, %v2964
      %v2966 = vpop.f32.mrb[0].mxu0
      %v2967 = vpop.f32.mrb[0].mxu0
      %v2968 = vadd.f32 %v2871, %v2967
      %v2969 = vpop.f32.mrb[0].mxu0
      %2970 = vmatprep.mubr.bf16.mxu0 %v1447
      %2971 = vmatmul.mubr.bf16.gmra.mrb[0].mxu0 %v1446
      %v2972 = vpop.f32.mrb[0].mxu0
      %v2973 = vadd.f32 %v2876, %v2972
      %v2974 = vpop.f32.mrb[0].mxu0
      %v2975 = vpop.f32.mrb[0].mxu0
      %v2976 = vadd.f32 %v2879, %v2975
      %v2977 = vpop.f32.mrb[0].mxu0
      %2978 = vmatprep.mubr.bf16.mxu0 %v1463
      %2979 = vmatmul.mubr.bf16.gmra.mrb[0].mxu0 %v1462
      %v2980 = vpop.f32.mrb[0].mxu0
      %v2981 = vadd.f32 %v2884, %v2980
      %v2982 = vpop.f32.mrb[0].mxu0
      %v2983 = vpop.f32.mrb[0].mxu0
      %v2984 = vadd.f32 %v2887, %v2983
      %v2985 = vpop.f32.mrb[0].mxu0
      %2986 = vmatprep.mubr.bf16.mxu0 %v1479
      %2987 = vmatmul.mubr.bf16.gmra.mrb[0].mxu0 %v1478
      %v2988 = vpop.f32.mrb[0].mxu0
      %v2989 = vadd.f32 %v2892, %v2988
      %v2990 = vpop.f32.mrb[0].mxu0
      %v2991 = vpop.f32.mrb[0].mxu0
      %v2992 = vadd.f32 %v2895, %v2991
      %v2993 = vpop.f32.mrb[0].mxu0
      %2994 = vdwg.mxu0
      %2995 = vmatprep.subr.bf16.mxu0 0
      %2996 = vmatpush1.bf16.msra.mxu0 %v2334
      %2997 = vmatprep.subr.bf16.mxu0 0
      %2998 = vmatpush1.bf16.msra.mxu0 %v2335
      %2999 = vmatprep.subr.bf16.mxu0 0
      %3000 = vmatpush1.bf16.msra.mxu0 %v2336
      %3001 = vmatprep.subr.bf16.mxu0 0
      %3002 = vmatpush1.bf16.msra.mxu0 %v2337
      %3003 = vmatprep.subr.bf16.mxu0 0
      %3004 = vmatpush1.bf16.msra.mxu0 %v2338
      %3005 = vmatprep.subr.bf16.mxu0 0
      %3006 = vmatpush1.bf16.msra.mxu0 %v2339
      %3007 = vmatprep.subr.bf16.mxu0 0
      %3008 = vmatpush1.bf16.msra.mxu0 %v2340
      %3009 = vmatprep.subr.bf16.mxu0 0
      %3010 = vmatpush1.bf16.msra.mxu0 %v2341
      %3011 = vmatprep.subr.bf16.mxu0 0
      %3012 = vmatpush1.bf16.msra.mxu0 %v2342
      %3013 = vmatprep.subr.bf16.mxu0 0
      %3014 = vmatpush1.bf16.msra.mxu0 %v2343
      %3015 = vmatprep.subr.bf16.mxu0 0
      %3016 = vmatpush1.bf16.msra.mxu0 %v2344
      %3017 = vmatprep.subr.bf16.mxu0 0
      %3018 = vmatpush1.bf16.msra.mxu0 %v2345
      %3019 = vmatprep.subr.bf16.mxu0 0
      %3020 = vmatpush1.bf16.msra.mxu0 %v2346
      %3021 = vmatprep.subr.bf16.mxu0 0
      %3022 = vmatpush1.bf16.msra.mxu0 %v2347
      %3023 = vmatprep.subr.bf16.mxu0 0
      %3024 = vmatpush1.bf16.msra.mxu0 %v2348
      %3025 = vmatprep.subr.bf16.mxu0 0
      %3026 = vmatpush1.bf16.msra.mxu0 %v2349
      %3027 = vmatprep.mubr.bf16.mxu0 %v1369
      %3028 = vmatmul.mubr.bf16.gmra.mrb[0].mxu0 %v1368
      %v3029 = vpop.f32.mrb[0].mxu0
      %v3030 = vadd.f32 %v2933, %v3029
      %v3031 = vpop.f32.mrb[0].mxu0
      %v3032 = vpop.f32.mrb[0].mxu0
      %v3033 = vadd.f32 %v2936, %v3032
      %v3034 = vpop.f32.mrb[0].mxu0
      %3035 = vmatprep.mubr.bf16.mxu0 %v1385
      %3036 = vmatmul.mubr.bf16.gmra.mrb[0].mxu0 %v1384
      %v3037 = vpop.f32.mrb[0].mxu0
      %v3038 = vadd.f32 %v2941, %v3037
      %v3039 = vpop.f32.mrb[0].mxu0
      %v3040 = vpop.f32.mrb[0].mxu0
      %v3041 = vadd.f32 %v2944, %v3040
      %v3042 = vpop.f32.mrb[0].mxu0
      %3043 = vmatprep.mubr.bf16.mxu0 %v1401
      %3044 = vmatmul.mubr.bf16.gmra.mrb[0].mxu0 %v1400
      %v3045 = vpop.f32.mrb[0].mxu0
      %v3046 = vadd.f32 %v2949, %v3045
      %v3047 = vpop.f32.mrb[0].mxu0
      %v3048 = vpop.f32.mrb[0].mxu0
      %v3049 = vadd.f32 %v2952, %v3048
      %v3050 = vpop.f32.mrb[0].mxu0
      %3051 = vmatprep.mubr.bf16.mxu0 %v1417
      %3052 = vmatmul.mubr.bf16.gmra.mrb[0].mxu0 %v1416
      %v3053 = vpop.f32.mrb[0].mxu0
      %v3054 = vadd.f32 %v2957, %v3053
      %v3055 = vpop.f32.mrb[0].mxu0
      %v3056 = vpop.f32.mrb[0].mxu0
      %v3057 = vadd.f32 %v2960, %v3056
      %v3058 = vpop.f32.mrb[0].mxu0
      %3059 = vmatprep.mubr.bf16.mxu0 %v1433
      %3060 = vmatmul.mubr.bf16.gmra.mrb[0].mxu0 %v1432
      %v3061 = vpop.f32.mrb[0].mxu0
      %v3062 = vadd.f32 %v2965, %v3061
      %v3063 = vpop.f32.mrb[0].mxu0
      %v3064 = vpop.f32.mrb[0].mxu0
      %v3065 = vadd.f32 %v2968, %v3064
      %v3066 = vpop.f32.mrb[0].mxu0
      %3067 = vmatprep.mubr.bf16.mxu0 %v1449
      %3068 = vmatmul.mubr.bf16.gmra.mrb[0].mxu0 %v1448
      %v3069 = vpop.f32.mrb[0].mxu0
      %v3070 = vadd.f32 %v2973, %v3069
      %v3071 = vpop.f32.mrb[0].mxu0
      %v3072 = vpop.f32.mrb[0].mxu0
      %v3073 = vadd.f32 %v2976, %v3072
      %v3074 = vpop.f32.mrb[0].mxu0
      %3075 = vmatprep.mubr.bf16.mxu0 %v1465
      %3076 = vmatmul.mubr.bf16.gmra.mrb[0].mxu0 %v1464
      %v3077 = vpop.f32.mrb[0].mxu0
      %v3078 = vadd.f32 %v2981, %v3077
      %v3079 = vpop.f32.mrb[0].mxu0
      %v3080 = vpop.f32.mrb[0].mxu0
      %v3081 = vadd.f32 %v2984, %v3080
      %v3082 = vpop.f32.mrb[0].mxu0
      %3083 = vmatprep.mubr.bf16.mxu0 %v1481
      %3084 = vmatmul.mubr.bf16.gmra.mrb[0].mxu0 %v1480
      %v3085 = vpop.f32.mrb[0].mxu0
      %v3086 = vadd.f32 %v2989, %v3085
      %v3087 = vpop.f32.mrb[0].mxu0
      %v3088 = vpop.f32.mrb[0].mxu0
      %v3089 = vadd.f32 %v2992, %v3088
      %v3090 = vpop.f32.mrb[0].mxu0
      %3091 = vdwg.mxu0
      %3092 = vmatprep.subr.bf16.mxu0 0
      %3093 = vmatpush1.bf16.msra.mxu0 %v2350
      %3094 = vmatprep.subr.bf16.mxu0 0
      %3095 = vmatpush1.bf16.msra.mxu0 %v2351
      %3096 = vmatprep.subr.bf16.mxu0 0
      %3097 = vmatpush1.bf16.msra.mxu0 %v2352
      %3098 = vmatprep.subr.bf16.mxu0 0
      %3099 = vmatpush1.bf16.msra.mxu0 %v2353
      %3100 = vmatprep.subr.bf16.mxu0 0
      %3101 = vmatpush1.bf16.msra.mxu0 %v2354
      %3102 = vmatprep.subr.bf16.mxu0 0
      %3103 = vmatpush1.bf16.msra.mxu0 %v2355
      %3104 = vmatprep.subr.bf16.mxu0 0
      %3105 = vmatpush1.bf16.msra.mxu0 %v2356
      %3106 = vmatprep.subr.bf16.mxu0 0
      %3107 = vmatpush1.bf16.msra.mxu0 %v2357
      %3108 = vmatprep.subr.bf16.mxu0 0
      %3109 = vmatpush1.bf16.msra.mxu0 %v2358
      %3110 = vmatprep.subr.bf16.mxu0 0
      %3111 = vmatpush1.bf16.msra.mxu0 %v2359
      %3112 = vmatprep.subr.bf16.mxu0 0
      %3113 = vmatpush1.bf16.msra.mxu0 %v2360
      %3114 = vmatprep.subr.bf16.mxu0 0
      %3115 = vmatpush1.bf16.msra.mxu0 %v2361
      %3116 = vmatprep.subr.bf16.mxu0 0
      %3117 = vmatpush1.bf16.msra.mxu0 %v2362
      %3118 = vmatprep.subr.bf16.mxu0 0
      %3119 = vmatpush1.bf16.msra.mxu0 %v2363
      %3120 = vmatprep.subr.bf16.mxu0 0
      %3121 = vmatpush1.bf16.msra.mxu0 %v2364
      %3122 = vmatprep.subr.bf16.mxu0 0
      %3123 = vmatpush1.bf16.msra.mxu0 %v2365
      %3124 = vmatprep.mubr.bf16.mxu0 %v1371
      %3125 = vmatmul.mubr.bf16.gmra.mrb[0].mxu0 %v1370
      %v3126 = vpop.f32.mrb[0].mxu0
      %v3127 = vadd.f32 %v3030, %v3126
      %v3128 = vpop.f32.mrb[0].mxu0
      %v3129 = vpop.f32.mrb[0].mxu0
      %v3130 = vadd.f32 %v3033, %v3129
      %v3131 = vpop.f32.mrb[0].mxu0
      %3132 = vmatprep.mubr.bf16.mxu0 %v1387
      %3133 = vmatmul.mubr.bf16.gmra.mrb[0].mxu0 %v1386
      %v3134 = vpop.f32.mrb[0].mxu0
      %v3135 = vadd.f32 %v3038, %v3134
      %v3136 = vpop.f32.mrb[0].mxu0
      %v3137 = vpop.f32.mrb[0].mxu0
      %v3138 = vadd.f32 %v3041, %v3137
      %v3139 = vpop.f32.mrb[0].mxu0
      %3140 = vmatprep.mubr.bf16.mxu0 %v1403
      %3141 = vmatmul.mubr.bf16.gmra.mrb[0].mxu0 %v1402
      %v3142 = vpop.f32.mrb[0].mxu0
      %v3143 = vadd.f32 %v3046, %v3142
      %v3144 = vpop.f32.mrb[0].mxu0
      %v3145 = vpop.f32.mrb[0].mxu0
      %v3146 = vadd.f32 %v3049, %v3145
      %v3147 = vpop.f32.mrb[0].mxu0
      %3148 = vmatprep.mubr.bf16.mxu0 %v1419
      %3149 = vmatmul.mubr.bf16.gmra.mrb[0].mxu0 %v1418
      %v3150 = vpop.f32.mrb[0].mxu0
      %v3151 = vadd.f32 %v3054, %v3150
      %v3152 = vpop.f32.mrb[0].mxu0
      %v3153 = vpop.f32.mrb[0].mxu0
      %v3154 = vadd.f32 %v3057, %v3153
      %v3155 = vpop.f32.mrb[0].mxu0
      %3156 = vmatprep.mubr.bf16.mxu0 %v1435
      %3157 = vmatmul.mubr.bf16.gmra.mrb[0].mxu0 %v1434
      %v3158 = vpop.f32.mrb[0].mxu0
      %v3159 = vadd.f32 %v3062, %v3158
      %v3160 = vpop.f32.mrb[0].mxu0
      %v3161 = vpop.f32.mrb[0].mxu0
      %v3162 = vadd.f32 %v3065, %v3161
      %v3163 = vpop.f32.mrb[0].mxu0
      %3164 = vmatprep.mubr.bf16.mxu0 %v1451
      %3165 = vmatmul.mubr.bf16.gmra.mrb[0].mxu0 %v1450
      %v3166 = vpop.f32.mrb[0].mxu0
      %v3167 = vadd.f32 %v3070, %v3166
      %v3168 = vpop.f32.mrb[0].mxu0
      %v3169 = vpop.f32.mrb[0].mxu0
      %v3170 = vadd.f32 %v3073, %v3169
      %v3171 = vpop.f32.mrb[0].mxu0
      %3172 = vmatprep.mubr.bf16.mxu0 %v1467
      %3173 = vmatmul.mubr.bf16.gmra.mrb[0].mxu0 %v1466
      %v3174 = vpop.f32.mrb[0].mxu0
      %v3175 = vadd.f32 %v3078, %v3174
      %v3176 = vpop.f32.mrb[0].mxu0
      %v3177 = vpop.f32.mrb[0].mxu0
      %v3178 = vadd.f32 %v3081, %v3177
      %v3179 = vpop.f32.mrb[0].mxu0
      %3180 = vmatprep.mubr.bf16.mxu0 %v1483
      %3181 = vmatmul.mubr.bf16.gmra.mrb[0].mxu0 %v1482
      %v3182 = vpop.f32.mrb[0].mxu0
      %v3183 = vadd.f32 %v3086, %v3182
      %v3184 = vpop.f32.mrb[0].mxu0
      %v3185 = vpop.f32.mrb[0].mxu0
      %v3186 = vadd.f32 %v3089, %v3185
      %v3187 = vpop.f32.mrb[0].mxu0
      %3188 = vdwg.mxu0
      %3189 = vmatprep.subr.bf16.mxu0 0
      %3190 = vmatpush1.bf16.msra.mxu0 %v2366
      %3191 = vmatprep.subr.bf16.mxu0 0
      %3192 = vmatpush1.bf16.msra.mxu0 %v2367
      %3193 = vmatprep.subr.bf16.mxu0 0
      %3194 = vmatpush1.bf16.msra.mxu0 %v2368
      %3195 = vmatprep.subr.bf16.mxu0 0
      %3196 = vmatpush1.bf16.msra.mxu0 %v2369
      %3197 = vmatprep.subr.bf16.mxu0 0
      %3198 = vmatpush1.bf16.msra.mxu0 %v2370
      %3199 = vmatprep.subr.bf16.mxu0 0
      %3200 = vmatpush1.bf16.msra.mxu0 %v2371
      %3201 = vmatprep.subr.bf16.mxu0 0
      %3202 = vmatpush1.bf16.msra.mxu0 %v2372
      %3203 = vmatprep.subr.bf16.mxu0 0
      %3204 = vmatpush1.bf16.msra.mxu0 %v2373
      %3205 = vmatprep.subr.bf16.mxu0 0
      %3206 = vmatpush1.bf16.msra.mxu0 %v2374
      %3207 = vmatprep.subr.bf16.mxu0 0
      %3208 = vmatpush1.bf16.msra.mxu0 %v2375
      %3209 = vmatprep.subr.bf16.mxu0 0
      %3210 = vmatpush1.bf16.msra.mxu0 %v2376
      %3211 = vmatprep.subr.bf16.mxu0 0
      %3212 = vmatpush1.bf16.msra.mxu0 %v2377
      %3213 = vmatprep.subr.bf16.mxu0 0
      %3214 = vmatpush1.bf16.msra.mxu0 %v2378
      %3215 = vmatprep.subr.bf16.mxu0 0
      %3216 = vmatpush1.bf16.msra.mxu0 %v2379
      %3217 = vmatprep.subr.bf16.mxu0 0
      %3218 = vmatpush1.bf16.msra.mxu0 %v2380
      %3219 = vmatprep.subr.bf16.mxu0 0
      %3220 = vmatpush1.bf16.msra.mxu0 %v2381
      %3221 = vmatprep.mubr.bf16.mxu0 %v1373
      %3222 = vmatmul.mubr.bf16.gmra.mrb[0].mxu0 %v1372
      %v3223 = vpop.f32.mrb[0].mxu0
      %v3224 = vadd.f32 %v3127, %v3223
      %v3225 = vpop.f32.mrb[0].mxu0
      %v3226 = vpop.f32.mrb[0].mxu0
      %v3227 = vadd.f32 %v3130, %v3226
      %v3228 = vpop.f32.mrb[0].mxu0
      %3229 = vmatprep.mubr.bf16.mxu0 %v1389
      %3230 = vmatmul.mubr.bf16.gmra.mrb[0].mxu0 %v1388
      %v3231 = vpop.f32.mrb[0].mxu0
      %v3232 = vadd.f32 %v3135, %v3231
      %v3233 = vpop.f32.mrb[0].mxu0
      %v3234 = vpop.f32.mrb[0].mxu0
      %v3235 = vadd.f32 %v3138, %v3234
      %v3236 = vpop.f32.mrb[0].mxu0
      %3237 = vmatprep.mubr.bf16.mxu0 %v1405
      %3238 = vmatmul.mubr.bf16.gmra.mrb[0].mxu0 %v1404
      %v3239 = vpop.f32.mrb[0].mxu0
      %v3240 = vadd.f32 %v3143, %v3239
      %v3241 = vpop.f32.mrb[0].mxu0
      %v3242 = vpop.f32.mrb[0].mxu0
      %v3243 = vadd.f32 %v3146, %v3242
      %v3244 = vpop.f32.mrb[0].mxu0
      %3245 = vmatprep.mubr.bf16.mxu0 %v1421
      %3246 = vmatmul.mubr.bf16.gmra.mrb[0].mxu0 %v1420
      %v3247 = vpop.f32.mrb[0].mxu0
      %v3248 = vadd.f32 %v3151, %v3247
      %v3249 = vpop.f32.mrb[0].mxu0
      %v3250 = vpop.f32.mrb[0].mxu0
      %v3251 = vadd.f32 %v3154, %v3250
      %v3252 = vpop.f32.mrb[0].mxu0
      %3253 = vmatprep.mubr.bf16.mxu0 %v1437
      %3254 = vmatmul.mubr.bf16.gmra.mrb[0].mxu0 %v1436
      %v3255 = vpop.f32.mrb[0].mxu0
      %v3256 = vadd.f32 %v3159, %v3255
      %v3257 = vpop.f32.mrb[0].mxu0
      %v3258 = vpop.f32.mrb[0].mxu0
      %v3259 = vadd.f32 %v3162, %v3258
      %v3260 = vpop.f32.mrb[0].mxu0
      %3261 = vmatprep.mubr.bf16.mxu0 %v1453
      %3262 = vmatmul.mubr.bf16.gmra.mrb[0].mxu0 %v1452
      %v3263 = vpop.f32.mrb[0].mxu0
      %v3264 = vadd.f32 %v3167, %v3263
      %v3265 = vpop.f32.mrb[0].mxu0
      %v3266 = vpop.f32.mrb[0].mxu0
      %v3267 = vadd.f32 %v3170, %v3266
      %v3268 = vpop.f32.mrb[0].mxu0
      %3269 = vmatprep.mubr.bf16.mxu0 %v1469
      %3270 = vmatmul.mubr.bf16.gmra.mrb[0].mxu0 %v1468
      %v3271 = vpop.f32.mrb[0].mxu0
      %v3272 = vadd.f32 %v3175, %v3271
      %v3273 = vpop.f32.mrb[0].mxu0
      %v3274 = vpop.f32.mrb[0].mxu0
      %v3275 = vadd.f32 %v3178, %v3274
      %v3276 = vpop.f32.mrb[0].mxu0
      %3277 = vmatprep.mubr.bf16.mxu0 %v1485
      %3278 = vmatmul.mubr.bf16.gmra.mrb[0].mxu0 %v1484
      %v3279 = vpop.f32.mrb[0].mxu0
      %v3280 = vadd.f32 %v3183, %v3279
      %v3281 = vpop.f32.mrb[0].mxu0
      %v3282 = vpop.f32.mrb[0].mxu0
      %v3283 = vadd.f32 %v3186, %v3282
      %v3284 = vpop.f32.mrb[0].mxu0
      %3285 = vdwg.mxu0
      %v3286 = vld [vmem:[%s474] sm:$0xff]
      %v3287 = vld [vmem:[%s474 + $0x8] sm:$0xff]
      %v3288 = vld [vmem:[%s474 + $0x10] sm:$0xff]
      %v3289 = vld [vmem:[%s474 + $0x18] sm:$0xff]
      %v3290 = vld [vmem:[%s474 + $0x20] sm:$0xff]
      %v3291 = vld [vmem:[%s474 + $0x28] sm:$0xff]
      %v3292 = vld [vmem:[%s474 + $0x30] sm:$0xff]
      %v3293 = vld [vmem:[%s474 + $0x38] sm:$0xff]
      %v3294 = vld [vmem:[%s474 + $0x40] sm:$0xff]
      %v3295 = vld [vmem:[%s474 + $0x48] sm:$0xff]
      %v3296 = vld [vmem:[%s474 + $0x50] sm:$0xff]
      %v3297 = vld [vmem:[%s474 + $0x58] sm:$0xff]
      %v3298 = vld [vmem:[%s474 + $0x60] sm:$0xff]
      %v3299 = vld [vmem:[%s474 + $0x68] sm:$0xff]
      %v3300 = vld [vmem:[%s474 + $0x70] sm:$0xff]
      %v3301 = vld [vmem:[%s474 + $0x78] sm:$0xff]
      %3303 = vset.pattern.permute.xlu0 0
      %3304 = vperm.xlu0 %3303, %v3286
      %v3305 = vpop.permute.xlu0 %3304
      %3308 = vset.pattern.permute.xlu0 0
      %3309 = vperm.xlu0 %3308, %v3287
      %v3310 = vpop.permute.xlu0 %3309
      %3313 = vset.pattern.permute.xlu0 0
      %3314 = vperm.xlu0 %3313, %v3288
      %v3315 = vpop.permute.xlu0 %3314
      %3318 = vset.pattern.permute.xlu0 0
      %3319 = vperm.xlu0 %3318, %v3289
      %v3320 = vpop.permute.xlu0 %3319
      %3323 = vset.pattern.permute.xlu0 0
      %3324 = vperm.xlu0 %3323, %v3290
      %v3325 = vpop.permute.xlu0 %3324
      %3328 = vset.pattern.permute.xlu0 0
      %3329 = vperm.xlu0 %3328, %v3291
      %v3330 = vpop.permute.xlu0 %3329
      %3333 = vset.pattern.permute.xlu0 0
      %3334 = vperm.xlu0 %3333, %v3292
      %v3335 = vpop.permute.xlu0 %3334
      %3338 = vset.pattern.permute.xlu0 0
      %3339 = vperm.xlu0 %3338, %v3293
      %v3340 = vpop.permute.xlu0 %3339
      %3343 = vset.pattern.permute.xlu0 0
      %3344 = vperm.xlu0 %3343, %v3294
      %v3345 = vpop.permute.xlu0 %3344
      %3348 = vset.pattern.permute.xlu0 0
      %3349 = vperm.xlu0 %3348, %v3295
      %v3350 = vpop.permute.xlu0 %3349
      %3353 = vset.pattern.permute.xlu0 0
      %3354 = vperm.xlu0 %3353, %v3296
      %v3355 = vpop.permute.xlu0 %3354
      %3358 = vset.pattern.permute.xlu0 0
      %3359 = vperm.xlu0 %3358, %v3297
      %v3360 = vpop.permute.xlu0 %3359
      %3363 = vset.pattern.permute.xlu0 0
      %3364 = vperm.xlu0 %3363, %v3298
      %v3365 = vpop.permute.xlu0 %3364
      %3368 = vset.pattern.permute.xlu0 0
      %3369 = vperm.xlu0 %3368, %v3299
      %v3370 = vpop.permute.xlu0 %3369
      %3373 = vset.pattern.permute.xlu0 0
      %3374 = vperm.xlu0 %3373, %v3300
      %v3375 = vpop.permute.xlu0 %3374
      %3378 = vset.pattern.permute.xlu0 0
      %3379 = vperm.xlu0 %3378, %v3301
      %v3380 = vpop.permute.xlu0 %3379
      %v3382 = vmul.f32 %v3224, %v3305
      %v3383 = vmul.f32 %v3227, %v3310
      %v3384 = vmul.f32 %v3232, %v3315
      %v3385 = vmul.f32 %v3235, %v3320
      %v3386 = vmul.f32 %v3240, %v3325
      %v3387 = vmul.f32 %v3243, %v3330
      %v3388 = vmul.f32 %v3248, %v3335
      %v3389 = vmul.f32 %v3251, %v3340
      %v3390 = vmul.f32 %v3256, %v3345
      %v3391 = vmul.f32 %v3259, %v3350
      %v3392 = vmul.f32 %v3264, %v3355
      %v3393 = vmul.f32 %v3267, %v3360
      %v3394 = vmul.f32 %v3272, %v3365
      %v3395 = vmul.f32 %v3275, %v3370
      %v3396 = vmul.f32 %v3280, %v3375
      %v3397 = vmul.f32 %v3283, %v3380
      %v3398 = vld [vmem:[%s468] sm:$0xff]
      %v3399 = vld [vmem:[%s468 + $0x8] sm:$0xff]
      %v3400 = vld [vmem:[%s468 + $0x10] sm:$0xff]
      %v3401 = vld [vmem:[%s468 + $0x18] sm:$0xff]
      %v3402 = vld [vmem:[%s468 + $0x20] sm:$0xff]
      %v3403 = vld [vmem:[%s468 + $0x28] sm:$0xff]
      %v3404 = vld [vmem:[%s468 + $0x30] sm:$0xff]
      %v3405 = vld [vmem:[%s468 + $0x38] sm:$0xff]
      %v3406 = vld [vmem:[%s468 + $0x40] sm:$0xff]
      %v3407 = vld [vmem:[%s468 + $0x48] sm:$0xff]
      %v3408 = vld [vmem:[%s468 + $0x50] sm:$0xff]
      %v3409 = vld [vmem:[%s468 + $0x58] sm:$0xff]
      %v3410 = vld [vmem:[%s468 + $0x60] sm:$0xff]
      %v3411 = vld [vmem:[%s468 + $0x68] sm:$0xff]
      %v3412 = vld [vmem:[%s468 + $0x70] sm:$0xff]
      %v3413 = vld [vmem:[%s468 + $0x78] sm:$0xff]
      %v3414 = vlaneseq
      %v3415 = vand.u32 %v3414, 127
      %3416 = vset.pattern.permute.xlu0 0
      %3417 = vperm.xlu0 %3416, %v3398
      %v3418 = vpop.permute.xlu0 %3417
      %3419 = vset.pattern.permute.xlu0 0
      %3420 = vperm.xlu0 %3419, %v3399
      %v3421 = vpop.permute.xlu0 %3420
      %3422 = vset.pattern.permute.xlu0 0
      %3423 = vperm.xlu0 %3422, %v3400
      %v3424 = vpop.permute.xlu0 %3423
      %3425 = vset.pattern.permute.xlu0 0
      %3426 = vperm.xlu0 %3425, %v3401
      %v3427 = vpop.permute.xlu0 %3426
      %3428 = vset.pattern.permute.xlu0 0
      %3429 = vperm.xlu0 %3428, %v3402
      %v3430 = vpop.permute.xlu0 %3429
      %3431 = vset.pattern.permute.xlu0 0
      %3432 = vperm.xlu0 %3431, %v3403
      %v3433 = vpop.permute.xlu0 %3432
      %3434 = vset.pattern.permute.xlu0 0
      %3435 = vperm.xlu0 %3434, %v3404
      %v3436 = vpop.permute.xlu0 %3435
      %3437 = vset.pattern.permute.xlu0 0
      %3438 = vperm.xlu0 %3437, %v3405
      %v3439 = vpop.permute.xlu0 %3438
      %3440 = vset.pattern.permute.xlu0 0
      %3441 = vperm.xlu0 %3440, %v3406
      %v3442 = vpop.permute.xlu0 %3441
      %3443 = vset.pattern.permute.xlu0 0
      %3444 = vperm.xlu0 %3443, %v3407
      %v3445 = vpop.permute.xlu0 %3444
      %3446 = vset.pattern.permute.xlu0 0
      %3447 = vperm.xlu0 %3446, %v3408
      %v3448 = vpop.permute.xlu0 %3447
      %3449 = vset.pattern.permute.xlu0 0
      %3450 = vperm.xlu0 %3449, %v3409
      %v3451 = vpop.permute.xlu0 %3450
      %3452 = vset.pattern.permute.xlu0 0
      %3453 = vperm.xlu0 %3452, %v3410
      %v3454 = vpop.permute.xlu0 %3453
      %3455 = vset.pattern.permute.xlu0 0
      %3456 = vperm.xlu0 %3455, %v3411
      %v3457 = vpop.permute.xlu0 %3456
      %3458 = vset.pattern.permute.xlu0 0
      %3459 = vperm.xlu0 %3458, %v3412
      %v3460 = vpop.permute.xlu0 %3459
      %3461 = vset.pattern.permute.xlu0 0
      %3462 = vperm.xlu0 %3461, %v3413
      %v3463 = vpop.permute.xlu0 %3462
      %vm3464 = vcmp.eq.s32.totalorder %v3418, %v3415
      %vm3465 = vcmp.eq.s32.totalorder %v3421, %v3415
      %vm3466 = vcmp.eq.s32.totalorder %v3424, %v3415
      %vm3467 = vcmp.eq.s32.totalorder %v3427, %v3415
      %vm3468 = vcmp.eq.s32.totalorder %v3430, %v3415
      %vm3469 = vcmp.eq.s32.totalorder %v3433, %v3415
      %vm3470 = vcmp.eq.s32.totalorder %v3436, %v3415
      %vm3471 = vcmp.eq.s32.totalorder %v3439, %v3415
      %vm3472 = vcmp.eq.s32.totalorder %v3442, %v3415
      %vm3473 = vcmp.eq.s32.totalorder %v3445, %v3415
      %vm3474 = vcmp.eq.s32.totalorder %v3448, %v3415
      %vm3475 = vcmp.eq.s32.totalorder %v3451, %v3415
      %vm3476 = vcmp.eq.s32.totalorder %v3454, %v3415
      %vm3477 = vcmp.eq.s32.totalorder %v3457, %v3415
      %vm3478 = vcmp.eq.s32.totalorder %v3460, %v3415
      %vm3479 = vcmp.eq.s32.totalorder %v3463, %v3415
      %v3480 = vsel %vm3464, 1, 0
      %v3481 = vsel %vm3465, 1, 0
      %v3482 = vsel %vm3466, 1, 0
      %v3483 = vsel %vm3467, 1, 0
      %v3484 = vsel %vm3468, 1, 0
      %v3485 = vsel %vm3469, 1, 0
      %v3486 = vsel %vm3470, 1, 0
      %v3487 = vsel %vm3471, 1, 0
      %v3488 = vsel %vm3472, 1, 0
      %v3489 = vsel %vm3473, 1, 0
      %v3490 = vsel %vm3474, 1, 0
      %v3491 = vsel %vm3475, 1, 0
      %v3492 = vsel %vm3476, 1, 0
      %v3493 = vsel %vm3477, 1, 0
      %v3494 = vsel %vm3478, 1, 0
      %v3495 = vsel %vm3479, 1, 0
      %v3496 = vcvt.s32.f32 %v3480
      %v3497 = vcvt.s32.f32 %v3481
      %v3498 = vcvt.s32.f32 %v3482
      %v3499 = vcvt.s32.f32 %v3483
      %v3500 = vcvt.s32.f32 %v3484
      %v3501 = vcvt.s32.f32 %v3485
      %v3502 = vcvt.s32.f32 %v3486
      %v3503 = vcvt.s32.f32 %v3487
      %v3504 = vcvt.s32.f32 %v3488
      %v3505 = vcvt.s32.f32 %v3489
      %v3506 = vcvt.s32.f32 %v3490
      %v3507 = vcvt.s32.f32 %v3491
      %v3508 = vcvt.s32.f32 %v3492
      %v3509 = vcvt.s32.f32 %v3493
      %v3510 = vcvt.s32.f32 %v3494
      %v3511 = vcvt.s32.f32 %v3495
      %v3512 = vpack.c.bf16 %v3497, %v3496
      %v3513 = vpack.c.bf16 %v3499, %v3498
      %v3514 = vpack.c.bf16 %v3501, %v3500
      %v3515 = vpack.c.bf16 %v3503, %v3502
      %v3516 = vpack.c.bf16 %v3505, %v3504
      %v3517 = vpack.c.bf16 %v3507, %v3506
      %v3518 = vpack.c.bf16 %v3509, %v3508
      %v3519 = vpack.c.bf16 %v3511, %v3510
      %v3520 = vld [vmem:[%s5] sm:$0x3]
      %vm3521 = vcmask 31744
      %v3523 = vsel %vm3521, %v3512, 0
      %v3526 = vsel %vm3521, %v3513, 0
      %v3529 = vsel %vm3521, %v3514, 0
      %v3532 = vsel %vm3521, %v3515, 0
      %v3535 = vsel %vm3521, %v3516, 0
      %v3538 = vsel %vm3521, %v3517, 0
      %v3541 = vsel %vm3521, %v3518, 0
      %v3544 = vsel %vm3521, %v3519, 0
      %vm3546 = vcmask 1041408
      %v3548 = vsel %vm3546, %v3520, 0
      %3550 = vmatprep.subr.bf16.mxu0 0
      %3551 = vmatpush1.bf16.msra.mxu0 %v3548
      %3552 = vmatprep.subr.bf16.mxu0 0
      %3553 = vmatpush1.bf16.msra.mxu0 0
      %3554 = vmatprep.subr.bf16.mxu0 0
      %3555 = vmatpush1.bf16.msra.mxu0 0
      %3556 = vmatprep.subr.bf16.mxu0 0
      %3557 = vmatpush1.bf16.msra.mxu0 0
      %3558 = vmatprep.subr.bf16.mxu0 0
      %3559 = vmatpush1.bf16.msra.mxu0 0
      %3560 = vmatprep.subr.bf16.mxu0 0
      %3561 = vmatpush1.bf16.msra.mxu0 0
      %3562 = vmatprep.subr.bf16.mxu0 0
      %3563 = vmatpush1.bf16.msra.mxu0 0
      %3564 = vmatprep.subr.bf16.mxu0 0
      %3565 = vmatpush1.bf16.msra.mxu0 0
      %3566 = vmatprep.subr.bf16.mxu0 0
      %3567 = vmatpush1.bf16.msra.mxu0 0
      %3568 = vmatprep.subr.bf16.mxu0 0
      %3569 = vmatpush1.bf16.msra.mxu0 0
      %3570 = vmatprep.subr.bf16.mxu0 0
      %3571 = vmatpush1.bf16.msra.mxu0 0
      %3572 = vmatprep.subr.bf16.mxu0 0
      %3573 = vmatpush1.bf16.msra.mxu0 0
      %3574 = vmatprep.subr.bf16.mxu0 0
      %3575 = vmatpush1.bf16.msra.mxu0 0
      %3576 = vmatprep.subr.bf16.mxu0 0
      %3577 = vmatpush1.bf16.msra.mxu0 0
      %3578 = vmatprep.subr.bf16.mxu0 0
      %3579 = vmatpush1.bf16.msra.mxu0 0
      %3580 = vmatprep.subr.bf16.mxu0 0
      %3581 = vmatpush1.bf16.msra.mxu0 0
      %3582 = vmatprep.mubr.bf16.mxu0 0
      %3583 = vmatmul.mubr.bf16.gmra.mrb[0].mxu0 %v3523
      %v3584 = vpop.f32.mrb[0].mxu0
      %v3585 = vadd.f32 0.0, %v3584
      %v3586 = vpop.f32.mrb[0].mxu0
      %v3587 = vpop.f32.mrb[0].mxu0
      %v3588 = vadd.f32 0.0, %v3587
      %v3589 = vpop.f32.mrb[0].mxu0
      %3590 = vmatprep.mubr.bf16.mxu0 0
      %3591 = vmatmul.mubr.bf16.gmra.mrb[0].mxu0 %v3526
      %v3592 = vpop.f32.mrb[0].mxu0
      %v3593 = vadd.f32 0.0, %v3592
      %v3594 = vpop.f32.mrb[0].mxu0
      %v3595 = vpop.f32.mrb[0].mxu0
      %v3596 = vadd.f32 0.0, %v3595
      %v3597 = vpop.f32.mrb[0].mxu0
      %3598 = vmatprep.mubr.bf16.mxu0 0
      %3599 = vmatmul.mubr.bf16.gmra.mrb[0].mxu0 %v3529
      %v3600 = vpop.f32.mrb[0].mxu0
      %v3601 = vadd.f32 0.0, %v3600
      %v3602 = vpop.f32.mrb[0].mxu0
      %v3603 = vpop.f32.mrb[0].mxu0
      %v3604 = vadd.f32 0.0, %v3603
      %v3605 = vpop.f32.mrb[0].mxu0
      %3606 = vmatprep.mubr.bf16.mxu0 0
      %3607 = vmatmul.mubr.bf16.gmra.mrb[0].mxu0 %v3532
      %v3608 = vpop.f32.mrb[0].mxu0
      %v3609 = vadd.f32 0.0, %v3608
      %v3610 = vpop.f32.mrb[0].mxu0
      %v3611 = vpop.f32.mrb[0].mxu0
      %v3612 = vadd.f32 0.0, %v3611
      %v3613 = vpop.f32.mrb[0].mxu0
      %3614 = vmatprep.mubr.bf16.mxu0 0
      %3615 = vmatmul.mubr.bf16.gmra.mrb[0].mxu0 %v3535
      %v3616 = vpop.f32.mrb[0].mxu0
      %v3617 = vadd.f32 0.0, %v3616
      %v3618 = vpop.f32.mrb[0].mxu0
      %v3619 = vpop.f32.mrb[0].mxu0
      %v3620 = vadd.f32 0.0, %v3619
      %v3621 = vpop.f32.mrb[0].mxu0
      %3622 = vmatprep.mubr.bf16.mxu0 0
      %3623 = vmatmul.mubr.bf16.gmra.mrb[0].mxu0 %v3538
      %v3624 = vpop.f32.mrb[0].mxu0
      %v3625 = vadd.f32 0.0, %v3624
      %v3626 = vpop.f32.mrb[0].mxu0
      %v3627 = vpop.f32.mrb[0].mxu0
      %v3628 = vadd.f32 0.0, %v3627
      %v3629 = vpop.f32.mrb[0].mxu0
      %3630 = vmatprep.mubr.bf16.mxu0 0
      %3631 = vmatmul.mubr.bf16.gmra.mrb[0].mxu0 %v3541
      %v3632 = vpop.f32.mrb[0].mxu0
      %v3633 = vadd.f32 0.0, %v3632
      %v3634 = vpop.f32.mrb[0].mxu0
      %v3635 = vpop.f32.mrb[0].mxu0
      %v3636 = vadd.f32 0.0, %v3635
      %v3637 = vpop.f32.mrb[0].mxu0
      %3638 = vmatprep.mubr.bf16.mxu0 0
      %3639 = vmatmul.mubr.bf16.gmra.mrb[0].mxu0 %v3544
      %v3640 = vpop.f32.mrb[0].mxu0
      %v3641 = vadd.f32 0.0, %v3640
      %v3642 = vpop.f32.mrb[0].mxu0
      %v3643 = vpop.f32.mrb[0].mxu0
      %v3644 = vadd.f32 0.0, %v3643
      %v3645 = vpop.f32.mrb[0].mxu0
      %3646 = vdwg.mxu0
      %v3647 = vld [vmem:[%s480] sm:$0xf]
      %v3648 = vld [vmem:[%s480 + $0x4] sm:$0xf]
      %v3649 = vld [vmem:[%s480 + $0x8] sm:$0xf]
      %v3650 = vld [vmem:[%s480 + $0xc] sm:$0xf]
      %v3651 = vld [vmem:[%s480 + $0x10] sm:$0xf]
      %v3652 = vld [vmem:[%s480 + $0x14] sm:$0xf]
      %v3653 = vld [vmem:[%s480 + $0x18] sm:$0xf]
      %v3654 = vld [vmem:[%s480 + $0x1c] sm:$0xf]
      %v3655 = vld [vmem:[%s480 + $0x20] sm:$0xf]
      %v3656 = vld [vmem:[%s480 + $0x24] sm:$0xf]
      %v3657 = vld [vmem:[%s480 + $0x28] sm:$0xf]
      %v3658 = vld [vmem:[%s480 + $0x2c] sm:$0xf]
      %v3659 = vld [vmem:[%s480 + $0x30] sm:$0xf]
      %v3660 = vld [vmem:[%s480 + $0x34] sm:$0xf]
      %v3661 = vld [vmem:[%s480 + $0x38] sm:$0xf]
      %v3662 = vld [vmem:[%s480 + $0x3c] sm:$0xf]
      %v3663 = vld [vmem:[%s6] sm:$0xf]
      %v3664 = vld [vmem:[%s6 + $0x4] sm:$0xf]
      %v3665 = vld [vmem:[%s6 + $0x8] sm:$0xf]
      %v3666 = vld [vmem:[%s6 + $0xc] sm:$0xf]
      %v3667 = vpack.c.bf16 %v3383, %v3382
      %v3668 = vpack.c.bf16 %v3385, %v3384
      %v3669 = vpack.c.bf16 %v3387, %v3386
      %v3670 = vpack.c.bf16 %v3389, %v3388
      %v3671 = vpack.c.bf16 %v3391, %v3390
      %v3672 = vpack.c.bf16 %v3393, %v3392
      %v3673 = vpack.c.bf16 %v3395, %v3394
      %v3674 = vpack.c.bf16 %v3397, %v3396
      %v3675 = vld [vmem:[%s7] sm:$0xf]
      %v3676 = vld [vmem:[%s7 + $0x4] sm:$0xf]
      %v3677 = vld [vmem:[%s7 + $0x8] sm:$0xf]
      %v3678 = vld [vmem:[%s7 + $0xc] sm:$0xf]
      %v3683 = vunpack.c.l.b16 %v3675
      %v3684 = vunpack.c.l.b16 %v3676
      %v3685 = vunpack.c.l.b16 %v3677
      %v3686 = vunpack.c.l.b16 %v3678
      %v3687 = vpack.c.b16 %v3684, %v3683
      %v3688 = vpack.c.b16 %v3686, %v3685
      %vm3691 = vcmask 261120
      %v3693 = vsel %vm3691, %v3667, 0
      %v3696 = vsel %vm3691, %v3668, 0
      %v3699 = vsel %vm3691, %v3669, 0
      %v3702 = vsel %vm3691, %v3670, 0
      %v3705 = vsel %vm3691, %v3671, 0
      %v3708 = vsel %vm3691, %v3672, 0
      %v3711 = vsel %vm3691, %v3673, 0
      %v3714 = vsel %vm3691, %v3674, 0
      %3716 = vmatprep.subr.bf16.mxu0 0
      %3717 = vmatpush1.bf16.msra.mxu0 %v3687
      %3718 = vmatprep.subr.bf16.mxu0 0
      %3719 = vmatpush1.bf16.msra.mxu0 %v3688
      %3720 = vmatprep.subr.bf16.mxu0 0
      %3721 = vmatpush1.bf16.msra.mxu0 0
      %3722 = vmatprep.subr.bf16.mxu0 0
      %3723 = vmatpush1.bf16.msra.mxu0 0
      %3724 = vmatprep.subr.bf16.mxu0 0
      %3725 = vmatpush1.bf16.msra.mxu0 0
      %3726 = vmatprep.subr.bf16.mxu0 0
      %3727 = vmatpush1.bf16.msra.mxu0 0
      %3728 = vmatprep.subr.bf16.mxu0 0
      %3729 = vmatpush1.bf16.msra.mxu0 0
      %3730 = vmatprep.subr.bf16.mxu0 0
      %3731 = vmatpush1.bf16.msra.mxu0 0
      %3732 = vmatprep.subr.bf16.mxu0 0
      %3733 = vmatpush1.bf16.msra.mxu0 0
      %3734 = vmatprep.subr.bf16.mxu0 0
      %3735 = vmatpush1.bf16.msra.mxu0 0
      %3736 = vmatprep.subr.bf16.mxu0 0
      %3737 = vmatpush1.bf16.msra.mxu0 0
      %3738 = vmatprep.subr.bf16.mxu0 0
      %3739 = vmatpush1.bf16.msra.mxu0 0
      %3740 = vmatprep.subr.bf16.mxu0 0
      %3741 = vmatpush1.bf16.msra.mxu0 0
      %3742 = vmatprep.subr.bf16.mxu0 0
      %3743 = vmatpush1.bf16.msra.mxu0 0
      %3744 = vmatprep.subr.bf16.mxu0 0
      %3745 = vmatpush1.bf16.msra.mxu0 0
      %3746 = vmatprep.subr.bf16.mxu0 0
      %3747 = vmatpush1.bf16.msra.mxu0 0
      %3748 = vmatprep.mubr.bf16.mxu0 0
      %3749 = vmatmul.mubr.bf16.gmra.mrb[0].mxu0 %v3693
      %v3750 = vpop.f32.mrb[0].mxu0
      %v3751 = vadd.f32 0.0, %v3750
      %v3752 = vpop.f32.mrb[0].mxu0
      %v3753 = vpop.f32.mrb[0].mxu0
      %v3754 = vadd.f32 0.0, %v3753
      %v3755 = vpop.f32.mrb[0].mxu0
      %3756 = vmatprep.mubr.bf16.mxu0 0
      %3757 = vmatmul.mubr.bf16.gmra.mrb[0].mxu0 %v3696
      %v3758 = vpop.f32.mrb[0].mxu0
      %v3759 = vadd.f32 0.0, %v3758
      %v3760 = vpop.f32.mrb[0].mxu0
      %v3761 = vpop.f32.mrb[0].mxu0
      %v3762 = vadd.f32 0.0, %v3761
      %v3763 = vpop.f32.mrb[0].mxu0
      %3764 = vmatprep.mubr.bf16.mxu0 0
      %3765 = vmatmul.mubr.bf16.gmra.mrb[0].mxu0 %v3699
      %v3766 = vpop.f32.mrb[0].mxu0
      %v3767 = vadd.f32 0.0, %v3766
      %v3768 = vpop.f32.mrb[0].mxu0
      %v3769 = vpop.f32.mrb[0].mxu0
      %v3770 = vadd.f32 0.0, %v3769
      %v3771 = vpop.f32.mrb[0].mxu0
      %3772 = vmatprep.mubr.bf16.mxu0 0
      %3773 = vmatmul.mubr.bf16.gmra.mrb[0].mxu0 %v3702
      %v3774 = vpop.f32.mrb[0].mxu0
      %v3775 = vadd.f32 0.0, %v3774
      %v3776 = vpop.f32.mrb[0].mxu0
      %v3777 = vpop.f32.mrb[0].mxu0
      %v3778 = vadd.f32 0.0, %v3777
      %v3779 = vpop.f32.mrb[0].mxu0
      %3780 = vmatprep.mubr.bf16.mxu0 0
      %3781 = vmatmul.mubr.bf16.gmra.mrb[0].mxu0 %v3705
      %v3782 = vpop.f32.mrb[0].mxu0
      %v3783 = vadd.f32 0.0, %v3782
      %v3784 = vpop.f32.mrb[0].mxu0
      %v3785 = vpop.f32.mrb[0].mxu0
      %v3786 = vadd.f32 0.0, %v3785
      %v3787 = vpop.f32.mrb[0].mxu0
      %3788 = vmatprep.mubr.bf16.mxu0 0
      %3789 = vmatmul.mubr.bf16.gmra.mrb[0].mxu0 %v3708
      %v3790 = vpop.f32.mrb[0].mxu0
      %v3791 = vadd.f32 0.0, %v3790
      %v3792 = vpop.f32.mrb[0].mxu0
      %v3793 = vpop.f32.mrb[0].mxu0
      %v3794 = vadd.f32 0.0, %v3793
      %v3795 = vpop.f32.mrb[0].mxu0
      %3796 = vmatprep.mubr.bf16.mxu0 0
      %3797 = vmatmul.mubr.bf16.gmra.mrb[0].mxu0 %v3711
      %v3798 = vpop.f32.mrb[0].mxu0
      %v3799 = vadd.f32 0.0, %v3798
      %v3800 = vpop.f32.mrb[0].mxu0
      %v3801 = vpop.f32.mrb[0].mxu0
      %v3802 = vadd.f32 0.0, %v3801
      %v3803 = vpop.f32.mrb[0].mxu0
      %3804 = vmatprep.mubr.bf16.mxu0 0
      %3805 = vmatmul.mubr.bf16.gmra.mrb[0].mxu0 %v3714
      %v3806 = vpop.f32.mrb[0].mxu0
      %v3807 = vadd.f32 0.0, %v3806
      %v3808 = vpop.f32.mrb[0].mxu0
      %v3809 = vpop.f32.mrb[0].mxu0
      %v3810 = vadd.f32 0.0, %v3809
      %v3811 = vpop.f32.mrb[0].mxu0
      %3812 = vdwg.mxu0
      %v3829 = vunpack.c.l.b16 %v3647
      %v3830 = vunpack.c.l.b16 %v3648
      %v3831 = vunpack.c.l.b16 %v3649
      %v3832 = vunpack.c.l.b16 %v3650
      %v3833 = vunpack.c.l.b16 %v3651
      %v3834 = vunpack.c.l.b16 %v3652
      %v3835 = vunpack.c.l.b16 %v3653
      %v3836 = vunpack.c.l.b16 %v3654
      %v3837 = vunpack.c.l.b16 %v3655
      %v3838 = vunpack.c.l.b16 %v3656
      %v3839 = vunpack.c.l.b16 %v3657
      %v3840 = vunpack.c.l.b16 %v3658
      %v3841 = vunpack.c.l.b16 %v3659
      %v3842 = vunpack.c.l.b16 %v3660
      %v3843 = vunpack.c.l.b16 %v3661
      %v3844 = vunpack.c.l.b16 %v3662
      %v3845 = vpack.c.b16 %v3830, %v3829
      %v3846 = vpack.c.b16 %v3832, %v3831
      %v3847 = vpack.c.b16 %v3834, %v3833
      %v3848 = vpack.c.b16 %v3836, %v3835
      %v3849 = vpack.c.b16 %v3838, %v3837
      %v3850 = vpack.c.b16 %v3840, %v3839
      %v3851 = vpack.c.b16 %v3842, %v3841
      %v3852 = vpack.c.b16 %v3844, %v3843
      %v3857 = vunpack.c.l.b16 %v3663
      %v3858 = vunpack.c.l.b16 %v3664
      %v3859 = vunpack.c.l.b16 %v3665
      %v3860 = vunpack.c.l.b16 %v3666
      %v3861 = vpack.c.b16 %v3858, %v3857
      %v3862 = vpack.c.b16 %v3860, %v3859
      %v3866 = vsel %vm3691, %v3845, 0
      %v3869 = vsel %vm3691, %v3846, 0
      %v3872 = vsel %vm3691, %v3847, 0
      %v3875 = vsel %vm3691, %v3848, 0
      %v3878 = vsel %vm3691, %v3849, 0
      %v3881 = vsel %vm3691, %v3850, 0
      %v3884 = vsel %vm3691, %v3851, 0
      %v3887 = vsel %vm3691, %v3852, 0
      %3889 = vmatprep.subr.bf16.mxu0 0
      %3890 = vmatpush1.bf16.msra.mxu0 %v3861
      %3891 = vmatprep.subr.bf16.mxu0 0
      %3892 = vmatpush1.bf16.msra.mxu0 %v3862
      %3893 = vmatprep.subr.bf16.mxu0 0
      %3894 = vmatpush1.bf16.msra.mxu0 0
      %3895 = vmatprep.subr.bf16.mxu0 0
      %3896 = vmatpush1.bf16.msra.mxu0 0
      %3897 = vmatprep.subr.bf16.mxu0 0
      %3898 = vmatpush1.bf16.msra.mxu0 0
      %3899 = vmatprep.subr.bf16.mxu0 0
      %3900 = vmatpush1.bf16.msra.mxu0 0
      %3901 = vmatprep.subr.bf16.mxu0 0
      %3902 = vmatpush1.bf16.msra.mxu0 0
      %3903 = vmatprep.subr.bf16.mxu0 0
      %3904 = vmatpush1.bf16.msra.mxu0 0
      %3905 = vmatprep.subr.bf16.mxu0 0
      %3906 = vmatpush1.bf16.msra.mxu0 0
      %3907 = vmatprep.subr.bf16.mxu0 0
      %3908 = vmatpush1.bf16.msra.mxu0 0
      %3909 = vmatprep.subr.bf16.mxu0 0
      %3910 = vmatpush1.bf16.msra.mxu0 0
      %3911 = vmatprep.subr.bf16.mxu0 0
      %3912 = vmatpush1.bf16.msra.mxu0 0
      %3913 = vmatprep.subr.bf16.mxu0 0
      %3914 = vmatpush1.bf16.msra.mxu0 0
      %3915 = vmatprep.subr.bf16.mxu0 0
      %3916 = vmatpush1.bf16.msra.mxu0 0
      %3917 = vmatprep.subr.bf16.mxu0 0
      %3918 = vmatpush1.bf16.msra.mxu0 0
      %3919 = vmatprep.subr.bf16.mxu0 0
      %3920 = vmatpush1.bf16.msra.mxu0 0
      %3921 = vmatprep.mubr.bf16.mxu0 0
      %3922 = vmatmul.mubr.bf16.gmra.mrb[0].mxu0 %v3866
      %v3923 = vpop.f32.mrb[0].mxu0
      %v3924 = vadd.f32 %v3751, %v3923
      %v3925 = vpop.f32.mrb[0].mxu0
      %v3926 = vpop.f32.mrb[0].mxu0
      %v3927 = vadd.f32 %v3754, %v3926
      %v3928 = vpop.f32.mrb[0].mxu0
      %3929 = vmatprep.mubr.bf16.mxu0 0
      %3930 = vmatmul.mubr.bf16.gmra.mrb[0].mxu0 %v3869
      %v3931 = vpop.f32.mrb[0].mxu0
      %v3932 = vadd.f32 %v3759, %v3931
      %v3933 = vpop.f32.mrb[0].mxu0
      %v3934 = vpop.f32.mrb[0].mxu0
      %v3935 = vadd.f32 %v3762, %v3934
      %v3936 = vpop.f32.mrb[0].mxu0
      %3937 = vmatprep.mubr.bf16.mxu0 0
      %3938 = vmatmul.mubr.bf16.gmra.mrb[0].mxu0 %v3872
      %v3939 = vpop.f32.mrb[0].mxu0
      %v3940 = vadd.f32 %v3767, %v3939
      %v3941 = vpop.f32.mrb[0].mxu0
      %v3942 = vpop.f32.mrb[0].mxu0
      %v3943 = vadd.f32 %v3770, %v3942
      %v3944 = vpop.f32.mrb[0].mxu0
      %3945 = vmatprep.mubr.bf16.mxu0 0
      %3946 = vmatmul.mubr.bf16.gmra.mrb[0].mxu0 %v3875
      %v3947 = vpop.f32.mrb[0].mxu0
      %v3948 = vadd.f32 %v3775, %v3947
      %v3949 = vpop.f32.mrb[0].mxu0
      %v3950 = vpop.f32.mrb[0].mxu0
      %v3951 = vadd.f32 %v3778, %v3950
      %v3952 = vpop.f32.mrb[0].mxu0
      %3953 = vmatprep.mubr.bf16.mxu0 0
      %3954 = vmatmul.mubr.bf16.gmra.mrb[0].mxu0 %v3878
      %v3955 = vpop.f32.mrb[0].mxu0
      %v3956 = vadd.f32 %v3783, %v3955
      %v3957 = vpop.f32.mrb[0].mxu0
      %v3958 = vpop.f32.mrb[0].mxu0
      %v3959 = vadd.f32 %v3786, %v3958
      %v3960 = vpop.f32.mrb[0].mxu0
      %3961 = vmatprep.mubr.bf16.mxu0 0
      %3962 = vmatmul.mubr.bf16.gmra.mrb[0].mxu0 %v3881
      %v3963 = vpop.f32.mrb[0].mxu0
      %v3964 = vadd.f32 %v3791, %v3963
      %v3965 = vpop.f32.mrb[0].mxu0
      %v3966 = vpop.f32.mrb[0].mxu0
      %v3967 = vadd.f32 %v3794, %v3966
      %v3968 = vpop.f32.mrb[0].mxu0
      %3969 = vmatprep.mubr.bf16.mxu0 0
      %3970 = vmatmul.mubr.bf16.gmra.mrb[0].mxu0 %v3884
      %v3971 = vpop.f32.mrb[0].mxu0
      %v3972 = vadd.f32 %v3799, %v3971
      %v3973 = vpop.f32.mrb[0].mxu0
      %v3974 = vpop.f32.mrb[0].mxu0
      %v3975 = vadd.f32 %v3802, %v3974
      %v3976 = vpop.f32.mrb[0].mxu0
      %3977 = vmatprep.mubr.bf16.mxu0 0
      %3978 = vmatmul.mubr.bf16.gmra.mrb[0].mxu0 %v3887
      %v3979 = vpop.f32.mrb[0].mxu0
      %v3980 = vadd.f32 %v3807, %v3979
      %v3981 = vpop.f32.mrb[0].mxu0
      %v3982 = vpop.f32.mrb[0].mxu0
      %v3983 = vadd.f32 %v3810, %v3982
      %v3984 = vpop.f32.mrb[0].mxu0
      %3985 = vdwg.mxu0
      %v3986 = vadd.f32 %v3924, %v3585
      %v3987 = vadd.f32 %v3927, %v3588
      %v3988 = vadd.f32 %v3932, %v3593
      %v3989 = vadd.f32 %v3935, %v3596
      %v3990 = vadd.f32 %v3940, %v3601
      %v3991 = vadd.f32 %v3943, %v3604
      %v3992 = vadd.f32 %v3948, %v3609
      %v3993 = vadd.f32 %v3951, %v3612
      %v3994 = vadd.f32 %v3956, %v3617
      %v3995 = vadd.f32 %v3959, %v3620
      %v3996 = vadd.f32 %v3964, %v3625
      %v3997 = vadd.f32 %v3967, %v3628
      %v3998 = vadd.f32 %v3972, %v3633
      %v3999 = vadd.f32 %v3975, %v3636
      %v4000 = vadd.f32 %v3980, %v3641
      %v4001 = vadd.f32 %v3983, %v3644
      %v4002 = vld [vmem:[%s8] sm:$0x1]
      %v4004 = vlaneseq
      %v4005 = vshrl.u32 %v4004, 7
      %v4006 = vsub.s32 0, %v4005
      %v4007 = vrot.slane %v4002, %v4006
      %v4009 = vadd.f32 %v3986, %v4007
      %v4010 = vadd.f32 %v3987, %v4007
      %v4011 = vadd.f32 %v3988, %v4007
      %v4012 = vadd.f32 %v3989, %v4007
      %v4013 = vadd.f32 %v3990, %v4007
      %v4014 = vadd.f32 %v3991, %v4007
      %v4015 = vadd.f32 %v3992, %v4007
      %v4016 = vadd.f32 %v3993, %v4007
      %v4017 = vadd.f32 %v3994, %v4007
      %v4018 = vadd.f32 %v3995, %v4007
      %v4019 = vadd.f32 %v3996, %v4007
      %v4020 = vadd.f32 %v3997, %v4007
      %v4021 = vadd.f32 %v3998, %v4007
      %v4022 = vadd.f32 %v3999, %v4007
      %v4023 = vadd.f32 %v4000, %v4007
      %v4024 = vadd.f32 %v4001, %v4007
      %v4025 = vmax.f32 %v4009, 0.0
      %v4026 = vmax.f32 %v4010, 0.0
      %v4027 = vmax.f32 %v4011, 0.0
      %v4028 = vmax.f32 %v4012, 0.0
      %v4029 = vmax.f32 %v4013, 0.0
      %v4030 = vmax.f32 %v4014, 0.0
      %v4031 = vmax.f32 %v4015, 0.0
      %v4032 = vmax.f32 %v4016, 0.0
      %v4033 = vmax.f32 %v4017, 0.0
      %v4034 = vmax.f32 %v4018, 0.0
      %v4035 = vmax.f32 %v4019, 0.0
      %v4036 = vmax.f32 %v4020, 0.0
      %v4037 = vmax.f32 %v4021, 0.0
      %v4038 = vmax.f32 %v4022, 0.0
      %v4039 = vmax.f32 %v4023, 0.0
      %v4040 = vmax.f32 %v4024, 0.0
      %v4041 = vpack.c.bf16 %v4026, %v4025
      %v4042 = vpack.c.bf16 %v4028, %v4027
      %v4043 = vpack.c.bf16 %v4030, %v4029
      %v4044 = vpack.c.bf16 %v4032, %v4031
      %v4045 = vpack.c.bf16 %v4034, %v4033
      %v4046 = vpack.c.bf16 %v4036, %v4035
      %v4047 = vpack.c.bf16 %v4038, %v4037
      %v4048 = vpack.c.bf16 %v4040, %v4039
      %v4049 = vld [vmem:[%s9] sm:$0xf]
      %v4050 = vld [vmem:[%s9 + $0x4] sm:$0xf]
      %v4051 = vld [vmem:[%s9 + $0x8] sm:$0xf]
      %v4052 = vld [vmem:[%s9 + $0xc] sm:$0xf]
      %v4053 = vld [vmem:[%s10] sm:$0x1]
      %v4055 = vlaneseq
      %v4056 = vshrl.u32 %v4055, 7
      %v4057 = vsub.s32 0, %v4056
      %v4058 = vrot.slane %v4053, %v4057
      %v4064 = vunpack.c.l.b16 %v4049
      %v4065 = vunpack.c.l.b16 %v4050
      %v4066 = vunpack.c.l.b16 %v4051
      %v4067 = vunpack.c.l.b16 %v4052
      %v4068 = vpack.c.b16 %v4065, %v4064
      %v4069 = vpack.c.b16 %v4067, %v4066
      %v4073 = vsel %vm3691, %v4041, 0
      %v4076 = vsel %vm3691, %v4042, 0
      %v4079 = vsel %vm3691, %v4043, 0
      %v4082 = vsel %vm3691, %v4044, 0
      %v4085 = vsel %vm3691, %v4045, 0
      %v4088 = vsel %vm3691, %v4046, 0
      %v4091 = vsel %vm3691, %v4047, 0
      %v4094 = vsel %vm3691, %v4048, 0
      %4096 = vmatprep.subr.bf16.mxu0 0
      %4097 = vmatpush1.bf16.msra.mxu0 %v4068
      %4098 = vmatprep.subr.bf16.mxu0 0
      %4099 = vmatpush1.bf16.msra.mxu0 %v4069
      %4100 = vmatprep.subr.bf16.mxu0 0
      %4101 = vmatpush1.bf16.msra.mxu0 0
      %4102 = vmatprep.subr.bf16.mxu0 0
      %4103 = vmatpush1.bf16.msra.mxu0 0
      %4104 = vmatprep.subr.bf16.mxu0 0
      %4105 = vmatpush1.bf16.msra.mxu0 0
      %4106 = vmatprep.subr.bf16.mxu0 0
      %4107 = vmatpush1.bf16.msra.mxu0 0
      %4108 = vmatprep.subr.bf16.mxu0 0
      %4109 = vmatpush1.bf16.msra.mxu0 0
      %4110 = vmatprep.subr.bf16.mxu0 0
      %4111 = vmatpush1.bf16.msra.mxu0 0
      %4112 = vmatprep.subr.bf16.mxu0 0
      %4113 = vmatpush1.bf16.msra.mxu0 0
      %4114 = vmatprep.subr.bf16.mxu0 0
      %4115 = vmatpush1.bf16.msra.mxu0 0
      %4116 = vmatprep.subr.bf16.mxu0 0
      %4117 = vmatpush1.bf16.msra.mxu0 0
      %4118 = vmatprep.subr.bf16.mxu0 0
      %4119 = vmatpush1.bf16.msra.mxu0 0
      %4120 = vmatprep.subr.bf16.mxu0 0
      %4121 = vmatpush1.bf16.msra.mxu0 0
      %4122 = vmatprep.subr.bf16.mxu0 0
      %4123 = vmatpush1.bf16.msra.mxu0 0
      %4124 = vmatprep.subr.bf16.mxu0 0
      %4125 = vmatpush1.bf16.msra.mxu0 0
      %4126 = vmatprep.subr.bf16.mxu0 0
      %4127 = vmatpush1.bf16.msra.mxu0 0
      %4128 = vmatprep.mubr.bf16.mxu0 0
      %4129 = vmatmul.mubr.bf16.gmra.mrb[0].mxu0 %v4073
      %v4130 = vpop.f32.mrb[0].mxu0
      %v4131 = vadd.f32 %v4058, %v4130
      %v4132 = vpop.f32.mrb[0].mxu0
      %v4133 = vpop.f32.mrb[0].mxu0
      %v4134 = vadd.f32 %v4058, %v4133
      %v4135 = vpop.f32.mrb[0].mxu0
      %4136 = vmatprep.mubr.bf16.mxu0 0
      %4137 = vmatmul.mubr.bf16.gmra.mrb[0].mxu0 %v4076
      %v4138 = vpop.f32.mrb[0].mxu0
      %v4139 = vadd.f32 %v4058, %v4138
      %v4140 = vpop.f32.mrb[0].mxu0
      %v4141 = vpop.f32.mrb[0].mxu0
      %v4142 = vadd.f32 %v4058, %v4141
      %v4143 = vpop.f32.mrb[0].mxu0
      %4144 = vmatprep.mubr.bf16.mxu0 0
      %4145 = vmatmul.mubr.bf16.gmra.mrb[0].mxu0 %v4079
      %v4146 = vpop.f32.mrb[0].mxu0
      %v4147 = vadd.f32 %v4058, %v4146
      %v4148 = vpop.f32.mrb[0].mxu0
      %v4149 = vpop.f32.mrb[0].mxu0
      %v4150 = vadd.f32 %v4058, %v4149
      %v4151 = vpop.f32.mrb[0].mxu0
      %4152 = vmatprep.mubr.bf16.mxu0 0
      %4153 = vmatmul.mubr.bf16.gmra.mrb[0].mxu0 %v4082
      %v4154 = vpop.f32.mrb[0].mxu0
      %v4155 = vadd.f32 %v4058, %v4154
      %v4156 = vpop.f32.mrb[0].mxu0
      %v4157 = vpop.f32.mrb[0].mxu0
      %v4158 = vadd.f32 %v4058, %v4157
      %v4159 = vpop.f32.mrb[0].mxu0
      %4160 = vmatprep.mubr.bf16.mxu0 0
      %4161 = vmatmul.mubr.bf16.gmra.mrb[0].mxu0 %v4085
      %v4162 = vpop.f32.mrb[0].mxu0
      %v4163 = vadd.f32 %v4058, %v4162
      %v4164 = vpop.f32.mrb[0].mxu0
      %v4165 = vpop.f32.mrb[0].mxu0
      %v4166 = vadd.f32 %v4058, %v4165
      %v4167 = vpop.f32.mrb[0].mxu0
      %4168 = vmatprep.mubr.bf16.mxu0 0
      %4169 = vmatmul.mubr.bf16.gmra.mrb[0].mxu0 %v4088
      %v4170 = vpop.f32.mrb[0].mxu0
      %v4171 = vadd.f32 %v4058, %v4170
      %v4172 = vpop.f32.mrb[0].mxu0
      %v4173 = vpop.f32.mrb[0].mxu0
      %v4174 = vadd.f32 %v4058, %v4173
      %v4175 = vpop.f32.mrb[0].mxu0
      %4176 = vmatprep.mubr.bf16.mxu0 0
      %4177 = vmatmul.mubr.bf16.gmra.mrb[0].mxu0 %v4091
      %v4178 = vpop.f32.mrb[0].mxu0
      %v4179 = vadd.f32 %v4058, %v4178
      %v4180 = vpop.f32.mrb[0].mxu0
      %v4181 = vpop.f32.mrb[0].mxu0
      %v4182 = vadd.f32 %v4058, %v4181
      %v4183 = vpop.f32.mrb[0].mxu0
      %4184 = vmatprep.mubr.bf16.mxu0 0
      %4185 = vmatmul.mubr.bf16.gmra.mrb[0].mxu0 %v4094
      %v4186 = vpop.f32.mrb[0].mxu0
      %v4187 = vadd.f32 %v4058, %v4186
      %v4188 = vpop.f32.mrb[0].mxu0
      %v4189 = vpop.f32.mrb[0].mxu0
      %v4190 = vadd.f32 %v4058, %v4189
      %v4191 = vpop.f32.mrb[0].mxu0
      %4192 = vdwg.mxu0
      %v4193 = vmax.f32 %v4131, 0.0
      %v4194 = vmax.f32 %v4134, 0.0
      %v4195 = vmax.f32 %v4139, 0.0
      %v4196 = vmax.f32 %v4142, 0.0
      %v4197 = vmax.f32 %v4147, 0.0
      %v4198 = vmax.f32 %v4150, 0.0
      %v4199 = vmax.f32 %v4155, 0.0
      %v4200 = vmax.f32 %v4158, 0.0
      %v4201 = vmax.f32 %v4163, 0.0
      %v4202 = vmax.f32 %v4166, 0.0
      %v4203 = vmax.f32 %v4171, 0.0
      %v4204 = vmax.f32 %v4174, 0.0
      %v4205 = vmax.f32 %v4179, 0.0
      %v4206 = vmax.f32 %v4182, 0.0
      %v4207 = vmax.f32 %v4187, 0.0
      %v4208 = vmax.f32 %v4190, 0.0
      %v4209 = vpack.c.bf16 %v4194, %v4193
      %v4210 = vpack.c.bf16 %v4196, %v4195
      %v4211 = vpack.c.bf16 %v4198, %v4197
      %v4212 = vpack.c.bf16 %v4200, %v4199
      %v4213 = vpack.c.bf16 %v4202, %v4201
      %v4214 = vpack.c.bf16 %v4204, %v4203
      %v4215 = vpack.c.bf16 %v4206, %v4205
      %v4216 = vpack.c.bf16 %v4208, %v4207
      %v4217 = vld [vmem:[%s11] sm:$0xf]
      %v4218 = vld [vmem:[%s11 + $0x4] sm:$0xf]
      %v4219 = vld [vmem:[%s11 + $0x8] sm:$0xf]
      %v4220 = vld [vmem:[%s11 + $0xc] sm:$0xf]
      %v4221 = vld [vmem:[%s12] sm:$0x1]
      %v4223 = vlaneseq
      %v4224 = vshrl.u32 %v4223, 7
      %v4225 = vsub.s32 0, %v4224
      %v4226 = vrot.slane %v4221, %v4225
      %v4232 = vunpack.c.l.b16 %v4217
      %v4233 = vunpack.c.l.b16 %v4218
      %v4234 = vunpack.c.l.b16 %v4219
      %v4235 = vunpack.c.l.b16 %v4220
      %v4236 = vpack.c.b16 %v4233, %v4232
      %v4237 = vpack.c.b16 %v4235, %v4234
      %v4241 = vsel %vm3691, %v4209, 0
      %v4244 = vsel %vm3691, %v4210, 0
      %v4247 = vsel %vm3691, %v4211, 0
      %v4250 = vsel %vm3691, %v4212, 0
      %v4253 = vsel %vm3691, %v4213, 0
      %v4256 = vsel %vm3691, %v4214, 0
      %v4259 = vsel %vm3691, %v4215, 0
      %v4262 = vsel %vm3691, %v4216, 0
      %4264 = vmatprep.subr.bf16.mxu0 0
      %4265 = vmatpush1.bf16.msra.mxu0 %v4236
      %4266 = vmatprep.subr.bf16.mxu0 0
      %4267 = vmatpush1.bf16.msra.mxu0 %v4237
      %4268 = vmatprep.subr.bf16.mxu0 0
      %4269 = vmatpush1.bf16.msra.mxu0 0
      %4270 = vmatprep.subr.bf16.mxu0 0
      %4271 = vmatpush1.bf16.msra.mxu0 0
      %4272 = vmatprep.subr.bf16.mxu0 0
      %4273 = vmatpush1.bf16.msra.mxu0 0
      %4274 = vmatprep.subr.bf16.mxu0 0
      %4275 = vmatpush1.bf16.msra.mxu0 0
      %4276 = vmatprep.subr.bf16.mxu0 0
      %4277 = vmatpush1.bf16.msra.mxu0 0
      %4278 = vmatprep.subr.bf16.mxu0 0
      %4279 = vmatpush1.bf16.msra.mxu0 0
      %4280 = vmatprep.subr.bf16.mxu0 0
      %4281 = vmatpush1.bf16.msra.mxu0 0
      %4282 = vmatprep.subr.bf16.mxu0 0
      %4283 = vmatpush1.bf16.msra.mxu0 0
      %4284 = vmatprep.subr.bf16.mxu0 0
      %4285 = vmatpush1.bf16.msra.mxu0 0
      %4286 = vmatprep.subr.bf16.mxu0 0
      %4287 = vmatpush1.bf16.msra.mxu0 0
      %4288 = vmatprep.subr.bf16.mxu0 0
      %4289 = vmatpush1.bf16.msra.mxu0 0
      %4290 = vmatprep.subr.bf16.mxu0 0
      %4291 = vmatpush1.bf16.msra.mxu0 0
      %4292 = vmatprep.subr.bf16.mxu0 0
      %4293 = vmatpush1.bf16.msra.mxu0 0
      %4294 = vmatprep.subr.bf16.mxu0 0
      %4295 = vmatpush1.bf16.msra.mxu0 0
      %4296 = vmatprep.mubr.bf16.mxu0 0
      %4297 = vmatmul.mubr.bf16.gmra.mrb[0].mxu0 %v4241
      %v4298 = vpop.f32.mrb[0].mxu0
      %v4299 = vadd.f32 %v4226, %v4298
      %v4300 = vpop.f32.mrb[0].mxu0
      %v4301 = vpop.f32.mrb[0].mxu0
      %v4302 = vadd.f32 %v4226, %v4301
      %v4303 = vpop.f32.mrb[0].mxu0
      %4304 = vmatprep.mubr.bf16.mxu0 0
      %4305 = vmatmul.mubr.bf16.gmra.mrb[0].mxu0 %v4244
      %v4306 = vpop.f32.mrb[0].mxu0
      %v4307 = vadd.f32 %v4226, %v4306
      %v4308 = vpop.f32.mrb[0].mxu0
      %v4309 = vpop.f32.mrb[0].mxu0
      %v4310 = vadd.f32 %v4226, %v4309
      %v4311 = vpop.f32.mrb[0].mxu0
      %4312 = vmatprep.mubr.bf16.mxu0 0
      %4313 = vmatmul.mubr.bf16.gmra.mrb[0].mxu0 %v4247
      %v4314 = vpop.f32.mrb[0].mxu0
      %v4315 = vadd.f32 %v4226, %v4314
      %v4316 = vpop.f32.mrb[0].mxu0
      %v4317 = vpop.f32.mrb[0].mxu0
      %v4318 = vadd.f32 %v4226, %v4317
      %v4319 = vpop.f32.mrb[0].mxu0
      %4320 = vmatprep.mubr.bf16.mxu0 0
      %4321 = vmatmul.mubr.bf16.gmra.mrb[0].mxu0 %v4250
      %v4322 = vpop.f32.mrb[0].mxu0
      %v4323 = vadd.f32 %v4226, %v4322
      %v4324 = vpop.f32.mrb[0].mxu0
      %v4325 = vpop.f32.mrb[0].mxu0
      %v4326 = vadd.f32 %v4226, %v4325
      %v4327 = vpop.f32.mrb[0].mxu0
      %4328 = vmatprep.mubr.bf16.mxu0 0
      %4329 = vmatmul.mubr.bf16.gmra.mrb[0].mxu0 %v4253
      %v4330 = vpop.f32.mrb[0].mxu0
      %v4331 = vadd.f32 %v4226, %v4330
      %v4332 = vpop.f32.mrb[0].mxu0
      %v4333 = vpop.f32.mrb[0].mxu0
      %v4334 = vadd.f32 %v4226, %v4333
      %v4335 = vpop.f32.mrb[0].mxu0
      %4336 = vmatprep.mubr.bf16.mxu0 0
      %4337 = vmatmul.mubr.bf16.gmra.mrb[0].mxu0 %v4256
      %v4338 = vpop.f32.mrb[0].mxu0
      %v4339 = vadd.f32 %v4226, %v4338
      %v4340 = vpop.f32.mrb[0].mxu0
      %v4341 = vpop.f32.mrb[0].mxu0
      %v4342 = vadd.f32 %v4226, %v4341
      %v4343 = vpop.f32.mrb[0].mxu0
      %4344 = vmatprep.mubr.bf16.mxu0 0
      %4345 = vmatmul.mubr.bf16.gmra.mrb[0].mxu0 %v4259
      %v4346 = vpop.f32.mrb[0].mxu0
      %v4347 = vadd.f32 %v4226, %v4346
      %v4348 = vpop.f32.mrb[0].mxu0
      %v4349 = vpop.f32.mrb[0].mxu0
      %v4350 = vadd.f32 %v4226, %v4349
      %v4351 = vpop.f32.mrb[0].mxu0
      %4352 = vmatprep.mubr.bf16.mxu0 0
      %4353 = vmatmul.mubr.bf16.gmra.mrb[0].mxu0 %v4262
      %v4354 = vpop.f32.mrb[0].mxu0
      %v4355 = vadd.f32 %v4226, %v4354
      %v4356 = vpop.f32.mrb[0].mxu0
      %v4357 = vpop.f32.mrb[0].mxu0
      %v4358 = vadd.f32 %v4226, %v4357
      %v4359 = vpop.f32.mrb[0].mxu0
      %4360 = vdwg.mxu0
      %v4361 = vmax.f32 %v4299, 0.0
      %v4362 = vmax.f32 %v4302, 0.0
      %v4363 = vmax.f32 %v4307, 0.0
      %v4364 = vmax.f32 %v4310, 0.0
      %v4365 = vmax.f32 %v4315, 0.0
      %v4366 = vmax.f32 %v4318, 0.0
      %v4367 = vmax.f32 %v4323, 0.0
      %v4368 = vmax.f32 %v4326, 0.0
      %v4369 = vmax.f32 %v4331, 0.0
      %v4370 = vmax.f32 %v4334, 0.0
      %v4371 = vmax.f32 %v4339, 0.0
      %v4372 = vmax.f32 %v4342, 0.0
      %v4373 = vmax.f32 %v4347, 0.0
      %v4374 = vmax.f32 %v4350, 0.0
      %v4375 = vmax.f32 %v4355, 0.0
      %v4376 = vmax.f32 %v4358, 0.0
      %4377 = vst.msk [vmem:[%s486] sm:$0xff] %vm3691, %v4361
      %4378 = vst.msk [vmem:[%s486 + $0x8] sm:$0xff] %vm3691, %v4362
      %4379 = vst.msk [vmem:[%s486 + $0x10] sm:$0xff] %vm3691, %v4363
      %4380 = vst.msk [vmem:[%s486 + $0x18] sm:$0xff] %vm3691, %v4364
      %4381 = vst.msk [vmem:[%s486 + $0x20] sm:$0xff] %vm3691, %v4365
      %4382 = vst.msk [vmem:[%s486 + $0x28] sm:$0xff] %vm3691, %v4366
      %4383 = vst.msk [vmem:[%s486 + $0x30] sm:$0xff] %vm3691, %v4367
      %4384 = vst.msk [vmem:[%s486 + $0x38] sm:$0xff] %vm3691, %v4368
      %4385 = vst.msk [vmem:[%s486 + $0x40] sm:$0xff] %vm3691, %v4369
      %4386 = vst.msk [vmem:[%s486 + $0x48] sm:$0xff] %vm3691, %v4370
      %4387 = vst.msk [vmem:[%s486 + $0x50] sm:$0xff] %vm3691, %v4371
      %4388 = vst.msk [vmem:[%s486 + $0x58] sm:$0xff] %vm3691, %v4372
      %4389 = vst.msk [vmem:[%s486 + $0x60] sm:$0xff] %vm3691, %v4373
      %4390 = vst.msk [vmem:[%s486 + $0x68] sm:$0xff] %vm3691, %v4374
      %4391 = vst.msk [vmem:[%s486 + $0x70] sm:$0xff] %vm3691, %v4375
      %4392 = vst.msk [vmem:[%s486 + $0x78] sm:$0xff] %vm3691, %v4376
      %s4393 = smul.u32 16, %s24
      %p4394 = scmp.lt.s32.totalorder %s4393, 63
      %s4395 = scalar_select %p4394, %s4393, 63
      %s4396 = smul.addr %s4395, 8
      %s4397 = scalar_lea.vmem %s13, %s4396
      // Predicated region
      $region73: #{tpu_custom_call.1} parent=71 // pred_check
        %p4398 = pneg %p330
      $region74: #{tpu_custom_call.1} parent=71 // pred_check_branch
        %4400 = sbr.rel (%p4398) target = $region76
      $region75: #{tpu_custom_call.1} parent=71 // pred_region
        %s4401 = smul.u32 16, %s24
      $region76: #{tpu_custom_call.1} parent=71 // pred_fallthru
        _
    $region72: #{tpu_custom_call.1} parent=5 // pred_fallthru
      _
    %p4402 = scmp.le.s32.totalorder 2, %s19
    // Predicated region
    $region77: #{tpu_custom_call.1} parent=5 // pred_check
      %p4403 = pneg %p4402
    $region78: #{tpu_custom_call.1} parent=5 // pred_check_branch
      %4405 = sbr.rel (%p4403) target = $region80
    $region79: #{tpu_custom_call.1} parent=5 // pred_region
      %s4406 = ssub.s32 %s19, 2
      // Predicated region
      $region81: #{tpu_custom_call.1} parent=79 // pred_check
        %p4407 = pneg %p336
      $region82: #{tpu_custom_call.1} parent=79 // pred_check_branch
        %4409 = sbr.rel (%p4407) target = $region84
      $region83: #{tpu_custom_call.1} parent=79 // pred_region
        %s4410 = smul.u32 16, %s25
        %p4411 = scmp.lt.s32.totalorder %s4410, 63
        %s4412 = scalar_select %p4411, %s4410, 63
        %s4413 = smul.addr %s4412, 8
        %s4414 = scalar_lea.vmem %s13, %s4413
      $region84: #{tpu_custom_call.1} parent=79 // pred_fallthru
        _
    $region80: #{tpu_custom_call.1} parent=5 // pred_fallthru
      _
  $region6: #{tpu_custom_call.1} parent=0 // loop_footer
    %s23 = sadd.s32 1, %s19
  $region7: #{tpu_custom_call.1} parent=0 // loop_footer_branch
    %18 = sbr.rel target = $region3
  $region8: #{tpu_custom_call.1} parent=0 // loop_exit
    _

</llo_original>
